<compile_context>
chip_gen: v5e
topology: v5e:2x2
jax: 0.10.0
libtpu: 0.0.40
codegen_flags: <defaults>
</compile_context>

<pallas_src>
import jax
import jax.numpy as jnp
from jax.experimental import pallas as pl
from jax.experimental.pallas import tpu as pltpu

# ----- model configuration (small, consistent with the PyTorch module) -----
D_MODEL = 32
NUM_HEAD = 4
HEAD_DIM = D_MODEL // NUM_HEAD
DIM_FF = 64
NUM_LAYERS = 2
EPS = 1e-5
NEG_INF = -1e9  # used instead of -inf for numerical safety in masked softmax


# --------------------------- in-kernel helpers ------------------------------
def _layer_norm(x, g, b):
    mu = jnp.mean(x, axis=-1, keepdims=True)
    xc = x - mu
    var = jnp.mean(xc * xc, axis=-1, keepdims=True)
    return xc * jax.lax.rsqrt(var + EPS) * g + b


def _attention(q, k, v, add_mask):
    """Multi-head attention on flat row slabs.

    q:        (Rq, D) f32   (Rq = batch_block * Lq, rows are batch-major)
    k, v:     (Rk, D) f32   (Rk = batch_block * Lk)
    add_mask: (Rq, Rk) f32 additive mask or None. When batch_block > 1 the mask is
              block-diagonal (cross-batch pairs = NEG_INF) so batch elements never
              attend to each other despite the folded row layout.
    Returns   (Rq, D) f32.
    """
    head_outs = []
    for h in range(NUM_HEAD):                       # static unroll, H is tiny
        lo = h * HEAD_DIM
        hi = lo + HEAD_DIM
        qh = q[:, lo:hi]                            # (Rq, hd) static lane slice
        kh = k[:, lo:hi]                            # (Rk, hd)
        vh = v[:, lo:hi]                            # (Rk, hd)
        # scores: "NT" matmul, contract the head dim of both operands
        s = jax.lax.dot_general(qh, kh, (((1,), (1,)), ((), ())),
                                preferred_element_type=jnp.float32)   # (Rq, Rk)
        if add_mask is not None:
            s = s + add_mask
        s = s - jnp.max(s, axis=-1, keepdims=True)  # numerically stable softmax
        p = jnp.exp(s)
        # approx reciprocal rides the EUP slot; intentional (well within tolerance)
        p = p * pl.reciprocal(jnp.sum(p, axis=-1, keepdims=True), approx=True)
        # TODO(synk): attention dropout omitted (eval semantics).
        head_outs.append(jnp.dot(p, vh, preferred_element_type=jnp.float32))
    # merge heads along lanes -> single (Rq, D) slab for ONE (D, D) out-projection
    return jnp.concatenate(head_outs, axis=-1)


# ------------------------------ Pallas kernel -------------------------------
def _make_kernel(has_smask, has_mmask):
    def kernel(*refs):
        refs = list(refs)
        x_ref = refs.pop(0)                       # (Rq, D) f32
        mem_ref = refs.pop(0)                     # (Rk, D) f32
        smask_ref = refs.pop(0) if has_smask else None
        mmask_ref = refs.pop(0) if has_mmask else None
        (w_qkv_s_ref, w_kv_c_ref, w_dd_ref, w_ff1_ref, w_ff2_ref,
         b_vec_ref, b_ff1_ref, out_ref) = refs

        D = D_MODEL
        h = x_ref[...]                            # activation stays on-chip all layers
        # layer-invariant: memory cast hoisted out of the layer loop
        mem_bf = mem_ref[...].astype(jnp.bfloat16)
        smask = smask_ref[...] if has_smask else None
        mmask = mmask_ref[...] if has_mmask else None
        scale = jnp.float32(float(HEAD_DIM) ** -0.5)

        # TODO(synk): for deep stacks switch this static unroll to lax.fori_loop with
        # dynamic layer indexing + streamed (double-buffered) per-layer weights and set
        # vmem_limit_bytes; at 2 layers / D=32 everything fits trivially in VMEM.
        for l in range(NUM_LAYERS):
            bv = b_vec_ref[l]                     # (15, D) f32 packed biases / LN params
            wdd = w_dd_ref[l]                     # (3, D, D) bf16: [self-out, cross-Q, cross-out]

            # ---- self-attention: ONE fused QKV matmul (N = 3*D) ----
            qkv = jnp.dot(h.astype(jnp.bfloat16), w_qkv_s_ref[l],
                          preferred_element_type=jnp.float32)          # (Rq, 3D)
            q = (qkv[:, 0:D] + bv[0:1]) * scale   # scale applied post-matmul in f32
            k = qkv[:, D:2 * D] + bv[1:2]
            v = qkv[:, 2 * D:3 * D] + bv[2:3]
            sa = _attention(q, k, v, smask)
            sa = jnp.dot(sa.astype(jnp.bfloat16), wdd[0],
                         preferred_element_type=jnp.float32) + bv[3:4]
            h = _layer_norm(h + sa, bv[9:10], bv[12:13])

            # ---- cross-attention: Q from h, ONE fused K|V matmul from memory ----
            q = (jnp.dot(h.astype(jnp.bfloat16), wdd[1],
                         preferred_element_type=jnp.float32) + bv[4:5]) * scale
            kv = jnp.dot(mem_bf, w_kv_c_ref[l],
                         preferred_element_type=jnp.float32)            # (Rk, 2D)
            k = kv[:, 0:D] + bv[5:6]
            v = kv[:, D:2 * D] + bv[6:7]
            ca = _attention(q, k, v, mmask)
            ca = jnp.dot(ca.astype(jnp.bfloat16), wdd[2],
                         preferred_element_type=jnp.float32) + bv[7:8]
            h = _layer_norm(h + ca, bv[10:11], bv[13:14])

            # ---- feed-forward (relu); dropouts are identity (eval) ----
            f = jnp.dot(h.astype(jnp.bfloat16), w_ff1_ref[l],
                        preferred_element_type=jnp.float32) + b_ff1_ref[l]
            f = jnp.maximum(f, 0.0)
            f = jnp.dot(f.astype(jnp.bfloat16), w_ff2_ref[l],
                        preferred_element_type=jnp.float32) + bv[8:9]
            h = _layer_norm(h + f, bv[11:12], bv[14:15])

        out_ref[...] = h
    return kernel


# --------------------------- parameter packing --------------------------------
def pack_params(layer_params):
    """Stack per-layer params into 7 arrays (5 bf16 weight stacks, 2 f32 bias stacks)."""
    w_qkv_s, w_kv_c, w_dd, w_ff1, w_ff2 = [], [], [], [], []
    b_vec, b_ff1 = [], []
    for (wsqkv, bsqkv, wso, bso, wcqkv, bcqkv, wco, bco,
         wff1, bff1, wff2, bff2, lng, lnb) in layer_params:
        w_qkv_s.append(jnp.concatenate([wsqkv[0], wsqkv[1], wsqkv[2]], axis=1))  # (D, 3D)
        w_kv_c.append(jnp.concatenate([wcqkv[1], wcqkv[2]], axis=1))             # (D, 2D)
        w_dd.append(jnp.stack([wso, wcqkv[0], wco], axis=0))                     # (3, D, D)
        w_ff1.append(wff1)                                                       # (D, F)
        w_ff2.append(wff2)                                                       # (F, D)
        # rows: 0-2 bq/bk/bv(self), 3 bo(self), 4-6 bq/bk/bv(cross), 7 bo(cross),
        #       8 bff2, 9-11 LN gammas, 12-14 LN betas
        b_vec.append(jnp.concatenate([bsqkv, bso, bcqkv, bco, bff2, lng, lnb], axis=0))
        b_ff1.append(bff1)                                                       # (1, F)

    def bf16(xs):
        return jnp.stack(xs, 0).astype(jnp.bfloat16)

    def f32(xs):
        return jnp.stack(xs, 0).astype(jnp.float32)

    return [bf16(w_qkv_s), bf16(w_kv_c), bf16(w_dd), bf16(w_ff1), bf16(w_ff2),
            f32(b_vec), f32(b_ff1)]


def _build_block_mask(user_mask, bb, Lq, Lk):
    """(bb*Lq, bb*Lk) additive mask. Block-diagonal per batch element so folded-batch
    attention never mixes batch elements; None if no mask is needed at all."""
    if bb == 1 and user_mask is None:
        return None
    base = (user_mask.astype(jnp.float32) if user_mask is not None
            else jnp.zeros((Lq, Lk), jnp.float32))
    if bb == 1:
        return base
    eye = jnp.eye(bb, dtype=jnp.float32)
    blk = (eye[:, None, :, None] * base[None, :, None, :]
           + (1.0 - eye)[:, None, :, None] * jnp.float32(NEG_INF))
    return blk.reshape(bb * Lq, bb * Lk)


# ------------------------------ wrapper --------------------------------------
def transformer_decoder_pallas(out_embds, memory, out_mask, memory_mask,
                               layer_params, batch_block=None):
    B, Lq, D = out_embds.shape
    Lk = memory.shape[1]
    if batch_block is None:
        # Fold the whole batch into one grid step (best for single-TC v5e/v6e).
        # On v7x pass batch_block = B // 2 so the "parallel" grid axis spans both cores.
        batch_block = B
    bb = batch_block
    assert B % bb == 0
    num_blocks = B // bb
    if num_blocks > 1:
        # (8, 128) block rule: row-block extents must be sublane aligned when tiled.
        assert (bb * Lq) % 8 == 0 and (bb * Lk) % 8 == 0, \
            "batch_block * seq_len must be a multiple of 8 when the batch is tiled"

    # lane layout untouched; only leading dims are flattened on the host side
    x2 = out_embds.reshape(B * Lq, D).astype(jnp.float32)
    mem2 = memory.reshape(B * Lk, D).astype(jnp.float32)

    smask = _build_block_mask(out_mask, bb, Lq, Lq)
    mmask = _build_block_mask(memory_mask, bb, Lq, Lk)   # elided when None and bb == 1
    has_smask = smask is not None
    has_mmask = mmask is not None

    packed = pack_params(layer_params)

    in_arrays = [x2, mem2]
    in_specs = [pl.BlockSpec((bb * Lq, D), lambda g: (g, 0)),
                pl.BlockSpec((bb * Lk, D), lambda g: (g, 0))]
    if has_smask:
        in_arrays.append(smask)
        in_specs.append(pl.BlockSpec(smask.shape, lambda g: (0, 0)))
    if has_mmask:
        in_arrays.append(mmask)
        in_specs.append(pl.BlockSpec(mmask.shape, lambda g: (0, 0)))
    in_arrays += packed
    in_specs += [pl.BlockSpec(p.shape, lambda g, _nd=p.ndim: (0,) * _nd)
                 for p in packed]

    kernel = _make_kernel(has_smask, has_mmask)

    out2 = pl.pallas_call(
        kernel,
        out_shape=jax.ShapeDtypeStruct((B * Lq, D), jnp.float32),
        grid_spec=pltpu.PrefetchScalarGridSpec(
            num_scalar_prefetch=0,
            grid=(num_blocks,),
            in_specs=in_specs,
            out_specs=pl.BlockSpec((bb * Lq, D), lambda g: (g, 0)),
        ),
        compiler_params=pltpu.CompilerParams(
            dimension_semantics=("parallel",)),
    )(*in_arrays)
    return out2.reshape(B, Lq, D)


# ------------------------- pure-JAX reference --------------------------------
def _ln_ref(x, g, b):
    mu = jnp.mean(x, axis=-1, keepdims=True)
    var = jnp.mean((x - mu) ** 2, axis=-1, keepdims=True)
    return (x - mu) * jax.lax.rsqrt(var + EPS) * g + b


def _mha_ref(q_in, kv_in, wqkv, bqkv, wo, bo, add_mask):
    q = q_in @ wqkv[0] + bqkv[0]
    k = kv_in @ wqkv[1] + bqkv[1]
    v = kv_in @ wqkv[2] + bqkv[2]
    q = q * (float(HEAD_DIM) ** -0.5)
    B, Lq, D = q.shape
    Lk = k.shape[1]
    qh = q.reshape(B, Lq, NUM_HEAD, HEAD_DIM).transpose(0, 2, 1, 3)
    kh = k.reshape(B, Lk, NUM_HEAD, HEAD_DIM).transpose(0, 2, 1, 3)
    vh = v.reshape(B, Lk, NUM_HEAD, HEAD_DIM).transpose(0, 2, 1, 3)
    s = jnp.einsum('bhqd,bhkd->bhqk', qh, kh)
    if add_mask is not None:
        s = s + add_mask[None, None]
    p = jax.nn.softmax(s, axis=-1)
    o = jnp.einsum('bhqk,bhkd->bhqd', p, vh).transpose(0, 2, 1, 3).reshape(B, Lq, D)
    return o @ wo + bo


def _layer_ref(x, mem, smask, mmask, params):
    (wsqkv, bsqkv, wso, bso, wcqkv, bcqkv, wco, bco,
     wff1, bff1, wff2, bff2, lng, lnb) = params
    sa = _mha_ref(x, x, wsqkv, bsqkv, wso, bso[0], smask)
    h1 = _ln_ref(x + sa, lng[0], lnb[0])
    ca = _mha_ref(h1, mem, wcqkv, bcqkv, wco, bco[0], mmask)
    h2 = _ln_ref(h1 + ca, lng[1], lnb[1])
    f = jnp.maximum(h2 @ wff1 + bff1[0], 0.0) @ wff2 + bff2[0]
    return _ln_ref(h2 + f, lng[2], lnb[2])


def transformer_decoder_ref(x, mem, smask, mmask, layer_params):
    for params in layer_params:
        x = _layer_ref(x, mem, smask, mmask, params)
    return x


# -------------------------- parameter construction ---------------------------
def _xavier(key, shape, fan_in, fan_out):
    bound = (6.0 / (fan_in + fan_out)) ** 0.5
    return jax.random.uniform(key, shape, jnp.float32, -bound, bound)


def _bias(key, shape, fan_in):
    bound = 1.0 / (fan_in ** 0.5)
    return jax.random.uniform(key, shape, jnp.float32, -bound, bound)


def make_layer_params(key):
    ks = jax.random.split(key, 12)
    wsqkv = _xavier(ks[0], (3, D_MODEL, D_MODEL), D_MODEL, D_MODEL)
    bsqkv = _bias(ks[1], (3, D_MODEL), D_MODEL)
    wso = _xavier(ks[2], (D_MODEL, D_MODEL), D_MODEL, D_MODEL)
    bso = _bias(ks[3], (1, D_MODEL), D_MODEL)
    wcqkv = _xavier(ks[4], (3, D_MODEL, D_MODEL), D_MODEL, D_MODEL)
    bcqkv = _bias(ks[5], (3, D_MODEL), D_MODEL)
    wco = _xavier(ks[6], (D_MODEL, D_MODEL), D_MODEL, D_MODEL)
    bco = _bias(ks[7], (1, D_MODEL), D_MODEL)
    wff1 = _xavier(ks[8], (D_MODEL, DIM_FF), D_MODEL, DIM_FF)
    bff1 = _bias(ks[9], (1, DIM_FF), D_MODEL)
    wff2 = _xavier(ks[10], (DIM_FF, D_MODEL), DIM_FF, D_MODEL)
    bff2 = _bias(ks[11], (1, D_MODEL), DIM_FF)
    lng = jnp.ones((3, D_MODEL), jnp.float32)   # LayerNorm weight
    lnb = jnp.zeros((3, D_MODEL), jnp.float32)  # LayerNorm bias
    return (wsqkv, bsqkv, wso, bso, wcqkv, bcqkv, wco, bco,
            wff1, bff1, wff2, bff2, lng, lnb)


# ---------------------------------- main --------------------------------------
if __name__ == "__main__":
    B, LQ, LK = 2, 8, 10

    root = jax.random.PRNGKey(0)
    k_x, k_mem, *k_layers = jax.random.split(root, 2 + NUM_LAYERS)

    out_embds = jax.random.normal(k_x, (B, LQ, D_MODEL), jnp.float32)
    memory = jax.random.normal(k_mem, (B, LK, D_MODEL), jnp.float32)

    # additive causal mask for self-attention; no mask for cross-attention
    causal = jnp.where(jnp.triu(jnp.ones((LQ, LQ), jnp.float32), k=1) > 0,
                       jnp.float32(NEG_INF), jnp.float32(0.0))

    layer_params = [make_layer_params(k) for k in k_layers]

    out = transformer_decoder_pallas(out_embds, memory, causal, None, layer_params)
    out = jax.block_until_ready(out)

    ref = transformer_decoder_ref(out_embds, memory, causal, None, layer_params)
    ref = jax.block_until_ready(ref)

    assert out.shape == (B, LQ, D_MODEL)
    assert jnp.allclose(out, ref, atol=5e-2, rtol=5e-2), "mismatch vs reference"

    print("KERNEL_OK")
</pallas_src>

<mosaic_0001>
module attributes {stable_mosaic.version = 11 : i64} {
  func.func @kernel(%arg0: i32, %arg1: memref<16x32xf32, #tpu.memory_space<vmem>>, %arg2: memref<20x32xf32, #tpu.memory_space<vmem>>, %arg3: memref<16x16xf32, #tpu.memory_space<vmem>>, %arg4: memref<16x20xf32, #tpu.memory_space<vmem>>, %arg5: memref<2x32x96xbf16, #tpu.memory_space<vmem>>, %arg6: memref<2x32x64xbf16, #tpu.memory_space<vmem>>, %arg7: memref<2x3x32x32xbf16, #tpu.memory_space<vmem>>, %arg8: memref<2x32x64xbf16, #tpu.memory_space<vmem>>, %arg9: memref<2x64x32xbf16, #tpu.memory_space<vmem>>, %arg10: memref<2x15x32xf32, #tpu.memory_space<vmem>>, %arg11: memref<2x1x64xf32, #tpu.memory_space<vmem>>, %arg12: memref<16x32xf32, #tpu.memory_space<vmem>>) attributes {dimension_semantics = [#tpu.dimension_semantics<parallel>], iteration_bounds = array<i64: 1>, scalar_prefetch = 0 : i64, scratch_operands = 0 : i64, tpu.core_type = #tpu.core_type<tc>, window_params = [{transform_indices = @transform_0, window_bounds = array<i64: 16, 32>}, {transform_indices = @transform_1, window_bounds = array<i64: 20, 32>}, {pipeline_mode = #tpu.pipeline_mode<synchronous>, transform_indices = @transform_2, window_bounds = array<i64: 16, 16>}, {pipeline_mode = #tpu.pipeline_mode<synchronous>, transform_indices = @transform_3, window_bounds = array<i64: 16, 20>}, {pipeline_mode = #tpu.pipeline_mode<synchronous>, transform_indices = @transform_4, window_bounds = array<i64: 2, 32, 96>}, {pipeline_mode = #tpu.pipeline_mode<synchronous>, transform_indices = @transform_5, window_bounds = array<i64: 2, 32, 64>}, {pipeline_mode = #tpu.pipeline_mode<synchronous>, transform_indices = @transform_6, window_bounds = array<i64: 2, 3, 32, 32>}, {pipeline_mode = #tpu.pipeline_mode<synchronous>, transform_indices = @transform_7, window_bounds = array<i64: 2, 32, 64>}, {pipeline_mode = #tpu.pipeline_mode<synchronous>, transform_indices = @transform_8, window_bounds = array<i64: 2, 64, 32>}, {pipeline_mode = #tpu.pipeline_mode<synchronous>, transform_indices = @transform_9, window_bounds = array<i64: 2, 15, 32>}, {pipeline_mode = #tpu.pipeline_mode<synchronous>, transform_indices = @transform_10, window_bounds = array<i64: 2, 1, 64>}, {transform_indices = @transform_11, window_bounds = array<i64: 16, 32>}]} {
    %c0 = arith.constant 0 : index
    %c0_0 = arith.constant 0 : index
    %0 = vector.load %arg1[%c0, %c0_0] : memref<16x32xf32, #tpu.memory_space<vmem>>, vector<16x32xf32>
    %c0_1 = arith.constant 0 : index
    %c0_2 = arith.constant 0 : index
    %1 = vector.load %arg2[%c0_1, %c0_2] : memref<20x32xf32, #tpu.memory_space<vmem>>, vector<20x32xf32>
    %2 = arith.truncf %1 : vector<20x32xf32> to vector<20x32xbf16>
    %c0_3 = arith.constant 0 : index
    %c0_4 = arith.constant 0 : index
    %3 = vector.load %arg3[%c0_3, %c0_4] : memref<16x16xf32, #tpu.memory_space<vmem>>, vector<16x16xf32>
    %c0_5 = arith.constant 0 : index
    %c0_6 = arith.constant 0 : index
    %4 = vector.load %arg4[%c0_5, %c0_6] : memref<16x20xf32, #tpu.memory_space<vmem>>, vector<16x20xf32>
    %c0_7 = arith.constant 0 : index
    %c0_8 = arith.constant 0 : index
    %c0_9 = arith.constant 0 : index
    %5 = vector.load %arg10[%c0_7, %c0_8, %c0_9] : memref<2x15x32xf32, #tpu.memory_space<vmem>>, vector<1x15x32xf32>
    %6 = vector.shape_cast %5 : vector<1x15x32xf32> to vector<15x32xf32>
    %c0_10 = arith.constant 0 : index
    %c0_11 = arith.constant 0 : index
    %c0_12 = arith.constant 0 : index
    %c0_13 = arith.constant 0 : index
    %7 = vector.load %arg7[%c0_10, %c0_11, %c0_12, %c0_13] : memref<2x3x32x32xbf16, #tpu.memory_space<vmem>>, vector<1x3x32x32xbf16>
    %8 = vector.shape_cast %7 : vector<1x3x32x32xbf16> to vector<3x32x32xbf16>
    %9 = arith.truncf %0 : vector<16x32xf32> to vector<16x32xbf16>
    %c0_14 = arith.constant 0 : index
    %c0_15 = arith.constant 0 : index
    %c0_16 = arith.constant 0 : index
    %10 = vector.load %arg5[%c0_14, %c0_15, %c0_16] : memref<2x32x96xbf16, #tpu.memory_space<vmem>>, vector<1x32x96xbf16>
    %11 = vector.shape_cast %10 : vector<1x32x96xbf16> to vector<32x96xbf16>
    %cst = arith.constant dense<0.000000e+00> : vector<16x96xf32>
    %12 = tpu.matmul %9, %11, %cst {dimension_numbers = #tpu.dot_dimension_numbers<[1], [0], [0], [1], [0, 0, 1, 1], [], []>} : vector<16x32xbf16>, vector<32x96xbf16>, vector<16x96xf32> -> vector<16x96xf32>
    %13 = vector.extract_strided_slice %12 {offsets = [0, 0], sizes = [16, 32], strides = [1, 1]} : vector<16x96xf32> to vector<16x32xf32>
    %14 = vector.extract_strided_slice %6 {offsets = [0, 0], sizes = [1, 32], strides = [1, 1]} : vector<15x32xf32> to vector<1x32xf32>
    %15 = vector.broadcast %14 : vector<1x32xf32> to vector<16x32xf32>
    %16 = arith.addf %13, %15 : vector<16x32xf32>
    %cst_17 = arith.constant 0.353553385 : f32
    %17 = vector.broadcast %cst_17 : f32 to vector<16x32xf32>
    %18 = arith.mulf %16, %17 : vector<16x32xf32>
    %19 = vector.extract_strided_slice %12 {offsets = [0, 32], sizes = [16, 32], strides = [1, 1]} : vector<16x96xf32> to vector<16x32xf32>
    %20 = vector.extract_strided_slice %6 {offsets = [1, 0], sizes = [1, 32], strides = [1, 1]} : vector<15x32xf32> to vector<1x32xf32>
    %21 = vector.broadcast %20 : vector<1x32xf32> to vector<16x32xf32>
    %22 = arith.addf %19, %21 : vector<16x32xf32>
    %23 = vector.extract_strided_slice %12 {offsets = [0, 64], sizes = [16, 32], strides = [1, 1]} : vector<16x96xf32> to vector<16x32xf32>
    %24 = vector.extract_strided_slice %6 {offsets = [2, 0], sizes = [1, 32], strides = [1, 1]} : vector<15x32xf32> to vector<1x32xf32>
    %25 = vector.broadcast %24 : vector<1x32xf32> to vector<16x32xf32>
    %26 = arith.addf %23, %25 : vector<16x32xf32>
    %27 = vector.extract_strided_slice %18 {offsets = [0, 0], sizes = [16, 8], strides = [1, 1]} : vector<16x32xf32> to vector<16x8xf32>
    %28 = vector.extract_strided_slice %22 {offsets = [0, 0], sizes = [16, 8], strides = [1, 1]} : vector<16x32xf32> to vector<16x8xf32>
    %29 = vector.extract_strided_slice %26 {offsets = [0, 0], sizes = [16, 8], strides = [1, 1]} : vector<16x32xf32> to vector<16x8xf32>
    %cst_18 = arith.constant dense<0.000000e+00> : vector<16x16xf32>
    %30 = tpu.matmul %27, %28, %cst_18 {dimension_numbers = #tpu.dot_dimension_numbers<[1], [1], [0], [0], [0, 0, 1, 0], [], []>} : vector<16x8xf32>, vector<16x8xf32>, vector<16x16xf32> -> vector<16x16xf32>
    %31 = arith.addf %30, %3 : vector<16x16xf32>
    %cst_19 = arith.constant dense<0xFF800000> : vector<16xf32>
    %32 = vector.multi_reduction <maximumf>, %31, %cst_19 [1] : vector<16x16xf32> to vector<16xf32>
    %33 = vector.shape_cast %32 : vector<16xf32> to vector<16x1xf32>
    %34 = vector.broadcast %33 : vector<16x1xf32> to vector<16x16xf32>
    %35 = arith.subf %31, %34 : vector<16x16xf32>
    %36 = math.exp %35 : vector<16x16xf32>
    %cst_20 = arith.constant dense<0.000000e+00> : vector<16xf32>
    %37 = vector.multi_reduction <add>, %36, %cst_20 [1] : vector<16x16xf32> to vector<16xf32>
    %38 = vector.shape_cast %37 : vector<16xf32> to vector<16x1xf32>
    %39 = tpu.reciprocal %38 {approx = true} : vector<16x1xf32> -> vector<16x1xf32>
    %40 = vector.broadcast %39 : vector<16x1xf32> to vector<16x16xf32>
    %41 = arith.mulf %36, %40 : vector<16x16xf32>
    %cst_21 = arith.constant dense<0.000000e+00> : vector<16x8xf32>
    %42 = tpu.matmul %41, %29, %cst_21 {dimension_numbers = #tpu.dot_dimension_numbers<[1], [0], [0], [1], [0, 0, 1, 1], [], []>} : vector<16x16xf32>, vector<16x8xf32>, vector<16x8xf32> -> vector<16x8xf32>
    %43 = vector.extract_strided_slice %18 {offsets = [0, 8], sizes = [16, 8], strides = [1, 1]} : vector<16x32xf32> to vector<16x8xf32>
    %44 = vector.extract_strided_slice %22 {offsets = [0, 8], sizes = [16, 8], strides = [1, 1]} : vector<16x32xf32> to vector<16x8xf32>
    %45 = vector.extract_strided_slice %26 {offsets = [0, 8], sizes = [16, 8], strides = [1, 1]} : vector<16x32xf32> to vector<16x8xf32>
    %cst_22 = arith.constant dense<0.000000e+00> : vector<16x16xf32>
    %46 = tpu.matmul %43, %44, %cst_22 {dimension_numbers = #tpu.dot_dimension_numbers<[1], [1], [0], [0], [0, 0, 1, 0], [], []>} : vector<16x8xf32>, vector<16x8xf32>, vector<16x16xf32> -> vector<16x16xf32>
    %47 = arith.addf %46, %3 : vector<16x16xf32>
    %cst_23 = arith.constant dense<0xFF800000> : vector<16xf32>
    %48 = vector.multi_reduction <maximumf>, %47, %cst_23 [1] : vector<16x16xf32> to vector<16xf32>
    %49 = vector.shape_cast %48 : vector<16xf32> to vector<16x1xf32>
    %50 = vector.broadcast %49 : vector<16x1xf32> to vector<16x16xf32>
    %51 = arith.subf %47, %50 : vector<16x16xf32>
    %52 = math.exp %51 : vector<16x16xf32>
    %cst_24 = arith.constant dense<0.000000e+00> : vector<16xf32>
    %53 = vector.multi_reduction <add>, %52, %cst_24 [1] : vector<16x16xf32> to vector<16xf32>
    %54 = vector.shape_cast %53 : vector<16xf32> to vector<16x1xf32>
    %55 = tpu.reciprocal %54 {approx = true} : vector<16x1xf32> -> vector<16x1xf32>
    %56 = vector.broadcast %55 : vector<16x1xf32> to vector<16x16xf32>
    %57 = arith.mulf %52, %56 : vector<16x16xf32>
    %cst_25 = arith.constant dense<0.000000e+00> : vector<16x8xf32>
    %58 = tpu.matmul %57, %45, %cst_25 {dimension_numbers = #tpu.dot_dimension_numbers<[1], [0], [0], [1], [0, 0, 1, 1], [], []>} : vector<16x16xf32>, vector<16x8xf32>, vector<16x8xf32> -> vector<16x8xf32>
    %59 = vector.extract_strided_slice %18 {offsets = [0, 16], sizes = [16, 8], strides = [1, 1]} : vector<16x32xf32> to vector<16x8xf32>
    %60 = vector.extract_strided_slice %22 {offsets = [0, 16], sizes = [16, 8], strides = [1, 1]} : vector<16x32xf32> to vector<16x8xf32>
    %61 = vector.extract_strided_slice %26 {offsets = [0, 16], sizes = [16, 8], strides = [1, 1]} : vector<16x32xf32> to vector<16x8xf32>
    %cst_26 = arith.constant dense<0.000000e+00> : vector<16x16xf32>
    %62 = tpu.matmul %59, %60, %cst_26 {dimension_numbers = #tpu.dot_dimension_numbers<[1], [1], [0], [0], [0, 0, 1, 0], [], []>} : vector<16x8xf32>, vector<16x8xf32>, vector<16x16xf32> -> vector<16x16xf32>
    %63 = arith.addf %62, %3 : vector<16x16xf32>
    %cst_27 = arith.constant dense<0xFF800000> : vector<16xf32>
    %64 = vector.multi_reduction <maximumf>, %63, %cst_27 [1] : vector<16x16xf32> to vector<16xf32>
    %65 = vector.shape_cast %64 : vector<16xf32> to vector<16x1xf32>
    %66 = vector.broadcast %65 : vector<16x1xf32> to vector<16x16xf32>
    %67 = arith.subf %63, %66 : vector<16x16xf32>
    %68 = math.exp %67 : vector<16x16xf32>
    %cst_28 = arith.constant dense<0.000000e+00> : vector<16xf32>
    %69 = vector.multi_reduction <add>, %68, %cst_28 [1] : vector<16x16xf32> to vector<16xf32>
    %70 = vector.shape_cast %69 : vector<16xf32> to vector<16x1xf32>
    %71 = tpu.reciprocal %70 {approx = true} : vector<16x1xf32> -> vector<16x1xf32>
    %72 = vector.broadcast %71 : vector<16x1xf32> to vector<16x16xf32>
    %73 = arith.mulf %68, %72 : vector<16x16xf32>
    %cst_29 = arith.constant dense<0.000000e+00> : vector<16x8xf32>
    %74 = tpu.matmul %73, %61, %cst_29 {dimension_numbers = #tpu.dot_dimension_numbers<[1], [0], [0], [1], [0, 0, 1, 1], [], []>} : vector<16x16xf32>, vector<16x8xf32>, vector<16x8xf32> -> vector<16x8xf32>
    %75 = vector.extract_strided_slice %18 {offsets = [0, 24], sizes = [16, 8], strides = [1, 1]} : vector<16x32xf32> to vector<16x8xf32>
    %76 = vector.extract_strided_slice %22 {offsets = [0, 24], sizes = [16, 8], strides = [1, 1]} : vector<16x32xf32> to vector<16x8xf32>
    %77 = vector.extract_strided_slice %26 {offsets = [0, 24], sizes = [16, 8], strides = [1, 1]} : vector<16x32xf32> to vector<16x8xf32>
    %cst_30 = arith.constant dense<0.000000e+00> : vector<16x16xf32>
    %78 = tpu.matmul %75, %76, %cst_30 {dimension_numbers = #tpu.dot_dimension_numbers<[1], [1], [0], [0], [0, 0, 1, 0], [], []>} : vector<16x8xf32>, vector<16x8xf32>, vector<16x16xf32> -> vector<16x16xf32>
    %79 = arith.addf %78, %3 : vector<16x16xf32>
    %cst_31 = arith.constant dense<0xFF800000> : vector<16xf32>
    %80 = vector.multi_reduction <maximumf>, %79, %cst_31 [1] : vector<16x16xf32> to vector<16xf32>
    %81 = vector.shape_cast %80 : vector<16xf32> to vector<16x1xf32>
    %82 = vector.broadcast %81 : vector<16x1xf32> to vector<16x16xf32>
    %83 = arith.subf %79, %82 : vector<16x16xf32>
    %84 = math.exp %83 : vector<16x16xf32>
    %cst_32 = arith.constant dense<0.000000e+00> : vector<16xf32>
    %85 = vector.multi_reduction <add>, %84, %cst_32 [1] : vector<16x16xf32> to vector<16xf32>
    %86 = vector.shape_cast %85 : vector<16xf32> to vector<16x1xf32>
    %87 = tpu.reciprocal %86 {approx = true} : vector<16x1xf32> -> vector<16x1xf32>
    %88 = vector.broadcast %87 : vector<16x1xf32> to vector<16x16xf32>
    %89 = arith.mulf %84, %88 : vector<16x16xf32>
    %cst_33 = arith.constant dense<0.000000e+00> : vector<16x8xf32>
    %90 = tpu.matmul %89, %77, %cst_33 {dimension_numbers = #tpu.dot_dimension_numbers<[1], [0], [0], [1], [0, 0, 1, 1], [], []>} : vector<16x16xf32>, vector<16x8xf32>, vector<16x8xf32> -> vector<16x8xf32>
    %91 = tpu.concatenate %42, %58, %74, %90 in 1 : vector<16x8xf32>, vector<16x8xf32>, vector<16x8xf32>, vector<16x8xf32> -> vector<16x32xf32>
    %92 = arith.truncf %91 : vector<16x32xf32> to vector<16x32xbf16>
    %93 = vector.extract_strided_slice %8 {offsets = [0, 0, 0], sizes = [1, 32, 32], strides = [1, 1, 1]} : vector<3x32x32xbf16> to vector<1x32x32xbf16>
    %94 = vector.shape_cast %93 : vector<1x32x32xbf16> to vector<32x32xbf16>
    %cst_34 = arith.constant dense<0.000000e+00> : vector<16x32xf32>
    %95 = tpu.matmul %92, %94, %cst_34 {dimension_numbers = #tpu.dot_dimension_numbers<[1], [0], [0], [1], [0, 0, 1, 1], [], []>} : vector<16x32xbf16>, vector<32x32xbf16>, vector<16x32xf32> -> vector<16x32xf32>
    %96 = vector.extract_strided_slice %6 {offsets = [3, 0], sizes = [1, 32], strides = [1, 1]} : vector<15x32xf32> to vector<1x32xf32>
    %97 = vector.broadcast %96 : vector<1x32xf32> to vector<16x32xf32>
    %98 = arith.addf %95, %97 : vector<16x32xf32>
    %99 = arith.addf %0, %98 : vector<16x32xf32>
    %100 = vector.extract_strided_slice %6 {offsets = [9, 0], sizes = [1, 32], strides = [1, 1]} : vector<15x32xf32> to vector<1x32xf32>
    %101 = vector.extract_strided_slice %6 {offsets = [12, 0], sizes = [1, 32], strides = [1, 1]} : vector<15x32xf32> to vector<1x32xf32>
    %cst_35 = arith.constant dense<0.000000e+00> : vector<16xf32>
    %102 = vector.multi_reduction <add>, %99, %cst_35 [1] : vector<16x32xf32> to vector<16xf32>
    %103 = vector.shape_cast %102 : vector<16xf32> to vector<16x1xf32>
    %cst_36 = arith.constant 3.200000e+01 : f32
    %104 = vector.broadcast %cst_36 : f32 to vector<16x1xf32>
    %105 = arith.divf %103, %104 : vector<16x1xf32>
    %106 = vector.broadcast %105 : vector<16x1xf32> to vector<16x32xf32>
    %107 = arith.subf %99, %106 : vector<16x32xf32>
    %108 = arith.mulf %107, %107 : vector<16x32xf32>
    %cst_37 = arith.constant dense<0.000000e+00> : vector<16xf32>
    %109 = vector.multi_reduction <add>, %108, %cst_37 [1] : vector<16x32xf32> to vector<16xf32>
    %110 = vector.shape_cast %109 : vector<16xf32> to vector<16x1xf32>
    %cst_38 = arith.constant 3.200000e+01 : f32
    %111 = vector.broadcast %cst_38 : f32 to vector<16x1xf32>
    %112 = arith.divf %110, %111 : vector<16x1xf32>
    %cst_39 = arith.constant 9.99999974E-6 : f32
    %113 = vector.broadcast %cst_39 : f32 to vector<16x1xf32>
    %114 = arith.addf %112, %113 : vector<16x1xf32>
    %115 = math.rsqrt %114 : vector<16x1xf32>
    %116 = vector.broadcast %115 : vector<16x1xf32> to vector<16x32xf32>
    %117 = arith.mulf %107, %116 : vector<16x32xf32>
    %118 = vector.broadcast %100 : vector<1x32xf32> to vector<16x32xf32>
    %119 = arith.mulf %117, %118 : vector<16x32xf32>
    %120 = vector.broadcast %101 : vector<1x32xf32> to vector<16x32xf32>
    %121 = arith.addf %119, %120 : vector<16x32xf32>
    %122 = arith.truncf %121 : vector<16x32xf32> to vector<16x32xbf16>
    %123 = vector.extract_strided_slice %8 {offsets = [1, 0, 0], sizes = [1, 32, 32], strides = [1, 1, 1]} : vector<3x32x32xbf16> to vector<1x32x32xbf16>
    %124 = vector.shape_cast %123 : vector<1x32x32xbf16> to vector<32x32xbf16>
    %cst_40 = arith.constant dense<0.000000e+00> : vector<16x32xf32>
    %125 = tpu.matmul %122, %124, %cst_40 {dimension_numbers = #tpu.dot_dimension_numbers<[1], [0], [0], [1], [0, 0, 1, 1], [], []>} : vector<16x32xbf16>, vector<32x32xbf16>, vector<16x32xf32> -> vector<16x32xf32>
    %126 = vector.extract_strided_slice %6 {offsets = [4, 0], sizes = [1, 32], strides = [1, 1]} : vector<15x32xf32> to vector<1x32xf32>
    %127 = vector.broadcast %126 : vector<1x32xf32> to vector<16x32xf32>
    %128 = arith.addf %125, %127 : vector<16x32xf32>
    %cst_41 = arith.constant 0.353553385 : f32
    %129 = vector.broadcast %cst_41 : f32 to vector<16x32xf32>
    %130 = arith.mulf %128, %129 : vector<16x32xf32>
    %c0_42 = arith.constant 0 : index
    %c0_43 = arith.constant 0 : index
    %c0_44 = arith.constant 0 : index
    %131 = vector.load %arg6[%c0_42, %c0_43, %c0_44] : memref<2x32x64xbf16, #tpu.memory_space<vmem>>, vector<1x32x64xbf16>
    %132 = vector.shape_cast %131 : vector<1x32x64xbf16> to vector<32x64xbf16>
    %cst_45 = arith.constant dense<0.000000e+00> : vector<20x64xf32>
    %133 = tpu.matmul %2, %132, %cst_45 {dimension_numbers = #tpu.dot_dimension_numbers<[1], [0], [0], [1], [0, 0, 1, 1], [], []>} : vector<20x32xbf16>, vector<32x64xbf16>, vector<20x64xf32> -> vector<20x64xf32>
    %134 = vector.extract_strided_slice %133 {offsets = [0, 0], sizes = [20, 32], strides = [1, 1]} : vector<20x64xf32> to vector<20x32xf32>
    %135 = vector.extract_strided_slice %6 {offsets = [5, 0], sizes = [1, 32], strides = [1, 1]} : vector<15x32xf32> to vector<1x32xf32>
    %136 = vector.broadcast %135 : vector<1x32xf32> to vector<20x32xf32>
    %137 = arith.addf %134, %136 : vector<20x32xf32>
    %138 = vector.extract_strided_slice %133 {offsets = [0, 32], sizes = [20, 32], strides = [1, 1]} : vector<20x64xf32> to vector<20x32xf32>
    %139 = vector.extract_strided_slice %6 {offsets = [6, 0], sizes = [1, 32], strides = [1, 1]} : vector<15x32xf32> to vector<1x32xf32>
    %140 = vector.broadcast %139 : vector<1x32xf32> to vector<20x32xf32>
    %141 = arith.addf %138, %140 : vector<20x32xf32>
    %142 = vector.extract_strided_slice %130 {offsets = [0, 0], sizes = [16, 8], strides = [1, 1]} : vector<16x32xf32> to vector<16x8xf32>
    %143 = vector.extract_strided_slice %137 {offsets = [0, 0], sizes = [20, 8], strides = [1, 1]} : vector<20x32xf32> to vector<20x8xf32>
    %144 = vector.extract_strided_slice %141 {offsets = [0, 0], sizes = [20, 8], strides = [1, 1]} : vector<20x32xf32> to vector<20x8xf32>
    %cst_46 = arith.constant dense<0.000000e+00> : vector<16x20xf32>
    %145 = tpu.matmul %142, %143, %cst_46 {dimension_numbers = #tpu.dot_dimension_numbers<[1], [1], [0], [0], [0, 0, 1, 0], [], []>} : vector<16x8xf32>, vector<20x8xf32>, vector<16x20xf32> -> vector<16x20xf32>
    %146 = arith.addf %145, %4 : vector<16x20xf32>
    %cst_47 = arith.constant dense<0xFF800000> : vector<16xf32>
    %147 = vector.multi_reduction <maximumf>, %146, %cst_47 [1] : vector<16x20xf32> to vector<16xf32>
    %148 = vector.shape_cast %147 : vector<16xf32> to vector<16x1xf32>
    %149 = vector.broadcast %148 : vector<16x1xf32> to vector<16x20xf32>
    %150 = arith.subf %146, %149 : vector<16x20xf32>
    %151 = math.exp %150 : vector<16x20xf32>
    %cst_48 = arith.constant dense<0.000000e+00> : vector<16xf32>
    %152 = vector.multi_reduction <add>, %151, %cst_48 [1] : vector<16x20xf32> to vector<16xf32>
    %153 = vector.shape_cast %152 : vector<16xf32> to vector<16x1xf32>
    %154 = tpu.reciprocal %153 {approx = true} : vector<16x1xf32> -> vector<16x1xf32>
    %155 = vector.broadcast %154 : vector<16x1xf32> to vector<16x20xf32>
    %156 = arith.mulf %151, %155 : vector<16x20xf32>
    %cst_49 = arith.constant dense<0.000000e+00> : vector<16x8xf32>
    %157 = tpu.matmul %156, %144, %cst_49 {dimension_numbers = #tpu.dot_dimension_numbers<[1], [0], [0], [1], [0, 0, 1, 1], [], []>} : vector<16x20xf32>, vector<20x8xf32>, vector<16x8xf32> -> vector<16x8xf32>
    %158 = vector.extract_strided_slice %130 {offsets = [0, 8], sizes = [16, 8], strides = [1, 1]} : vector<16x32xf32> to vector<16x8xf32>
    %159 = vector.extract_strided_slice %137 {offsets = [0, 8], sizes = [20, 8], strides = [1, 1]} : vector<20x32xf32> to vector<20x8xf32>
    %160 = vector.extract_strided_slice %141 {offsets = [0, 8], sizes = [20, 8], strides = [1, 1]} : vector<20x32xf32> to vector<20x8xf32>
    %cst_50 = arith.constant dense<0.000000e+00> : vector<16x20xf32>
    %161 = tpu.matmul %158, %159, %cst_50 {dimension_numbers = #tpu.dot_dimension_numbers<[1], [1], [0], [0], [0, 0, 1, 0], [], []>} : vector<16x8xf32>, vector<20x8xf32>, vector<16x20xf32> -> vector<16x20xf32>
    %162 = arith.addf %161, %4 : vector<16x20xf32>
    %cst_51 = arith.constant dense<0xFF800000> : vector<16xf32>
    %163 = vector.multi_reduction <maximumf>, %162, %cst_51 [1] : vector<16x20xf32> to vector<16xf32>
    %164 = vector.shape_cast %163 : vector<16xf32> to vector<16x1xf32>
    %165 = vector.broadcast %164 : vector<16x1xf32> to vector<16x20xf32>
    %166 = arith.subf %162, %165 : vector<16x20xf32>
    %167 = math.exp %166 : vector<16x20xf32>
    %cst_52 = arith.constant dense<0.000000e+00> : vector<16xf32>
    %168 = vector.multi_reduction <add>, %167, %cst_52 [1] : vector<16x20xf32> to vector<16xf32>
    %169 = vector.shape_cast %168 : vector<16xf32> to vector<16x1xf32>
    %170 = tpu.reciprocal %169 {approx = true} : vector<16x1xf32> -> vector<16x1xf32>
    %171 = vector.broadcast %170 : vector<16x1xf32> to vector<16x20xf32>
    %172 = arith.mulf %167, %171 : vector<16x20xf32>
    %cst_53 = arith.constant dense<0.000000e+00> : vector<16x8xf32>
    %173 = tpu.matmul %172, %160, %cst_53 {dimension_numbers = #tpu.dot_dimension_numbers<[1], [0], [0], [1], [0, 0, 1, 1], [], []>} : vector<16x20xf32>, vector<20x8xf32>, vector<16x8xf32> -> vector<16x8xf32>
    %174 = vector.extract_strided_slice %130 {offsets = [0, 16], sizes = [16, 8], strides = [1, 1]} : vector<16x32xf32> to vector<16x8xf32>
    %175 = vector.extract_strided_slice %137 {offsets = [0, 16], sizes = [20, 8], strides = [1, 1]} : vector<20x32xf32> to vector<20x8xf32>
    %176 = vector.extract_strided_slice %141 {offsets = [0, 16], sizes = [20, 8], strides = [1, 1]} : vector<20x32xf32> to vector<20x8xf32>
    %cst_54 = arith.constant dense<0.000000e+00> : vector<16x20xf32>
    %177 = tpu.matmul %174, %175, %cst_54 {dimension_numbers = #tpu.dot_dimension_numbers<[1], [1], [0], [0], [0, 0, 1, 0], [], []>} : vector<16x8xf32>, vector<20x8xf32>, vector<16x20xf32> -> vector<16x20xf32>
    %178 = arith.addf %177, %4 : vector<16x20xf32>
    %cst_55 = arith.constant dense<0xFF800000> : vector<16xf32>
    %179 = vector.multi_reduction <maximumf>, %178, %cst_55 [1] : vector<16x20xf32> to vector<16xf32>
    %180 = vector.shape_cast %179 : vector<16xf32> to vector<16x1xf32>
    %181 = vector.broadcast %180 : vector<16x1xf32> to vector<16x20xf32>
    %182 = arith.subf %178, %181 : vector<16x20xf32>
    %183 = math.exp %182 : vector<16x20xf32>
    %cst_56 = arith.constant dense<0.000000e+00> : vector<16xf32>
    %184 = vector.multi_reduction <add>, %183, %cst_56 [1] : vector<16x20xf32> to vector<16xf32>
    %185 = vector.shape_cast %184 : vector<16xf32> to vector<16x1xf32>
    %186 = tpu.reciprocal %185 {approx = true} : vector<16x1xf32> -> vector<16x1xf32>
    %187 = vector.broadcast %186 : vector<16x1xf32> to vector<16x20xf32>
    %188 = arith.mulf %183, %187 : vector<16x20xf32>
    %cst_57 = arith.constant dense<0.000000e+00> : vector<16x8xf32>
    %189 = tpu.matmul %188, %176, %cst_57 {dimension_numbers = #tpu.dot_dimension_numbers<[1], [0], [0], [1], [0, 0, 1, 1], [], []>} : vector<16x20xf32>, vector<20x8xf32>, vector<16x8xf32> -> vector<16x8xf32>
    %190 = vector.extract_strided_slice %130 {offsets = [0, 24], sizes = [16, 8], strides = [1, 1]} : vector<16x32xf32> to vector<16x8xf32>
    %191 = vector.extract_strided_slice %137 {offsets = [0, 24], sizes = [20, 8], strides = [1, 1]} : vector<20x32xf32> to vector<20x8xf32>
    %192 = vector.extract_strided_slice %141 {offsets = [0, 24], sizes = [20, 8], strides = [1, 1]} : vector<20x32xf32> to vector<20x8xf32>
    %cst_58 = arith.constant dense<0.000000e+00> : vector<16x20xf32>
    %193 = tpu.matmul %190, %191, %cst_58 {dimension_numbers = #tpu.dot_dimension_numbers<[1], [1], [0], [0], [0, 0, 1, 0], [], []>} : vector<16x8xf32>, vector<20x8xf32>, vector<16x20xf32> -> vector<16x20xf32>
    %194 = arith.addf %193, %4 : vector<16x20xf32>
    %cst_59 = arith.constant dense<0xFF800000> : vector<16xf32>
    %195 = vector.multi_reduction <maximumf>, %194, %cst_59 [1] : vector<16x20xf32> to vector<16xf32>
    %196 = vector.shape_cast %195 : vector<16xf32> to vector<16x1xf32>
    %197 = vector.broadcast %196 : vector<16x1xf32> to vector<16x20xf32>
    %198 = arith.subf %194, %197 : vector<16x20xf32>
    %199 = math.exp %198 : vector<16x20xf32>
    %cst_60 = arith.constant dense<0.000000e+00> : vector<16xf32>
    %200 = vector.multi_reduction <add>, %199, %cst_60 [1] : vector<16x20xf32> to vector<16xf32>
    %201 = vector.shape_cast %200 : vector<16xf32> to vector<16x1xf32>
    %202 = tpu.reciprocal %201 {approx = true} : vector<16x1xf32> -> vector<16x1xf32>
    %203 = vector.broadcast %202 : vector<16x1xf32> to vector<16x20xf32>
    %204 = arith.mulf %199, %203 : vector<16x20xf32>
    %cst_61 = arith.constant dense<0.000000e+00> : vector<16x8xf32>
    %205 = tpu.matmul %204, %192, %cst_61 {dimension_numbers = #tpu.dot_dimension_numbers<[1], [0], [0], [1], [0, 0, 1, 1], [], []>} : vector<16x20xf32>, vector<20x8xf32>, vector<16x8xf32> -> vector<16x8xf32>
    %206 = tpu.concatenate %157, %173, %189, %205 in 1 : vector<16x8xf32>, vector<16x8xf32>, vector<16x8xf32>, vector<16x8xf32> -> vector<16x32xf32>
    %207 = arith.truncf %206 : vector<16x32xf32> to vector<16x32xbf16>
    %208 = vector.extract_strided_slice %8 {offsets = [2, 0, 0], sizes = [1, 32, 32], strides = [1, 1, 1]} : vector<3x32x32xbf16> to vector<1x32x32xbf16>
    %209 = vector.shape_cast %208 : vector<1x32x32xbf16> to vector<32x32xbf16>
    %cst_62 = arith.constant dense<0.000000e+00> : vector<16x32xf32>
    %210 = tpu.matmul %207, %209, %cst_62 {dimension_numbers = #tpu.dot_dimension_numbers<[1], [0], [0], [1], [0, 0, 1, 1], [], []>} : vector<16x32xbf16>, vector<32x32xbf16>, vector<16x32xf32> -> vector<16x32xf32>
    %211 = vector.extract_strided_slice %6 {offsets = [7, 0], sizes = [1, 32], strides = [1, 1]} : vector<15x32xf32> to vector<1x32xf32>
    %212 = vector.broadcast %211 : vector<1x32xf32> to vector<16x32xf32>
    %213 = arith.addf %210, %212 : vector<16x32xf32>
    %214 = arith.addf %121, %213 : vector<16x32xf32>
    %215 = vector.extract_strided_slice %6 {offsets = [10, 0], sizes = [1, 32], strides = [1, 1]} : vector<15x32xf32> to vector<1x32xf32>
    %216 = vector.extract_strided_slice %6 {offsets = [13, 0], sizes = [1, 32], strides = [1, 1]} : vector<15x32xf32> to vector<1x32xf32>
    %cst_63 = arith.constant dense<0.000000e+00> : vector<16xf32>
    %217 = vector.multi_reduction <add>, %214, %cst_63 [1] : vector<16x32xf32> to vector<16xf32>
    %218 = vector.shape_cast %217 : vector<16xf32> to vector<16x1xf32>
    %cst_64 = arith.constant 3.200000e+01 : f32
    %219 = vector.broadcast %cst_64 : f32 to vector<16x1xf32>
    %220 = arith.divf %218, %219 : vector<16x1xf32>
    %221 = vector.broadcast %220 : vector<16x1xf32> to vector<16x32xf32>
    %222 = arith.subf %214, %221 : vector<16x32xf32>
    %223 = arith.mulf %222, %222 : vector<16x32xf32>
    %cst_65 = arith.constant dense<0.000000e+00> : vector<16xf32>
    %224 = vector.multi_reduction <add>, %223, %cst_65 [1] : vector<16x32xf32> to vector<16xf32>
    %225 = vector.shape_cast %224 : vector<16xf32> to vector<16x1xf32>
    %cst_66 = arith.constant 3.200000e+01 : f32
    %226 = vector.broadcast %cst_66 : f32 to vector<16x1xf32>
    %227 = arith.divf %225, %226 : vector<16x1xf32>
    %cst_67 = arith.constant 9.99999974E-6 : f32
    %228 = vector.broadcast %cst_67 : f32 to vector<16x1xf32>
    %229 = arith.addf %227, %228 : vector<16x1xf32>
    %230 = math.rsqrt %229 : vector<16x1xf32>
    %231 = vector.broadcast %230 : vector<16x1xf32> to vector<16x32xf32>
    %232 = arith.mulf %222, %231 : vector<16x32xf32>
    %233 = vector.broadcast %215 : vector<1x32xf32> to vector<16x32xf32>
    %234 = arith.mulf %232, %233 : vector<16x32xf32>
    %235 = vector.broadcast %216 : vector<1x32xf32> to vector<16x32xf32>
    %236 = arith.addf %234, %235 : vector<16x32xf32>
    %237 = arith.truncf %236 : vector<16x32xf32> to vector<16x32xbf16>
    %c0_68 = arith.constant 0 : index
    %c0_69 = arith.constant 0 : index
    %c0_70 = arith.constant 0 : index
    %238 = vector.load %arg8[%c0_68, %c0_69, %c0_70] : memref<2x32x64xbf16, #tpu.memory_space<vmem>>, vector<1x32x64xbf16>
    %239 = vector.shape_cast %238 : vector<1x32x64xbf16> to vector<32x64xbf16>
    %cst_71 = arith.constant dense<0.000000e+00> : vector<16x64xf32>
    %240 = tpu.matmul %237, %239, %cst_71 {dimension_numbers = #tpu.dot_dimension_numbers<[1], [0], [0], [1], [0, 0, 1, 1], [], []>} : vector<16x32xbf16>, vector<32x64xbf16>, vector<16x64xf32> -> vector<16x64xf32>
    %c0_72 = arith.constant 0 : index
    %c0_73 = arith.constant 0 : index
    %c0_74 = arith.constant 0 : index
    %241 = vector.load %arg11[%c0_72, %c0_73, %c0_74] : memref<2x1x64xf32, #tpu.memory_space<vmem>>, vector<1x1x64xf32>
    %242 = vector.shape_cast %241 : vector<1x1x64xf32> to vector<1x64xf32>
    %243 = vector.broadcast %242 : vector<1x64xf32> to vector<16x64xf32>
    %244 = arith.addf %240, %243 : vector<16x64xf32>
    %cst_75 = arith.constant 0.000000e+00 : f32
    %245 = vector.broadcast %cst_75 : f32 to vector<16x64xf32>
    %246 = arith.maximumf %244, %245 : vector<16x64xf32>
    %247 = arith.truncf %246 : vector<16x64xf32> to vector<16x64xbf16>
    %c0_76 = arith.constant 0 : index
    %c0_77 = arith.constant 0 : index
    %c0_78 = arith.constant 0 : index
    %248 = vector.load %arg9[%c0_76, %c0_77, %c0_78] : memref<2x64x32xbf16, #tpu.memory_space<vmem>>, vector<1x64x32xbf16>
    %249 = vector.shape_cast %248 : vector<1x64x32xbf16> to vector<64x32xbf16>
    %cst_79 = arith.constant dense<0.000000e+00> : vector<16x32xf32>
    %250 = tpu.matmul %247, %249, %cst_79 {dimension_numbers = #tpu.dot_dimension_numbers<[1], [0], [0], [1], [0, 0, 1, 1], [], []>} : vector<16x64xbf16>, vector<64x32xbf16>, vector<16x32xf32> -> vector<16x32xf32>
    %251 = vector.extract_strided_slice %6 {offsets = [8, 0], sizes = [1, 32], strides = [1, 1]} : vector<15x32xf32> to vector<1x32xf32>
    %252 = vector.broadcast %251 : vector<1x32xf32> to vector<16x32xf32>
    %253 = arith.addf %250, %252 : vector<16x32xf32>
    %254 = arith.addf %236, %253 : vector<16x32xf32>
    %255 = vector.extract_strided_slice %6 {offsets = [11, 0], sizes = [1, 32], strides = [1, 1]} : vector<15x32xf32> to vector<1x32xf32>
    %256 = vector.extract_strided_slice %6 {offsets = [14, 0], sizes = [1, 32], strides = [1, 1]} : vector<15x32xf32> to vector<1x32xf32>
    %cst_80 = arith.constant dense<0.000000e+00> : vector<16xf32>
    %257 = vector.multi_reduction <add>, %254, %cst_80 [1] : vector<16x32xf32> to vector<16xf32>
    %258 = vector.shape_cast %257 : vector<16xf32> to vector<16x1xf32>
    %cst_81 = arith.constant 3.200000e+01 : f32
    %259 = vector.broadcast %cst_81 : f32 to vector<16x1xf32>
    %260 = arith.divf %258, %259 : vector<16x1xf32>
    %261 = vector.broadcast %260 : vector<16x1xf32> to vector<16x32xf32>
    %262 = arith.subf %254, %261 : vector<16x32xf32>
    %263 = arith.mulf %262, %262 : vector<16x32xf32>
    %cst_82 = arith.constant dense<0.000000e+00> : vector<16xf32>
    %264 = vector.multi_reduction <add>, %263, %cst_82 [1] : vector<16x32xf32> to vector<16xf32>
    %265 = vector.shape_cast %264 : vector<16xf32> to vector<16x1xf32>
    %cst_83 = arith.constant 3.200000e+01 : f32
    %266 = vector.broadcast %cst_83 : f32 to vector<16x1xf32>
    %267 = arith.divf %265, %266 : vector<16x1xf32>
    %cst_84 = arith.constant 9.99999974E-6 : f32
    %268 = vector.broadcast %cst_84 : f32 to vector<16x1xf32>
    %269 = arith.addf %267, %268 : vector<16x1xf32>
    %270 = math.rsqrt %269 : vector<16x1xf32>
    %271 = vector.broadcast %270 : vector<16x1xf32> to vector<16x32xf32>
    %272 = arith.mulf %262, %271 : vector<16x32xf32>
    %273 = vector.broadcast %255 : vector<1x32xf32> to vector<16x32xf32>
    %274 = arith.mulf %272, %273 : vector<16x32xf32>
    %275 = vector.broadcast %256 : vector<1x32xf32> to vector<16x32xf32>
    %276 = arith.addf %274, %275 : vector<16x32xf32>
    %c1 = arith.constant 1 : index
    %c0_85 = arith.constant 0 : index
    %c0_86 = arith.constant 0 : index
    %277 = vector.load %arg10[%c1, %c0_85, %c0_86] : memref<2x15x32xf32, #tpu.memory_space<vmem>>, vector<1x15x32xf32>
    %278 = vector.shape_cast %277 : vector<1x15x32xf32> to vector<15x32xf32>
    %c1_87 = arith.constant 1 : index
    %c0_88 = arith.constant 0 : index
    %c0_89 = arith.constant 0 : index
    %c0_90 = arith.constant 0 : index
    %279 = vector.load %arg7[%c1_87, %c0_88, %c0_89, %c0_90] : memref<2x3x32x32xbf16, #tpu.memory_space<vmem>>, vector<1x3x32x32xbf16>
    %280 = vector.shape_cast %279 : vector<1x3x32x32xbf16> to vector<3x32x32xbf16>
    %281 = arith.truncf %276 : vector<16x32xf32> to vector<16x32xbf16>
    %c1_91 = arith.constant 1 : index
    %c0_92 = arith.constant 0 : index
    %c0_93 = arith.constant 0 : index
    %282 = vector.load %arg5[%c1_91, %c0_92, %c0_93] : memref<2x32x96xbf16, #tpu.memory_space<vmem>>, vector<1x32x96xbf16>
    %283 = vector.shape_cast %282 : vector<1x32x96xbf16> to vector<32x96xbf16>
    %cst_94 = arith.constant dense<0.000000e+00> : vector<16x96xf32>
    %284 = tpu.matmul %281, %283, %cst_94 {dimension_numbers = #tpu.dot_dimension_numbers<[1], [0], [0], [1], [0, 0, 1, 1], [], []>} : vector<16x32xbf16>, vector<32x96xbf16>, vector<16x96xf32> -> vector<16x96xf32>
    %285 = vector.extract_strided_slice %284 {offsets = [0, 0], sizes = [16, 32], strides = [1, 1]} : vector<16x96xf32> to vector<16x32xf32>
    %286 = vector.extract_strided_slice %278 {offsets = [0, 0], sizes = [1, 32], strides = [1, 1]} : vector<15x32xf32> to vector<1x32xf32>
    %287 = vector.broadcast %286 : vector<1x32xf32> to vector<16x32xf32>
    %288 = arith.addf %285, %287 : vector<16x32xf32>
    %cst_95 = arith.constant 0.353553385 : f32
    %289 = vector.broadcast %cst_95 : f32 to vector<16x32xf32>
    %290 = arith.mulf %288, %289 : vector<16x32xf32>
    %291 = vector.extract_strided_slice %284 {offsets = [0, 32], sizes = [16, 32], strides = [1, 1]} : vector<16x96xf32> to vector<16x32xf32>
    %292 = vector.extract_strided_slice %278 {offsets = [1, 0], sizes = [1, 32], strides = [1, 1]} : vector<15x32xf32> to vector<1x32xf32>
    %293 = vector.broadcast %292 : vector<1x32xf32> to vector<16x32xf32>
    %294 = arith.addf %291, %293 : vector<16x32xf32>
    %295 = vector.extract_strided_slice %284 {offsets = [0, 64], sizes = [16, 32], strides = [1, 1]} : vector<16x96xf32> to vector<16x32xf32>
    %296 = vector.extract_strided_slice %278 {offsets = [2, 0], sizes = [1, 32], strides = [1, 1]} : vector<15x32xf32> to vector<1x32xf32>
    %297 = vector.broadcast %296 : vector<1x32xf32> to vector<16x32xf32>
    %298 = arith.addf %295, %297 : vector<16x32xf32>
    %299 = vector.extract_strided_slice %290 {offsets = [0, 0], sizes = [16, 8], strides = [1, 1]} : vector<16x32xf32> to vector<16x8xf32>
    %300 = vector.extract_strided_slice %294 {offsets = [0, 0], sizes = [16, 8], strides = [1, 1]} : vector<16x32xf32> to vector<16x8xf32>
    %301 = vector.extract_strided_slice %298 {offsets = [0, 0], sizes = [16, 8], strides = [1, 1]} : vector<16x32xf32> to vector<16x8xf32>
    %cst_96 = arith.constant dense<0.000000e+00> : vector<16x16xf32>
    %302 = tpu.matmul %299, %300, %cst_96 {dimension_numbers = #tpu.dot_dimension_numbers<[1], [1], [0], [0], [0, 0, 1, 0], [], []>} : vector<16x8xf32>, vector<16x8xf32>, vector<16x16xf32> -> vector<16x16xf32>
    %303 = arith.addf %302, %3 : vector<16x16xf32>
    %cst_97 = arith.constant dense<0xFF800000> : vector<16xf32>
    %304 = vector.multi_reduction <maximumf>, %303, %cst_97 [1] : vector<16x16xf32> to vector<16xf32>
    %305 = vector.shape_cast %304 : vector<16xf32> to vector<16x1xf32>
    %306 = vector.broadcast %305 : vector<16x1xf32> to vector<16x16xf32>
    %307 = arith.subf %303, %306 : vector<16x16xf32>
    %308 = math.exp %307 : vector<16x16xf32>
    %cst_98 = arith.constant dense<0.000000e+00> : vector<16xf32>
    %309 = vector.multi_reduction <add>, %308, %cst_98 [1] : vector<16x16xf32> to vector<16xf32>
    %310 = vector.shape_cast %309 : vector<16xf32> to vector<16x1xf32>
    %311 = tpu.reciprocal %310 {approx = true} : vector<16x1xf32> -> vector<16x1xf32>
    %312 = vector.broadcast %311 : vector<16x1xf32> to vector<16x16xf32>
    %313 = arith.mulf %308, %312 : vector<16x16xf32>
    %cst_99 = arith.constant dense<0.000000e+00> : vector<16x8xf32>
    %314 = tpu.matmul %313, %301, %cst_99 {dimension_numbers = #tpu.dot_dimension_numbers<[1], [0], [0], [1], [0, 0, 1, 1], [], []>} : vector<16x16xf32>, vector<16x8xf32>, vector<16x8xf32> -> vector<16x8xf32>
    %315 = vector.extract_strided_slice %290 {offsets = [0, 8], sizes = [16, 8], strides = [1, 1]} : vector<16x32xf32> to vector<16x8xf32>
    %316 = vector.extract_strided_slice %294 {offsets = [0, 8], sizes = [16, 8], strides = [1, 1]} : vector<16x32xf32> to vector<16x8xf32>
    %317 = vector.extract_strided_slice %298 {offsets = [0, 8], sizes = [16, 8], strides = [1, 1]} : vector<16x32xf32> to vector<16x8xf32>
    %cst_100 = arith.constant dense<0.000000e+00> : vector<16x16xf32>
    %318 = tpu.matmul %315, %316, %cst_100 {dimension_numbers = #tpu.dot_dimension_numbers<[1], [1], [0], [0], [0, 0, 1, 0], [], []>} : vector<16x8xf32>, vector<16x8xf32>, vector<16x16xf32> -> vector<16x16xf32>
    %319 = arith.addf %318, %3 : vector<16x16xf32>
    %cst_101 = arith.constant dense<0xFF800000> : vector<16xf32>
    %320 = vector.multi_reduction <maximumf>, %319, %cst_101 [1] : vector<16x16xf32> to vector<16xf32>
    %321 = vector.shape_cast %320 : vector<16xf32> to vector<16x1xf32>
    %322 = vector.broadcast %321 : vector<16x1xf32> to vector<16x16xf32>
    %323 = arith.subf %319, %322 : vector<16x16xf32>
    %324 = math.exp %323 : vector<16x16xf32>
    %cst_102 = arith.constant dense<0.000000e+00> : vector<16xf32>
    %325 = vector.multi_reduction <add>, %324, %cst_102 [1] : vector<16x16xf32> to vector<16xf32>
    %326 = vector.shape_cast %325 : vector<16xf32> to vector<16x1xf32>
    %327 = tpu.reciprocal %326 {approx = true} : vector<16x1xf32> -> vector<16x1xf32>
    %328 = vector.broadcast %327 : vector<16x1xf32> to vector<16x16xf32>
    %329 = arith.mulf %324, %328 : vector<16x16xf32>
    %cst_103 = arith.constant dense<0.000000e+00> : vector<16x8xf32>
    %330 = tpu.matmul %329, %317, %cst_103 {dimension_numbers = #tpu.dot_dimension_numbers<[1], [0], [0], [1], [0, 0, 1, 1], [], []>} : vector<16x16xf32>, vector<16x8xf32>, vector<16x8xf32> -> vector<16x8xf32>
    %331 = vector.extract_strided_slice %290 {offsets = [0, 16], sizes = [16, 8], strides = [1, 1]} : vector<16x32xf32> to vector<16x8xf32>
    %332 = vector.extract_strided_slice %294 {offsets = [0, 16], sizes = [16, 8], strides = [1, 1]} : vector<16x32xf32> to vector<16x8xf32>
    %333 = vector.extract_strided_slice %298 {offsets = [0, 16], sizes = [16, 8], strides = [1, 1]} : vector<16x32xf32> to vector<16x8xf32>
    %cst_104 = arith.constant dense<0.000000e+00> : vector<16x16xf32>
    %334 = tpu.matmul %331, %332, %cst_104 {dimension_numbers = #tpu.dot_dimension_numbers<[1], [1], [0], [0], [0, 0, 1, 0], [], []>} : vector<16x8xf32>, vector<16x8xf32>, vector<16x16xf32> -> vector<16x16xf32>
    %335 = arith.addf %334, %3 : vector<16x16xf32>
    %cst_105 = arith.constant dense<0xFF800000> : vector<16xf32>
    %336 = vector.multi_reduction <maximumf>, %335, %cst_105 [1] : vector<16x16xf32> to vector<16xf32>
    %337 = vector.shape_cast %336 : vector<16xf32> to vector<16x1xf32>
    %338 = vector.broadcast %337 : vector<16x1xf32> to vector<16x16xf32>
    %339 = arith.subf %335, %338 : vector<16x16xf32>
    %340 = math.exp %339 : vector<16x16xf32>
    %cst_106 = arith.constant dense<0.000000e+00> : vector<16xf32>
    %341 = vector.multi_reduction <add>, %340, %cst_106 [1] : vector<16x16xf32> to vector<16xf32>
    %342 = vector.shape_cast %341 : vector<16xf32> to vector<16x1xf32>
    %343 = tpu.reciprocal %342 {approx = true} : vector<16x1xf32> -> vector<16x1xf32>
    %344 = vector.broadcast %343 : vector<16x1xf32> to vector<16x16xf32>
    %345 = arith.mulf %340, %344 : vector<16x16xf32>
    %cst_107 = arith.constant dense<0.000000e+00> : vector<16x8xf32>
    %346 = tpu.matmul %345, %333, %cst_107 {dimension_numbers = #tpu.dot_dimension_numbers<[1], [0], [0], [1], [0, 0, 1, 1], [], []>} : vector<16x16xf32>, vector<16x8xf32>, vector<16x8xf32> -> vector<16x8xf32>
    %347 = vector.extract_strided_slice %290 {offsets = [0, 24], sizes = [16, 8], strides = [1, 1]} : vector<16x32xf32> to vector<16x8xf32>
    %348 = vector.extract_strided_slice %294 {offsets = [0, 24], sizes = [16, 8], strides = [1, 1]} : vector<16x32xf32> to vector<16x8xf32>
    %349 = vector.extract_strided_slice %298 {offsets = [0, 24], sizes = [16, 8], strides = [1, 1]} : vector<16x32xf32> to vector<16x8xf32>
    %cst_108 = arith.constant dense<0.000000e+00> : vector<16x16xf32>
    %350 = tpu.matmul %347, %348, %cst_108 {dimension_numbers = #tpu.dot_dimension_numbers<[1], [1], [0], [0], [0, 0, 1, 0], [], []>} : vector<16x8xf32>, vector<16x8xf32>, vector<16x16xf32> -> vector<16x16xf32>
    %351 = arith.addf %350, %3 : vector<16x16xf32>
    %cst_109 = arith.constant dense<0xFF800000> : vector<16xf32>
    %352 = vector.multi_reduction <maximumf>, %351, %cst_109 [1] : vector<16x16xf32> to vector<16xf32>
    %353 = vector.shape_cast %352 : vector<16xf32> to vector<16x1xf32>
    %354 = vector.broadcast %353 : vector<16x1xf32> to vector<16x16xf32>
    %355 = arith.subf %351, %354 : vector<16x16xf32>
    %356 = math.exp %355 : vector<16x16xf32>
    %cst_110 = arith.constant dense<0.000000e+00> : vector<16xf32>
    %357 = vector.multi_reduction <add>, %356, %cst_110 [1] : vector<16x16xf32> to vector<16xf32>
    %358 = vector.shape_cast %357 : vector<16xf32> to vector<16x1xf32>
    %359 = tpu.reciprocal %358 {approx = true} : vector<16x1xf32> -> vector<16x1xf32>
    %360 = vector.broadcast %359 : vector<16x1xf32> to vector<16x16xf32>
    %361 = arith.mulf %356, %360 : vector<16x16xf32>
    %cst_111 = arith.constant dense<0.000000e+00> : vector<16x8xf32>
    %362 = tpu.matmul %361, %349, %cst_111 {dimension_numbers = #tpu.dot_dimension_numbers<[1], [0], [0], [1], [0, 0, 1, 1], [], []>} : vector<16x16xf32>, vector<16x8xf32>, vector<16x8xf32> -> vector<16x8xf32>
    %363 = tpu.concatenate %314, %330, %346, %362 in 1 : vector<16x8xf32>, vector<16x8xf32>, vector<16x8xf32>, vector<16x8xf32> -> vector<16x32xf32>
    %364 = arith.truncf %363 : vector<16x32xf32> to vector<16x32xbf16>
    %365 = vector.extract_strided_slice %280 {offsets = [0, 0, 0], sizes = [1, 32, 32], strides = [1, 1, 1]} : vector<3x32x32xbf16> to vector<1x32x32xbf16>
    %366 = vector.shape_cast %365 : vector<1x32x32xbf16> to vector<32x32xbf16>
    %cst_112 = arith.constant dense<0.000000e+00> : vector<16x32xf32>
    %367 = tpu.matmul %364, %366, %cst_112 {dimension_numbers = #tpu.dot_dimension_numbers<[1], [0], [0], [1], [0, 0, 1, 1], [], []>} : vector<16x32xbf16>, vector<32x32xbf16>, vector<16x32xf32> -> vector<16x32xf32>
    %368 = vector.extract_strided_slice %278 {offsets = [3, 0], sizes = [1, 32], strides = [1, 1]} : vector<15x32xf32> to vector<1x32xf32>
    %369 = vector.broadcast %368 : vector<1x32xf32> to vector<16x32xf32>
    %370 = arith.addf %367, %369 : vector<16x32xf32>
    %371 = arith.addf %276, %370 : vector<16x32xf32>
    %372 = vector.extract_strided_slice %278 {offsets = [9, 0], sizes = [1, 32], strides = [1, 1]} : vector<15x32xf32> to vector<1x32xf32>
    %373 = vector.extract_strided_slice %278 {offsets = [12, 0], sizes = [1, 32], strides = [1, 1]} : vector<15x32xf32> to vector<1x32xf32>
    %cst_113 = arith.constant dense<0.000000e+00> : vector<16xf32>
    %374 = vector.multi_reduction <add>, %371, %cst_113 [1] : vector<16x32xf32> to vector<16xf32>
    %375 = vector.shape_cast %374 : vector<16xf32> to vector<16x1xf32>
    %cst_114 = arith.constant 3.200000e+01 : f32
    %376 = vector.broadcast %cst_114 : f32 to vector<16x1xf32>
    %377 = arith.divf %375, %376 : vector<16x1xf32>
    %378 = vector.broadcast %377 : vector<16x1xf32> to vector<16x32xf32>
    %379 = arith.subf %371, %378 : vector<16x32xf32>
    %380 = arith.mulf %379, %379 : vector<16x32xf32>
    %cst_115 = arith.constant dense<0.000000e+00> : vector<16xf32>
    %381 = vector.multi_reduction <add>, %380, %cst_115 [1] : vector<16x32xf32> to vector<16xf32>
    %382 = vector.shape_cast %381 : vector<16xf32> to vector<16x1xf32>
    %cst_116 = arith.constant 3.200000e+01 : f32
    %383 = vector.broadcast %cst_116 : f32 to vector<16x1xf32>
    %384 = arith.divf %382, %383 : vector<16x1xf32>
    %cst_117 = arith.constant 9.99999974E-6 : f32
    %385 = vector.broadcast %cst_117 : f32 to vector<16x1xf32>
    %386 = arith.addf %384, %385 : vector<16x1xf32>
    %387 = math.rsqrt %386 : vector<16x1xf32>
    %388 = vector.broadcast %387 : vector<16x1xf32> to vector<16x32xf32>
    %389 = arith.mulf %379, %388 : vector<16x32xf32>
    %390 = vector.broadcast %372 : vector<1x32xf32> to vector<16x32xf32>
    %391 = arith.mulf %389, %390 : vector<16x32xf32>
    %392 = vector.broadcast %373 : vector<1x32xf32> to vector<16x32xf32>
    %393 = arith.addf %391, %392 : vector<16x32xf32>
    %394 = arith.truncf %393 : vector<16x32xf32> to vector<16x32xbf16>
    %395 = vector.extract_strided_slice %280 {offsets = [1, 0, 0], sizes = [1, 32, 32], strides = [1, 1, 1]} : vector<3x32x32xbf16> to vector<1x32x32xbf16>
    %396 = vector.shape_cast %395 : vector<1x32x32xbf16> to vector<32x32xbf16>
    %cst_118 = arith.constant dense<0.000000e+00> : vector<16x32xf32>
    %397 = tpu.matmul %394, %396, %cst_118 {dimension_numbers = #tpu.dot_dimension_numbers<[1], [0], [0], [1], [0, 0, 1, 1], [], []>} : vector<16x32xbf16>, vector<32x32xbf16>, vector<16x32xf32> -> vector<16x32xf32>
    %398 = vector.extract_strided_slice %278 {offsets = [4, 0], sizes = [1, 32], strides = [1, 1]} : vector<15x32xf32> to vector<1x32xf32>
    %399 = vector.broadcast %398 : vector<1x32xf32> to vector<16x32xf32>
    %400 = arith.addf %397, %399 : vector<16x32xf32>
    %cst_119 = arith.constant 0.353553385 : f32
    %401 = vector.broadcast %cst_119 : f32 to vector<16x32xf32>
    %402 = arith.mulf %400, %401 : vector<16x32xf32>
    %c1_120 = arith.constant 1 : index
    %c0_121 = arith.constant 0 : index
    %c0_122 = arith.constant 0 : index
    %403 = vector.load %arg6[%c1_120, %c0_121, %c0_122] : memref<2x32x64xbf16, #tpu.memory_space<vmem>>, vector<1x32x64xbf16>
    %404 = vector.shape_cast %403 : vector<1x32x64xbf16> to vector<32x64xbf16>
    %cst_123 = arith.constant dense<0.000000e+00> : vector<20x64xf32>
    %405 = tpu.matmul %2, %404, %cst_123 {dimension_numbers = #tpu.dot_dimension_numbers<[1], [0], [0], [1], [0, 0, 1, 1], [], []>} : vector<20x32xbf16>, vector<32x64xbf16>, vector<20x64xf32> -> vector<20x64xf32>
    %406 = vector.extract_strided_slice %405 {offsets = [0, 0], sizes = [20, 32], strides = [1, 1]} : vector<20x64xf32> to vector<20x32xf32>
    %407 = vector.extract_strided_slice %278 {offsets = [5, 0], sizes = [1, 32], strides = [1, 1]} : vector<15x32xf32> to vector<1x32xf32>
    %408 = vector.broadcast %407 : vector<1x32xf32> to vector<20x32xf32>
    %409 = arith.addf %406, %408 : vector<20x32xf32>
    %410 = vector.extract_strided_slice %405 {offsets = [0, 32], sizes = [20, 32], strides = [1, 1]} : vector<20x64xf32> to vector<20x32xf32>
    %411 = vector.extract_strided_slice %278 {offsets = [6, 0], sizes = [1, 32], strides = [1, 1]} : vector<15x32xf32> to vector<1x32xf32>
    %412 = vector.broadcast %411 : vector<1x32xf32> to vector<20x32xf32>
    %413 = arith.addf %410, %412 : vector<20x32xf32>
    %414 = vector.extract_strided_slice %402 {offsets = [0, 0], sizes = [16, 8], strides = [1, 1]} : vector<16x32xf32> to vector<16x8xf32>
    %415 = vector.extract_strided_slice %409 {offsets = [0, 0], sizes = [20, 8], strides = [1, 1]} : vector<20x32xf32> to vector<20x8xf32>
    %416 = vector.extract_strided_slice %413 {offsets = [0, 0], sizes = [20, 8], strides = [1, 1]} : vector<20x32xf32> to vector<20x8xf32>
    %cst_124 = arith.constant dense<0.000000e+00> : vector<16x20xf32>
    %417 = tpu.matmul %414, %415, %cst_124 {dimension_numbers = #tpu.dot_dimension_numbers<[1], [1], [0], [0], [0, 0, 1, 0], [], []>} : vector<16x8xf32>, vector<20x8xf32>, vector<16x20xf32> -> vector<16x20xf32>
    %418 = arith.addf %417, %4 : vector<16x20xf32>
    %cst_125 = arith.constant dense<0xFF800000> : vector<16xf32>
    %419 = vector.multi_reduction <maximumf>, %418, %cst_125 [1] : vector<16x20xf32> to vector<16xf32>
    %420 = vector.shape_cast %419 : vector<16xf32> to vector<16x1xf32>
    %421 = vector.broadcast %420 : vector<16x1xf32> to vector<16x20xf32>
    %422 = arith.subf %418, %421 : vector<16x20xf32>
    %423 = math.exp %422 : vector<16x20xf32>
    %cst_126 = arith.constant dense<0.000000e+00> : vector<16xf32>
    %424 = vector.multi_reduction <add>, %423, %cst_126 [1] : vector<16x20xf32> to vector<16xf32>
    %425 = vector.shape_cast %424 : vector<16xf32> to vector<16x1xf32>
    %426 = tpu.reciprocal %425 {approx = true} : vector<16x1xf32> -> vector<16x1xf32>
    %427 = vector.broadcast %426 : vector<16x1xf32> to vector<16x20xf32>
    %428 = arith.mulf %423, %427 : vector<16x20xf32>
    %cst_127 = arith.constant dense<0.000000e+00> : vector<16x8xf32>
    %429 = tpu.matmul %428, %416, %cst_127 {dimension_numbers = #tpu.dot_dimension_numbers<[1], [0], [0], [1], [0, 0, 1, 1], [], []>} : vector<16x20xf32>, vector<20x8xf32>, vector<16x8xf32> -> vector<16x8xf32>
    %430 = vector.extract_strided_slice %402 {offsets = [0, 8], sizes = [16, 8], strides = [1, 1]} : vector<16x32xf32> to vector<16x8xf32>
    %431 = vector.extract_strided_slice %409 {offsets = [0, 8], sizes = [20, 8], strides = [1, 1]} : vector<20x32xf32> to vector<20x8xf32>
    %432 = vector.extract_strided_slice %413 {offsets = [0, 8], sizes = [20, 8], strides = [1, 1]} : vector<20x32xf32> to vector<20x8xf32>
    %cst_128 = arith.constant dense<0.000000e+00> : vector<16x20xf32>
    %433 = tpu.matmul %430, %431, %cst_128 {dimension_numbers = #tpu.dot_dimension_numbers<[1], [1], [0], [0], [0, 0, 1, 0], [], []>} : vector<16x8xf32>, vector<20x8xf32>, vector<16x20xf32> -> vector<16x20xf32>
    %434 = arith.addf %433, %4 : vector<16x20xf32>
    %cst_129 = arith.constant dense<0xFF800000> : vector<16xf32>
    %435 = vector.multi_reduction <maximumf>, %434, %cst_129 [1] : vector<16x20xf32> to vector<16xf32>
    %436 = vector.shape_cast %435 : vector<16xf32> to vector<16x1xf32>
    %437 = vector.broadcast %436 : vector<16x1xf32> to vector<16x20xf32>
    %438 = arith.subf %434, %437 : vector<16x20xf32>
    %439 = math.exp %438 : vector<16x20xf32>
    %cst_130 = arith.constant dense<0.000000e+00> : vector<16xf32>
    %440 = vector.multi_reduction <add>, %439, %cst_130 [1] : vector<16x20xf32> to vector<16xf32>
    %441 = vector.shape_cast %440 : vector<16xf32> to vector<16x1xf32>
    %442 = tpu.reciprocal %441 {approx = true} : vector<16x1xf32> -> vector<16x1xf32>
    %443 = vector.broadcast %442 : vector<16x1xf32> to vector<16x20xf32>
    %444 = arith.mulf %439, %443 : vector<16x20xf32>
    %cst_131 = arith.constant dense<0.000000e+00> : vector<16x8xf32>
    %445 = tpu.matmul %444, %432, %cst_131 {dimension_numbers = #tpu.dot_dimension_numbers<[1], [0], [0], [1], [0, 0, 1, 1], [], []>} : vector<16x20xf32>, vector<20x8xf32>, vector<16x8xf32> -> vector<16x8xf32>
    %446 = vector.extract_strided_slice %402 {offsets = [0, 16], sizes = [16, 8], strides = [1, 1]} : vector<16x32xf32> to vector<16x8xf32>
    %447 = vector.extract_strided_slice %409 {offsets = [0, 16], sizes = [20, 8], strides = [1, 1]} : vector<20x32xf32> to vector<20x8xf32>
    %448 = vector.extract_strided_slice %413 {offsets = [0, 16], sizes = [20, 8], strides = [1, 1]} : vector<20x32xf32> to vector<20x8xf32>
    %cst_132 = arith.constant dense<0.000000e+00> : vector<16x20xf32>
    %449 = tpu.matmul %446, %447, %cst_132 {dimension_numbers = #tpu.dot_dimension_numbers<[1], [1], [0], [0], [0, 0, 1, 0], [], []>} : vector<16x8xf32>, vector<20x8xf32>, vector<16x20xf32> -> vector<16x20xf32>
    %450 = arith.addf %449, %4 : vector<16x20xf32>
    %cst_133 = arith.constant dense<0xFF800000> : vector<16xf32>
    %451 = vector.multi_reduction <maximumf>, %450, %cst_133 [1] : vector<16x20xf32> to vector<16xf32>
    %452 = vector.shape_cast %451 : vector<16xf32> to vector<16x1xf32>
    %453 = vector.broadcast %452 : vector<16x1xf32> to vector<16x20xf32>
    %454 = arith.subf %450, %453 : vector<16x20xf32>
    %455 = math.exp %454 : vector<16x20xf32>
    %cst_134 = arith.constant dense<0.000000e+00> : vector<16xf32>
    %456 = vector.multi_reduction <add>, %455, %cst_134 [1] : vector<16x20xf32> to vector<16xf32>
    %457 = vector.shape_cast %456 : vector<16xf32> to vector<16x1xf32>
    %458 = tpu.reciprocal %457 {approx = true} : vector<16x1xf32> -> vector<16x1xf32>
    %459 = vector.broadcast %458 : vector<16x1xf32> to vector<16x20xf32>
    %460 = arith.mulf %455, %459 : vector<16x20xf32>
    %cst_135 = arith.constant dense<0.000000e+00> : vector<16x8xf32>
    %461 = tpu.matmul %460, %448, %cst_135 {dimension_numbers = #tpu.dot_dimension_numbers<[1], [0], [0], [1], [0, 0, 1, 1], [], []>} : vector<16x20xf32>, vector<20x8xf32>, vector<16x8xf32> -> vector<16x8xf32>
    %462 = vector.extract_strided_slice %402 {offsets = [0, 24], sizes = [16, 8], strides = [1, 1]} : vector<16x32xf32> to vector<16x8xf32>
    %463 = vector.extract_strided_slice %409 {offsets = [0, 24], sizes = [20, 8], strides = [1, 1]} : vector<20x32xf32> to vector<20x8xf32>
    %464 = vector.extract_strided_slice %413 {offsets = [0, 24], sizes = [20, 8], strides = [1, 1]} : vector<20x32xf32> to vector<20x8xf32>
    %cst_136 = arith.constant dense<0.000000e+00> : vector<16x20xf32>
    %465 = tpu.matmul %462, %463, %cst_136 {dimension_numbers = #tpu.dot_dimension_numbers<[1], [1], [0], [0], [0, 0, 1, 0], [], []>} : vector<16x8xf32>, vector<20x8xf32>, vector<16x20xf32> -> vector<16x20xf32>
    %466 = arith.addf %465, %4 : vector<16x20xf32>
    %cst_137 = arith.constant dense<0xFF800000> : vector<16xf32>
    %467 = vector.multi_reduction <maximumf>, %466, %cst_137 [1] : vector<16x20xf32> to vector<16xf32>
    %468 = vector.shape_cast %467 : vector<16xf32> to vector<16x1xf32>
    %469 = vector.broadcast %468 : vector<16x1xf32> to vector<16x20xf32>
    %470 = arith.subf %466, %469 : vector<16x20xf32>
    %471 = math.exp %470 : vector<16x20xf32>
    %cst_138 = arith.constant dense<0.000000e+00> : vector<16xf32>
    %472 = vector.multi_reduction <add>, %471, %cst_138 [1] : vector<16x20xf32> to vector<16xf32>
    %473 = vector.shape_cast %472 : vector<16xf32> to vector<16x1xf32>
    %474 = tpu.reciprocal %473 {approx = true} : vector<16x1xf32> -> vector<16x1xf32>
    %475 = vector.broadcast %474 : vector<16x1xf32> to vector<16x20xf32>
    %476 = arith.mulf %471, %475 : vector<16x20xf32>
    %cst_139 = arith.constant dense<0.000000e+00> : vector<16x8xf32>
    %477 = tpu.matmul %476, %464, %cst_139 {dimension_numbers = #tpu.dot_dimension_numbers<[1], [0], [0], [1], [0, 0, 1, 1], [], []>} : vector<16x20xf32>, vector<20x8xf32>, vector<16x8xf32> -> vector<16x8xf32>
    %478 = tpu.concatenate %429, %445, %461, %477 in 1 : vector<16x8xf32>, vector<16x8xf32>, vector<16x8xf32>, vector<16x8xf32> -> vector<16x32xf32>
    %479 = arith.truncf %478 : vector<16x32xf32> to vector<16x32xbf16>
    %480 = vector.extract_strided_slice %280 {offsets = [2, 0, 0], sizes = [1, 32, 32], strides = [1, 1, 1]} : vector<3x32x32xbf16> to vector<1x32x32xbf16>
    %481 = vector.shape_cast %480 : vector<1x32x32xbf16> to vector<32x32xbf16>
    %cst_140 = arith.constant dense<0.000000e+00> : vector<16x32xf32>
    %482 = tpu.matmul %479, %481, %cst_140 {dimension_numbers = #tpu.dot_dimension_numbers<[1], [0], [0], [1], [0, 0, 1, 1], [], []>} : vector<16x32xbf16>, vector<32x32xbf16>, vector<16x32xf32> -> vector<16x32xf32>
    %483 = vector.extract_strided_slice %278 {offsets = [7, 0], sizes = [1, 32], strides = [1, 1]} : vector<15x32xf32> to vector<1x32xf32>
    %484 = vector.broadcast %483 : vector<1x32xf32> to vector<16x32xf32>
    %485 = arith.addf %482, %484 : vector<16x32xf32>
    %486 = arith.addf %393, %485 : vector<16x32xf32>
    %487 = vector.extract_strided_slice %278 {offsets = [10, 0], sizes = [1, 32], strides = [1, 1]} : vector<15x32xf32> to vector<1x32xf32>
    %488 = vector.extract_strided_slice %278 {offsets = [13, 0], sizes = [1, 32], strides = [1, 1]} : vector<15x32xf32> to vector<1x32xf32>
    %cst_141 = arith.constant dense<0.000000e+00> : vector<16xf32>
    %489 = vector.multi_reduction <add>, %486, %cst_141 [1] : vector<16x32xf32> to vector<16xf32>
    %490 = vector.shape_cast %489 : vector<16xf32> to vector<16x1xf32>
    %cst_142 = arith.constant 3.200000e+01 : f32
    %491 = vector.broadcast %cst_142 : f32 to vector<16x1xf32>
    %492 = arith.divf %490, %491 : vector<16x1xf32>
    %493 = vector.broadcast %492 : vector<16x1xf32> to vector<16x32xf32>
    %494 = arith.subf %486, %493 : vector<16x32xf32>
    %495 = arith.mulf %494, %494 : vector<16x32xf32>
    %cst_143 = arith.constant dense<0.000000e+00> : vector<16xf32>
    %496 = vector.multi_reduction <add>, %495, %cst_143 [1] : vector<16x32xf32> to vector<16xf32>
    %497 = vector.shape_cast %496 : vector<16xf32> to vector<16x1xf32>
    %cst_144 = arith.constant 3.200000e+01 : f32
    %498 = vector.broadcast %cst_144 : f32 to vector<16x1xf32>
    %499 = arith.divf %497, %498 : vector<16x1xf32>
    %cst_145 = arith.constant 9.99999974E-6 : f32
    %500 = vector.broadcast %cst_145 : f32 to vector<16x1xf32>
    %501 = arith.addf %499, %500 : vector<16x1xf32>
    %502 = math.rsqrt %501 : vector<16x1xf32>
    %503 = vector.broadcast %502 : vector<16x1xf32> to vector<16x32xf32>
    %504 = arith.mulf %494, %503 : vector<16x32xf32>
    %505 = vector.broadcast %487 : vector<1x32xf32> to vector<16x32xf32>
    %506 = arith.mulf %504, %505 : vector<16x32xf32>
    %507 = vector.broadcast %488 : vector<1x32xf32> to vector<16x32xf32>
    %508 = arith.addf %506, %507 : vector<16x32xf32>
    %509 = arith.truncf %508 : vector<16x32xf32> to vector<16x32xbf16>
    %c1_146 = arith.constant 1 : index
    %c0_147 = arith.constant 0 : index
    %c0_148 = arith.constant 0 : index
    %510 = vector.load %arg8[%c1_146, %c0_147, %c0_148] : memref<2x32x64xbf16, #tpu.memory_space<vmem>>, vector<1x32x64xbf16>
    %511 = vector.shape_cast %510 : vector<1x32x64xbf16> to vector<32x64xbf16>
    %cst_149 = arith.constant dense<0.000000e+00> : vector<16x64xf32>
    %512 = tpu.matmul %509, %511, %cst_149 {dimension_numbers = #tpu.dot_dimension_numbers<[1], [0], [0], [1], [0, 0, 1, 1], [], []>} : vector<16x32xbf16>, vector<32x64xbf16>, vector<16x64xf32> -> vector<16x64xf32>
    %c1_150 = arith.constant 1 : index
    %c0_151 = arith.constant 0 : index
    %c0_152 = arith.constant 0 : index
    %513 = vector.load %arg11[%c1_150, %c0_151, %c0_152] : memref<2x1x64xf32, #tpu.memory_space<vmem>>, vector<1x1x64xf32>
    %514 = vector.shape_cast %513 : vector<1x1x64xf32> to vector<1x64xf32>
    %515 = vector.broadcast %514 : vector<1x64xf32> to vector<16x64xf32>
    %516 = arith.addf %512, %515 : vector<16x64xf32>
    %cst_153 = arith.constant 0.000000e+00 : f32
    %517 = vector.broadcast %cst_153 : f32 to vector<16x64xf32>
    %518 = arith.maximumf %516, %517 : vector<16x64xf32>
    %519 = arith.truncf %518 : vector<16x64xf32> to vector<16x64xbf16>
    %c1_154 = arith.constant 1 : index
    %c0_155 = arith.constant 0 : index
    %c0_156 = arith.constant 0 : index
    %520 = vector.load %arg9[%c1_154, %c0_155, %c0_156] : memref<2x64x32xbf16, #tpu.memory_space<vmem>>, vector<1x64x32xbf16>
    %521 = vector.shape_cast %520 : vector<1x64x32xbf16> to vector<64x32xbf16>
    %cst_157 = arith.constant dense<0.000000e+00> : vector<16x32xf32>
    %522 = tpu.matmul %519, %521, %cst_157 {dimension_numbers = #tpu.dot_dimension_numbers<[1], [0], [0], [1], [0, 0, 1, 1], [], []>} : vector<16x64xbf16>, vector<64x32xbf16>, vector<16x32xf32> -> vector<16x32xf32>
    %523 = vector.extract_strided_slice %278 {offsets = [8, 0], sizes = [1, 32], strides = [1, 1]} : vector<15x32xf32> to vector<1x32xf32>
    %524 = vector.broadcast %523 : vector<1x32xf32> to vector<16x32xf32>
    %525 = arith.addf %522, %524 : vector<16x32xf32>
    %526 = arith.addf %508, %525 : vector<16x32xf32>
    %527 = vector.extract_strided_slice %278 {offsets = [11, 0], sizes = [1, 32], strides = [1, 1]} : vector<15x32xf32> to vector<1x32xf32>
    %528 = vector.extract_strided_slice %278 {offsets = [14, 0], sizes = [1, 32], strides = [1, 1]} : vector<15x32xf32> to vector<1x32xf32>
    %cst_158 = arith.constant dense<0.000000e+00> : vector<16xf32>
    %529 = vector.multi_reduction <add>, %526, %cst_158 [1] : vector<16x32xf32> to vector<16xf32>
    %530 = vector.shape_cast %529 : vector<16xf32> to vector<16x1xf32>
    %cst_159 = arith.constant 3.200000e+01 : f32
    %531 = vector.broadcast %cst_159 : f32 to vector<16x1xf32>
    %532 = arith.divf %530, %531 : vector<16x1xf32>
    %533 = vector.broadcast %532 : vector<16x1xf32> to vector<16x32xf32>
    %534 = arith.subf %526, %533 : vector<16x32xf32>
    %535 = arith.mulf %534, %534 : vector<16x32xf32>
    %cst_160 = arith.constant dense<0.000000e+00> : vector<16xf32>
    %536 = vector.multi_reduction <add>, %535, %cst_160 [1] : vector<16x32xf32> to vector<16xf32>
    %537 = vector.shape_cast %536 : vector<16xf32> to vector<16x1xf32>
    %cst_161 = arith.constant 3.200000e+01 : f32
    %538 = vector.broadcast %cst_161 : f32 to vector<16x1xf32>
    %539 = arith.divf %537, %538 : vector<16x1xf32>
    %cst_162 = arith.constant 9.99999974E-6 : f32
    %540 = vector.broadcast %cst_162 : f32 to vector<16x1xf32>
    %541 = arith.addf %539, %540 : vector<16x1xf32>
    %542 = math.rsqrt %541 : vector<16x1xf32>
    %543 = vector.broadcast %542 : vector<16x1xf32> to vector<16x32xf32>
    %544 = arith.mulf %534, %543 : vector<16x32xf32>
    %545 = vector.broadcast %527 : vector<1x32xf32> to vector<16x32xf32>
    %546 = arith.mulf %544, %545 : vector<16x32xf32>
    %547 = vector.broadcast %528 : vector<1x32xf32> to vector<16x32xf32>
    %548 = arith.addf %546, %547 : vector<16x32xf32>
    %c0_163 = arith.constant 0 : index
    %c0_164 = arith.constant 0 : index
    %549 = vector.load %arg12[%c0_163, %c0_164] : memref<16x32xf32, #tpu.memory_space<vmem>>, vector<16x32xf32>
    tpu.vector_store %arg12[%c0_163, %c0_164], %548 {strides = array<i32>} : memref<16x32xf32, #tpu.memory_space<vmem>>, vector<16x32xf32>,
    return
  }
  func.func @transform_0(%arg0: i32) -> (i32, i32) {
    %c0_i32 = arith.constant 0 : i32
    %c0_i32_0 = arith.constant 0 : i32
    return %arg0, %c0_i32 : i32, i32
  }
  func.func @transform_1(%arg0: i32) -> (i32, i32) {
    %c0_i32 = arith.constant 0 : i32
    %c0_i32_0 = arith.constant 0 : i32
    return %arg0, %c0_i32 : i32, i32
  }
  func.func @transform_2(%arg0: i32) -> (i32, i32) {
    %c0_i32 = arith.constant 0 : i32
    %c0_i32_0 = arith.constant 0 : i32
    %c0_i32_1 = arith.constant 0 : i32
    return %c0_i32, %c0_i32_0 : i32, i32
  }
  func.func @transform_3(%arg0: i32) -> (i32, i32) {
    %c0_i32 = arith.constant 0 : i32
    %c0_i32_0 = arith.constant 0 : i32
    %c0_i32_1 = arith.constant 0 : i32
    return %c0_i32, %c0_i32_0 : i32, i32
  }
  func.func @transform_4(%arg0: i32) -> (i32, i32, i32) {
    %c0_i32 = arith.constant 0 : i32
    %c0_i32_0 = arith.constant 0 : i32
    %c0_i32_1 = arith.constant 0 : i32
    %c0_i32_2 = arith.constant 0 : i32
    return %c0_i32, %c0_i32_0, %c0_i32_1 : i32, i32, i32
  }
  func.func @transform_5(%arg0: i32) -> (i32, i32, i32) {
    %c0_i32 = arith.constant 0 : i32
    %c0_i32_0 = arith.constant 0 : i32
    %c0_i32_1 = arith.constant 0 : i32
    %c0_i32_2 = arith.constant 0 : i32
    return %c0_i32, %c0_i32_0, %c0_i32_1 : i32, i32, i32
  }
  func.func @transform_6(%arg0: i32) -> (i32, i32, i32, i32) {
    %c0_i32 = arith.constant 0 : i32
    %c0_i32_0 = arith.constant 0 : i32
    %c0_i32_1 = arith.constant 0 : i32
    %c0_i32_2 = arith.constant 0 : i32
    %c0_i32_3 = arith.constant 0 : i32
    return %c0_i32, %c0_i32_0, %c0_i32_1, %c0_i32_2 : i32, i32, i32, i32
  }
  func.func @transform_7(%arg0: i32) -> (i32, i32, i32) {
    %c0_i32 = arith.constant 0 : i32
    %c0_i32_0 = arith.constant 0 : i32
    %c0_i32_1 = arith.constant 0 : i32
    %c0_i32_2 = arith.constant 0 : i32
    return %c0_i32, %c0_i32_0, %c0_i32_1 : i32, i32, i32
  }
  func.func @transform_8(%arg0: i32) -> (i32, i32, i32) {
    %c0_i32 = arith.constant 0 : i32
    %c0_i32_0 = arith.constant 0 : i32
    %c0_i32_1 = arith.constant 0 : i32
    %c0_i32_2 = arith.constant 0 : i32
    return %c0_i32, %c0_i32_0, %c0_i32_1 : i32, i32, i32
  }
  func.func @transform_9(%arg0: i32) -> (i32, i32, i32) {
    %c0_i32 = arith.constant 0 : i32
    %c0_i32_0 = arith.constant 0 : i32
    %c0_i32_1 = arith.constant 0 : i32
    %c0_i32_2 = arith.constant 0 : i32
    return %c0_i32, %c0_i32_0, %c0_i32_1 : i32, i32, i32
  }
  func.func @transform_10(%arg0: i32) -> (i32, i32, i32) {
    %c0_i32 = arith.constant 0 : i32
    %c0_i32_0 = arith.constant 0 : i32
    %c0_i32_1 = arith.constant 0 : i32
    %c0_i32_2 = arith.constant 0 : i32
    return %c0_i32, %c0_i32_0, %c0_i32_1 : i32, i32, i32
  }
  func.func @transform_11(%arg0: i32) -> (i32, i32) {
    %c0_i32 = arith.constant 0 : i32
    %c0_i32_0 = arith.constant 0 : i32
    return %arg0, %c0_i32 : i32, i32
  }
}

</mosaic_0001>

<llo_original>
// kernel: tpu_custom_call.1
$region0: #{tpu_custom_call.1}
  #allocation0 [shape = 'u32[]', space=smem, size = 0x4, offset = 0x4, fixed_abs, tag = 'smem constant byte address 0x4 - core index']
  #allocation1 [shape = 'u32[72,128]{1,0:T(1,128)}', space=vmem, size = 0x9000, scoped, tag = 'internal scratch']
  %s0 = inlined_call_operand.hbm [shape: f32[16,32], index: 0, kind: input, shape index: {}]
  %s1 = inlined_call_operand.hbm [shape: f32[20,32], index: 1, kind: input, shape index: {}]
  %s2 = inlined_call_operand.hbm [shape: f32[16,16], index: 2, kind: input, shape index: {}]
  %s3 = inlined_call_operand.hbm [shape: f32[16,20], index: 3, kind: input, shape index: {}]
  %s4 = inlined_call_operand.vmem [shape: bf16[2,32,96], index: 4, kind: input, shape index: {}]
  %s5 = inlined_call_operand.hbm [shape: bf16[2,32,64], index: 5, kind: input, shape index: {}]
  %s6 = inlined_call_operand.vmem [shape: bf16[2,3,32,32], index: 6, kind: input, shape index: {}]
  %s7 = inlined_call_operand.hbm [shape: bf16[2,32,64], index: 7, kind: input, shape index: {}]
  %s8 = inlined_call_operand.vmem [shape: bf16[2,64,32], index: 8, kind: input, shape index: {}]
  %s9 = inlined_call_operand.vmem [shape: f32[2,15,32], index: 9, kind: input, shape index: {}]
  %s10 = inlined_call_operand.vmem [shape: f32[2,1,64], index: 10, kind: input, shape index: {}]
  %s11 = inlined_call_operand.hbm [shape: f32[16,32], index: 11, kind: output, shape index: {}]
  %s12 = sld [smem:[#allocation0]]
  $region78: #{tpu_custom_call.1} parent=0
    _
  %s14 = ssub.s32 1, %s12
  %s15 = scalar_select 0, %s14, %s12
  $region1: #{tpu_custom_call.1} parent=0
    #allocation2 [shape = 'u8[8192]{0}', space=vmem, size = 0x2000, scoped, tag = 'input window, operand 0, single buffered']
    #allocation3 [shape = 's32[1]{0}', space=sflag, size = 0x4, scoped, tag = 'scoped memory for tpu_custom_call.1']
    #allocation4 [shape = 's32[1]{0}', space=sflag, size = 0x4, scoped, tag = 'scoped memory for tpu_custom_call.1']
    #allocation5 [shape = 'u8[12288]{0}', space=vmem, size = 0x3000, scoped, tag = 'input window, operand 1, single buffered']
    #allocation6 [shape = 's32[1]{0}', space=sflag, size = 0x4, scoped, tag = 'scoped memory for tpu_custom_call.1']
    #allocation7 [shape = 'u8[8192]{0}', space=vmem, size = 0x2000, scoped, tag = 'input window, operand 2, single buffered']
    #allocation8 [shape = 'u8[8192]{0}', space=vmem, size = 0x2000, scoped, tag = 'input window, operand 3, single buffered']
    #allocation9 [shape = 's32[1]{0}', space=sflag, size = 0x4, scoped, tag = 'scoped memory for tpu_custom_call.1']
    #allocation10 [shape = 'u8[16384]{0}', space=vmem, size = 0x4000, scoped, tag = 'input window, operand 5, single buffered']
    #allocation11 [shape = 'u8[16384]{0}', space=vmem, size = 0x4000, scoped, tag = 'input window, operand 7, single buffered']
    #allocation12 [shape = 's32[1]{0}', space=sflag, size = 0x4, scoped, tag = 'scoped memory for tpu_custom_call.1']
    #allocation13 [shape = 'u8[8192]{0}', space=vmem, size = 0x2000, scoped, tag = 'output window, operand 0, single buffered']
    %16 = vsyncpa [#allocation3], 0
    %17 = vsyncpa [#allocation6], 0
    %18 = vsyncpa [#allocation9], 0
    %19 = vsyncpa [#allocation12], 0
    %20 = vsyncpa [#allocation4], 0
    // Predicated region
    $region2: #{tpu_custom_call.1} parent=1 // pred_check
      _
    $region3: #{tpu_custom_call.1} parent=1 // pred_check_branch
      %22 = sbr.rel (0) target = $region5
    $region4: #{tpu_custom_call.1} parent=1 // pred_region
      %24 = vsyncadd [#allocation3], 0
      %s25 = sshll.u32 %s0, 4
      %s26 = int_to_ptr.hbm [resolvable:$true] %s25
      %s27 = sshll.u32 [#allocation2], 4
      %s28 = int_to_ptr.vmem [resolvable:$true] %s27
      %33 = dma.hbm_to_vmem [thread:$0]  %s26, 256, %s28, [#allocation3], 128, 128, 8
    $region5: #{tpu_custom_call.1} parent=1 // pred_fallthru
      _
    // Predicated region
    $region6: #{tpu_custom_call.1} parent=1 // pred_check
      _
    $region7: #{tpu_custom_call.1} parent=1 // pred_check_branch
      %35 = sbr.rel (0) target = $region9
    $region8: #{tpu_custom_call.1} parent=1 // pred_region
      %37 = vsyncadd [#allocation6], 0
      %s38 = sshll.u32 %s1, 4
      %s39 = int_to_ptr.hbm [resolvable:$true] %s38
      %s40 = sshll.u32 [#allocation5], 4
      %s41 = int_to_ptr.vmem [resolvable:$true] %s40
      %46 = dma.hbm_to_vmem [thread:$0]  %s39, 384, %s41, [#allocation6], 128, 128, 8
    $region9: #{tpu_custom_call.1} parent=1 // pred_fallthru
      _
    // Predicated region
    $region10: #{tpu_custom_call.1} parent=1 // pred_check
      _
    $region11: #{tpu_custom_call.1} parent=1 // pred_check_branch
      %48 = sbr.rel (0) target = $region13
    $region12: #{tpu_custom_call.1} parent=1 // pred_region
      %50 = vsyncadd [#allocation6], 0
      %s51 = sshll.u32 %s2, 4
      %s52 = int_to_ptr.hbm [resolvable:$true] %s51
      %s53 = sshll.u32 [#allocation7], 4
      %s54 = int_to_ptr.vmem [resolvable:$true] %s53
      %59 = dma.hbm_to_vmem [thread:$0]  %s52, 256, %s54, [#allocation6], 128, 128, 8
    $region13: #{tpu_custom_call.1} parent=1 // pred_fallthru
      _
    // Predicated region
    $region14: #{tpu_custom_call.1} parent=1 // pred_check
      _
    $region15: #{tpu_custom_call.1} parent=1 // pred_check_branch
      %61 = sbr.rel (0) target = $region17
    $region16: #{tpu_custom_call.1} parent=1 // pred_region
      %63 = vsyncadd [#allocation9], 0
      %s64 = sshll.u32 %s3, 4
      %s65 = int_to_ptr.hbm [resolvable:$true] %s64
      %s66 = sshll.u32 [#allocation8], 4
      %s67 = int_to_ptr.vmem [resolvable:$true] %s66
      %72 = dma.hbm_to_vmem [thread:$0]  %s65, 256, %s67, [#allocation9], 128, 128, 8
    $region17: #{tpu_custom_call.1} parent=1 // pred_fallthru
      _
    // Predicated region
    $region18: #{tpu_custom_call.1} parent=1 // pred_check
      _
    $region19: #{tpu_custom_call.1} parent=1 // pred_check_branch
      %74 = sbr.rel (0) target = $region21
    $region20: #{tpu_custom_call.1} parent=1 // pred_region
      _
    $region21: #{tpu_custom_call.1} parent=1 // pred_fallthru
      _
    // Predicated region
    $region22: #{tpu_custom_call.1} parent=1 // pred_check
      _
    $region23: #{tpu_custom_call.1} parent=1 // pred_check_branch
      %76 = sbr.rel (0) target = $region25
    $region24: #{tpu_custom_call.1} parent=1 // pred_region
      %78 = vsyncadd [#allocation9], 0
      %s79 = sshll.u32 %s5, 4
      %s80 = int_to_ptr.hbm [resolvable:$true] %s79
      %s81 = sshll.u32 [#allocation10], 4
      %s82 = int_to_ptr.vmem [resolvable:$true] %s81
      %87 = dma.hbm_to_vmem [thread:$0]  %s80, 512, %s82, [#allocation9], 64, 64, 4
    $region25: #{tpu_custom_call.1} parent=1 // pred_fallthru
      _
    // Predicated region
    $region26: #{tpu_custom_call.1} parent=1 // pred_check
      _
    $region27: #{tpu_custom_call.1} parent=1 // pred_check_branch
      %89 = sbr.rel (0) target = $region29
    $region28: #{tpu_custom_call.1} parent=1 // pred_region
      _
    $region29: #{tpu_custom_call.1} parent=1 // pred_fallthru
      _
    // Predicated region
    $region30: #{tpu_custom_call.1} parent=1 // pred_check
      _
    $region31: #{tpu_custom_call.1} parent=1 // pred_check_branch
      %91 = sbr.rel (0) target = $region33
    $region32: #{tpu_custom_call.1} parent=1 // pred_region
      %93 = vsyncadd [#allocation12], 0
      %s94 = sshll.u32 %s7, 4
      %s95 = int_to_ptr.hbm [resolvable:$true] %s94
      %s96 = sshll.u32 [#allocation11], 4
      %s97 = int_to_ptr.vmem [resolvable:$true] %s96
      %102 = dma.hbm_to_vmem [thread:$0]  %s95, 512, %s97, [#allocation12], 64, 64, 4
    $region33: #{tpu_custom_call.1} parent=1 // pred_fallthru
      _
    // Predicated region
    $region34: #{tpu_custom_call.1} parent=1 // pred_check
      _
    $region35: #{tpu_custom_call.1} parent=1 // pred_check_branch
      %104 = sbr.rel (0) target = $region37
    $region36: #{tpu_custom_call.1} parent=1 // pred_region
      _
    $region37: #{tpu_custom_call.1} parent=1 // pred_fallthru
      _
    // Predicated region
    $region38: #{tpu_custom_call.1} parent=1 // pred_check
      _
    $region39: #{tpu_custom_call.1} parent=1 // pred_check_branch
      %106 = sbr.rel (0) target = $region41
    $region40: #{tpu_custom_call.1} parent=1 // pred_region
      _
    $region41: #{tpu_custom_call.1} parent=1 // pred_fallthru
      _
    // Predicated region
    $region42: #{tpu_custom_call.1} parent=1 // pred_check
      _
    $region43: #{tpu_custom_call.1} parent=1 // pred_check_branch
      %108 = sbr.rel (0) target = $region45
    $region44: #{tpu_custom_call.1} parent=1 // pred_region
      _
    $region45: #{tpu_custom_call.1} parent=1 // pred_fallthru
      _
    // Predicated region
    $region46: #{tpu_custom_call.1} parent=1 // pred_check
      _
    $region47: #{tpu_custom_call.1} parent=1 // pred_check_branch
      %110 = sbr.rel (0) target = $region49
    $region48: #{tpu_custom_call.1} parent=1 // pred_region
      %112 = dma.done [#allocation3], 256
    $region49: #{tpu_custom_call.1} parent=1 // pred_fallthru
      _
    // Predicated region
    $region50: #{tpu_custom_call.1} parent=1 // pred_check
      _
    $region51: #{tpu_custom_call.1} parent=1 // pred_check_branch
      %114 = sbr.rel (0) target = $region53
    $region52: #{tpu_custom_call.1} parent=1 // pred_region
      %116 = dma.done [#allocation6], 384
    $region53: #{tpu_custom_call.1} parent=1 // pred_fallthru
      _
    // Predicated region
    $region54: #{tpu_custom_call.1} parent=1 // pred_check
      _
    $region55: #{tpu_custom_call.1} parent=1 // pred_check_branch
      %118 = sbr.rel (0) target = $region57
    $region56: #{tpu_custom_call.1} parent=1 // pred_region
      %120 = dma.done [#allocation6], 256
    $region57: #{tpu_custom_call.1} parent=1 // pred_fallthru
      _
    // Predicated region
    $region58: #{tpu_custom_call.1} parent=1 // pred_check
      _
    $region59: #{tpu_custom_call.1} parent=1 // pred_check_branch
      %122 = sbr.rel (0) target = $region61
    $region60: #{tpu_custom_call.1} parent=1 // pred_region
      %124 = dma.done [#allocation9], 256
    $region61: #{tpu_custom_call.1} parent=1 // pred_fallthru
      _
    // Predicated region
    $region62: #{tpu_custom_call.1} parent=1 // pred_check
      _
    $region63: #{tpu_custom_call.1} parent=1 // pred_check_branch
      %126 = sbr.rel (0) target = $region65
    $region64: #{tpu_custom_call.1} parent=1 // pred_region
      %128 = dma.done [#allocation9], 512
    $region65: #{tpu_custom_call.1} parent=1 // pred_fallthru
      _
    // Predicated region
    $region66: #{tpu_custom_call.1} parent=1 // pred_check
      _
    $region67: #{tpu_custom_call.1} parent=1 // pred_check_branch
      %130 = sbr.rel (0) target = $region69
    $region68: #{tpu_custom_call.1} parent=1 // pred_region
      %132 = dma.done [#allocation12], 512
    $region69: #{tpu_custom_call.1} parent=1 // pred_fallthru
      _
    %v134 = vld [vmem:[#allocation2] sm:$0xff]
    %v135 = vld [vmem:[#allocation2 + $0x8] sm:$0xff]
    %v136 = vld [vmem:[#allocation5] sm:$0xff]
    %v137 = vld [vmem:[#allocation5 + $0x8] sm:$0xff]
    %v138 = vld [vmem:[#allocation5 + $0x10] sm:$0xf]
    %v139 = vpack.c.bf16 %v137, %v136
    %v140 = vpack.c.bf16 %v138, %v138
    %v141 = vld [vmem:[#allocation7] sm:$0xff]
    %v142 = vld [vmem:[#allocation7 + $0x8] sm:$0xff]
    %v143 = vld [vmem:[#allocation8] sm:$0xff]
    %v144 = vld [vmem:[#allocation8 + $0x8] sm:$0xff]
    %v145 = vld [vmem:[%s9] sm:$0xff]
    %v146 = vld [vmem:[%s9 + $0x8] sm:$0x7f]
    %v147 = vld [vmem:[%s6] sm:$0xf]
    %v148 = vld [vmem:[%s6 + $0x4] sm:$0xf]
    %v149 = vld [vmem:[%s6 + $0x8] sm:$0xf]
    %v150 = vld [vmem:[%s6 + $0xc] sm:$0xf]
    %v151 = vld [vmem:[%s6 + $0x10] sm:$0xf]
    %v152 = vld [vmem:[%s6 + $0x14] sm:$0xf]
    %v153 = vld [vmem:[%s6 + $0x18] sm:$0xf]
    %v154 = vld [vmem:[%s6 + $0x1c] sm:$0xf]
    %v155 = vld [vmem:[%s6 + $0x20] sm:$0xf]
    %v156 = vld [vmem:[%s6 + $0x24] sm:$0xf]
    %v157 = vld [vmem:[%s6 + $0x28] sm:$0xf]
    %v158 = vld [vmem:[%s6 + $0x2c] sm:$0xf]
    %v159 = vpack.c.bf16 %v135, %v134
    %v160 = vld [vmem:[%s4] sm:$0xf]
    %v161 = vld [vmem:[%s4 + $0x4] sm:$0xf]
    %v162 = vld [vmem:[%s4 + $0x8] sm:$0xf]
    %v163 = vld [vmem:[%s4 + $0xc] sm:$0xf]
    %v168 = vunpack.c.l.b16 %v160
    %v169 = vunpack.c.l.b16 %v161
    %v170 = vunpack.c.l.b16 %v162
    %v171 = vunpack.c.l.b16 %v163
    %v172 = vpack.c.b16 %v169, %v168
    %v173 = vpack.c.b16 %v171, %v170
    %vm176 = vcmask 261120
    %v178 = vsel %vm176, %v159, 0
    %180 = vmatpush.bf16.msra.mxu0 0
    %181 = vmatpush.bf16.msra.mxu0 0
    %182 = vmatpush.bf16.msra.mxu0 0
    %183 = vmatpush.bf16.msra.mxu0 0
    %184 = vmatpush.bf16.msra.mxu0 0
    %185 = vmatpush.bf16.msra.mxu0 0
    %186 = vmatpush.bf16.msra.mxu0 %v173
    %187 = vmatpush.bf16.msra.mxu0 %v172
    %188 = vmatmul.bf16.gmra.mxu0 %v178
    %v189 = vpop.f32.mrf.mxu0
    %v190 = vadd.f32 0.0, %v189
    %v191 = vpop.f32.mrf.mxu0
    %v192 = vadd.f32 0.0, %v191
    %193 = vdwg.mxu0
    %v194 = vperm.slane %v145, 0
    %v195 = vadd.f32 %v190, %v194
    %v196 = vadd.f32 %v192, %v194
    %v197 = vmul.f32 %v195, 0.35355338
    %v198 = vmul.f32 %v196, 0.35355338
    %v199 = vperm.slane %v145, 1
    %201 = vrot.lane.b32.xlu0 %v199, 32
    %v202 = vpop.permute.xlu0 %201
    %v204 = vadd.f32 %v190, %v202
    %v205 = vadd.f32 %v192, %v202
    %v206 = vperm.slane %v145, 2
    %208 = vrot.lane.b32.xlu0 %v206, 64
    %v209 = vpop.permute.xlu0 %208
    %v211 = vadd.f32 %v190, %v209
    %v212 = vadd.f32 %v192, %v209
    %215 = vrot.lane.b32.xlu0 %v204, 96
    %v216 = vpop.permute.xlu0 %215
    %217 = vrot.lane.b32.xlu0 %v205, 96
    %v218 = vpop.permute.xlu0 %217
    %vm219 = vcmask 64512
    %v221 = vsel %vm219, %v197, 0
    %v224 = vsel %vm219, %v198, 0
    %v226 = vsel %vm219, %v216, 0
    %v228 = vsel %vm219, %v218, 0
    %230 = vmatpush.xpose.msra.mxu0 0.0
    %231 = vmatpush.xpose.msra.mxu0 0.0
    %232 = vmatpush.xpose.msra.mxu0 0.0
    %233 = vmatpush.xpose.msra.mxu0 0.0
    %234 = vmatpush.xpose.msra.mxu0 0.0
    %235 = vmatpush.xpose.msra.mxu0 0.0
    %236 = vmatpush.xpose.msra.mxu0 0.0
    %237 = vmatpush.xpose.msra.mxu0 0.0
    %238 = vmatpush.xpose.msra.mxu0 0.0
    %239 = vmatpush.xpose.msra.mxu0 0.0
    %240 = vmatpush.xpose.msra.mxu0 0.0
    %241 = vmatpush.xpose.msra.mxu0 0.0
    %242 = vmatpush.xpose.msra.mxu0 0.0
    %243 = vmatpush.xpose.msra.mxu0 0.0
    %244 = vmatpush.xpose.msra.mxu0 %v228
    %245 = vmatpush.xpose.msra.mxu0 %v226
    %246 = vmatmul.f32.gmra.mxu0 %v221
    %v247 = vpop.f32.mrf.mxu0
    %v248 = vadd.f32 %v141, %v247
    %249 = vmatmul.f32.gmra.mxu0 %v224
    %v250 = vpop.f32.mrf.mxu0
    %v251 = vadd.f32 %v142, %v250
    %252 = vdwg.mxu0
    %vm253 = vcmask 130048
    %v254 = vsel %vm253, %v248, -inf
    %255 = vmax.xlane.f32.xlu0 %v254
    %v256 = vpop.xlane.xlu0 %255
    %v257 = vsel %vm253, %v251, -inf
    %258 = vmax.xlane.f32.xlu0 %v257
    %v259 = vpop.xlane.xlu0 %258
    %v260 = vsub.f32 %v248, %v256
    %v261 = vsub.f32 %v251, %v259
    %v262 = vmul.f32 %v260, 1.442695
    %v263 = vpow.pop %v262
    %v264 = vmul.f32 %v261, 1.442695
    %v265 = vpow.pop %v264
    %v266 = vsel %vm253, %v263, 0.0
    %267 = vadd.xlane.f32.xlu0 %v266
    %v268 = vpop.xlane.xlu0 %267
    %v269 = vsel %vm253, %v265, 0.0
    %270 = vadd.xlane.f32.xlu0 %v269
    %v271 = vpop.xlane.xlu0 %270
    %v272 = vrcp.pop %v268
    %v273 = vrcp.pop %v271
    %v274 = vmul.f32 %v263, %v272
    %v275 = vmul.f32 %v265, %v273
    %278 = vrot.lane.b32.xlu0 %v211, 64
    %v279 = vpop.permute.xlu0 %278
    %280 = vrot.lane.b32.xlu0 %v212, 64
    %v281 = vpop.permute.xlu0 %280
    %v285 = vsel %vm253, %v274, 0
    %v288 = vsel %vm253, %v275, 0
    %290 = vmatpush.msra.mxu0 0.0
    %291 = vmatpush.msra.mxu0 0.0
    %292 = vmatpush.msra.mxu0 0.0
    %293 = vmatpush.msra.mxu0 0.0
    %294 = vmatpush.msra.mxu0 0.0
    %295 = vmatpush.msra.mxu0 0.0
    %296 = vmatpush.msra.mxu0 0.0
    %297 = vmatpush.msra.mxu0 0.0
    %298 = vmatpush.msra.mxu0 0.0
    %299 = vmatpush.msra.mxu0 0.0
    %300 = vmatpush.msra.mxu0 0.0
    %301 = vmatpush.msra.mxu0 0.0
    %302 = vmatpush.msra.mxu0 0.0
    %303 = vmatpush.msra.mxu0 0.0
    %304 = vmatpush.msra.mxu0 %v281
    %305 = vmatpush.msra.mxu0 %v279
    %306 = vmatmul.f32.gmra.mxu0 %v285
    %v307 = vpop.f32.mrf.mxu0
    %v308 = vadd.f32 0.0, %v307
    %309 = vmatmul.f32.gmra.mxu0 %v288
    %v310 = vpop.f32.mrf.mxu0
    %v311 = vadd.f32 0.0, %v310
    %312 = vdwg.mxu0
    %313 = vrot.lane.b32.xlu0 %v197, 120
    %v314 = vpop.permute.xlu0 %313
    %315 = vrot.lane.b32.xlu0 %v198, 120
    %v316 = vpop.permute.xlu0 %315
    %317 = vrot.lane.b32.xlu0 %v204, 88
    %v318 = vpop.permute.xlu0 %317
    %319 = vrot.lane.b32.xlu0 %v205, 88
    %v320 = vpop.permute.xlu0 %319
    %v321 = vsel %vm219, %v314, 0
    %v323 = vsel %vm219, %v316, 0
    %v325 = vsel %vm219, %v318, 0
    %v327 = vsel %vm219, %v320, 0
    %329 = vmatpush.xpose.msra.mxu0 0.0
    %330 = vmatpush.xpose.msra.mxu0 0.0
    %331 = vmatpush.xpose.msra.mxu0 0.0
    %332 = vmatpush.xpose.msra.mxu0 0.0
    %333 = vmatpush.xpose.msra.mxu0 0.0
    %334 = vmatpush.xpose.msra.mxu0 0.0
    %335 = vmatpush.xpose.msra.mxu0 0.0
    %336 = vmatpush.xpose.msra.mxu0 0.0
    %337 = vmatpush.xpose.msra.mxu0 0.0
    %338 = vmatpush.xpose.msra.mxu0 0.0
    %339 = vmatpush.xpose.msra.mxu0 0.0
    %340 = vmatpush.xpose.msra.mxu0 0.0
    %341 = vmatpush.xpose.msra.mxu0 0.0
    %342 = vmatpush.xpose.msra.mxu0 0.0
    %343 = vmatpush.xpose.msra.mxu0 %v327
    %344 = vmatpush.xpose.msra.mxu0 %v325
    %345 = vmatmul.f32.gmra.mxu0 %v321
    %v346 = vpop.f32.mrf.mxu0
    %v347 = vadd.f32 %v141, %v346
    %348 = vmatmul.f32.gmra.mxu0 %v323
    %v349 = vpop.f32.mrf.mxu0
    %v350 = vadd.f32 %v142, %v349
    %351 = vdwg.mxu0
    %v352 = vsel %vm253, %v347, -inf
    %353 = vmax.xlane.f32.xlu0 %v352
    %v354 = vpop.xlane.xlu0 %353
    %v355 = vsel %vm253, %v350, -inf
    %356 = vmax.xlane.f32.xlu0 %v355
    %v357 = vpop.xlane.xlu0 %356
    %v358 = vsub.f32 %v347, %v354
    %v359 = vsub.f32 %v350, %v357
    %v360 = vmul.f32 %v358, 1.442695
    %v361 = vpow.pop %v360
    %v362 = vmul.f32 %v359, 1.442695
    %v363 = vpow.pop %v362
    %v364 = vsel %vm253, %v361, 0.0
    %365 = vadd.xlane.f32.xlu0 %v364
    %v366 = vpop.xlane.xlu0 %365
    %v367 = vsel %vm253, %v363, 0.0
    %368 = vadd.xlane.f32.xlu0 %v367
    %v369 = vpop.xlane.xlu0 %368
    %v370 = vrcp.pop %v366
    %v371 = vrcp.pop %v369
    %v372 = vmul.f32 %v361, %v370
    %v373 = vmul.f32 %v363, %v371
    %374 = vrot.lane.b32.xlu0 %v211, 56
    %v375 = vpop.permute.xlu0 %374
    %376 = vrot.lane.b32.xlu0 %v212, 56
    %v377 = vpop.permute.xlu0 %376
    %v381 = vsel %vm253, %v372, 0
    %v384 = vsel %vm253, %v373, 0
    %386 = vmatpush.msra.mxu0 0.0
    %387 = vmatpush.msra.mxu0 0.0
    %388 = vmatpush.msra.mxu0 0.0
    %389 = vmatpush.msra.mxu0 0.0
    %390 = vmatpush.msra.mxu0 0.0
    %391 = vmatpush.msra.mxu0 0.0
    %392 = vmatpush.msra.mxu0 0.0
    %393 = vmatpush.msra.mxu0 0.0
    %394 = vmatpush.msra.mxu0 0.0
    %395 = vmatpush.msra.mxu0 0.0
    %396 = vmatpush.msra.mxu0 0.0
    %397 = vmatpush.msra.mxu0 0.0
    %398 = vmatpush.msra.mxu0 0.0
    %399 = vmatpush.msra.mxu0 0.0
    %400 = vmatpush.msra.mxu0 %v377
    %401 = vmatpush.msra.mxu0 %v375
    %402 = vmatmul.f32.gmra.mxu0 %v381
    %v403 = vpop.f32.mrf.mxu0
    %v404 = vadd.f32 0.0, %v403
    %405 = vmatmul.f32.gmra.mxu0 %v384
    %v406 = vpop.f32.mrf.mxu0
    %v407 = vadd.f32 0.0, %v406
    %408 = vdwg.mxu0
    %409 = vrot.lane.b32.xlu0 %v197, 112
    %v410 = vpop.permute.xlu0 %409
    %411 = vrot.lane.b32.xlu0 %v198, 112
    %v412 = vpop.permute.xlu0 %411
    %413 = vrot.lane.b32.xlu0 %v204, 80
    %v414 = vpop.permute.xlu0 %413
    %415 = vrot.lane.b32.xlu0 %v205, 80
    %v416 = vpop.permute.xlu0 %415
    %v417 = vsel %vm219, %v410, 0
    %v419 = vsel %vm219, %v412, 0
    %v421 = vsel %vm219, %v414, 0
    %v423 = vsel %vm219, %v416, 0
    %425 = vmatpush.xpose.msra.mxu0 0.0
    %426 = vmatpush.xpose.msra.mxu0 0.0
    %427 = vmatpush.xpose.msra.mxu0 0.0
    %428 = vmatpush.xpose.msra.mxu0 0.0
    %429 = vmatpush.xpose.msra.mxu0 0.0
    %430 = vmatpush.xpose.msra.mxu0 0.0
    %431 = vmatpush.xpose.msra.mxu0 0.0
    %432 = vmatpush.xpose.msra.mxu0 0.0
    %433 = vmatpush.xpose.msra.mxu0 0.0
    %434 = vmatpush.xpose.msra.mxu0 0.0
    %435 = vmatpush.xpose.msra.mxu0 0.0
    %436 = vmatpush.xpose.msra.mxu0 0.0
    %437 = vmatpush.xpose.msra.mxu0 0.0
    %438 = vmatpush.xpose.msra.mxu0 0.0
    %439 = vmatpush.xpose.msra.mxu0 %v423
    %440 = vmatpush.xpose.msra.mxu0 %v421
    %441 = vmatmul.f32.gmra.mxu0 %v417
    %v442 = vpop.f32.mrf.mxu0
    %v443 = vadd.f32 %v141, %v442
    %444 = vmatmul.f32.gmra.mxu0 %v419
    %v445 = vpop.f32.mrf.mxu0
    %v446 = vadd.f32 %v142, %v445
    %447 = vdwg.mxu0
    %v448 = vsel %vm253, %v443, -inf
    %449 = vmax.xlane.f32.xlu0 %v448
    %v450 = vpop.xlane.xlu0 %449
    %v451 = vsel %vm253, %v446, -inf
    %452 = vmax.xlane.f32.xlu0 %v451
    %v453 = vpop.xlane.xlu0 %452
    %v454 = vsub.f32 %v443, %v450
    %v455 = vsub.f32 %v446, %v453
    %v456 = vmul.f32 %v454, 1.442695
    %v457 = vpow.pop %v456
    %v458 = vmul.f32 %v455, 1.442695
    %v459 = vpow.pop %v458
    %v460 = vsel %vm253, %v457, 0.0
    %461 = vadd.xlane.f32.xlu0 %v460
    %v462 = vpop.xlane.xlu0 %461
    %v463 = vsel %vm253, %v459, 0.0
    %464 = vadd.xlane.f32.xlu0 %v463
    %v465 = vpop.xlane.xlu0 %464
    %v466 = vrcp.pop %v462
    %v467 = vrcp.pop %v465
    %v468 = vmul.f32 %v457, %v466
    %v469 = vmul.f32 %v459, %v467
    %470 = vrot.lane.b32.xlu0 %v211, 48
    %v471 = vpop.permute.xlu0 %470
    %472 = vrot.lane.b32.xlu0 %v212, 48
    %v473 = vpop.permute.xlu0 %472
    %v477 = vsel %vm253, %v468, 0
    %v480 = vsel %vm253, %v469, 0
    %482 = vmatpush.msra.mxu0 0.0
    %483 = vmatpush.msra.mxu0 0.0
    %484 = vmatpush.msra.mxu0 0.0
    %485 = vmatpush.msra.mxu0 0.0
    %486 = vmatpush.msra.mxu0 0.0
    %487 = vmatpush.msra.mxu0 0.0
    %488 = vmatpush.msra.mxu0 0.0
    %489 = vmatpush.msra.mxu0 0.0
    %490 = vmatpush.msra.mxu0 0.0
    %491 = vmatpush.msra.mxu0 0.0
    %492 = vmatpush.msra.mxu0 0.0
    %493 = vmatpush.msra.mxu0 0.0
    %494 = vmatpush.msra.mxu0 0.0
    %495 = vmatpush.msra.mxu0 0.0
    %496 = vmatpush.msra.mxu0 %v473
    %497 = vmatpush.msra.mxu0 %v471
    %498 = vmatmul.f32.gmra.mxu0 %v477
    %v499 = vpop.f32.mrf.mxu0
    %v500 = vadd.f32 0.0, %v499
    %501 = vmatmul.f32.gmra.mxu0 %v480
    %v502 = vpop.f32.mrf.mxu0
    %v503 = vadd.f32 0.0, %v502
    %504 = vdwg.mxu0
    %505 = vrot.lane.b32.xlu0 %v197, 104
    %v506 = vpop.permute.xlu0 %505
    %507 = vrot.lane.b32.xlu0 %v198, 104
    %v508 = vpop.permute.xlu0 %507
    %509 = vrot.lane.b32.xlu0 %v204, 72
    %v510 = vpop.permute.xlu0 %509
    %511 = vrot.lane.b32.xlu0 %v205, 72
    %v512 = vpop.permute.xlu0 %511
    %v513 = vsel %vm219, %v506, 0
    %v515 = vsel %vm219, %v508, 0
    %v517 = vsel %vm219, %v510, 0
    %v519 = vsel %vm219, %v512, 0
    %521 = vmatpush.xpose.msra.mxu0 0.0
    %522 = vmatpush.xpose.msra.mxu0 0.0
    %523 = vmatpush.xpose.msra.mxu0 0.0
    %524 = vmatpush.xpose.msra.mxu0 0.0
    %525 = vmatpush.xpose.msra.mxu0 0.0
    %526 = vmatpush.xpose.msra.mxu0 0.0
    %527 = vmatpush.xpose.msra.mxu0 0.0
    %528 = vmatpush.xpose.msra.mxu0 0.0
    %529 = vmatpush.xpose.msra.mxu0 0.0
    %530 = vmatpush.xpose.msra.mxu0 0.0
    %531 = vmatpush.xpose.msra.mxu0 0.0
    %532 = vmatpush.xpose.msra.mxu0 0.0
    %533 = vmatpush.xpose.msra.mxu0 0.0
    %534 = vmatpush.xpose.msra.mxu0 0.0
    %535 = vmatpush.xpose.msra.mxu0 %v519
    %536 = vmatpush.xpose.msra.mxu0 %v517
    %537 = vmatmul.f32.gmra.mxu0 %v513
    %v538 = vpop.f32.mrf.mxu0
    %v539 = vadd.f32 %v141, %v538
    %540 = vmatmul.f32.gmra.mxu0 %v515
    %v541 = vpop.f32.mrf.mxu0
    %v542 = vadd.f32 %v142, %v541
    %543 = vdwg.mxu0
    %v544 = vsel %vm253, %v539, -inf
    %545 = vmax.xlane.f32.xlu0 %v544
    %v546 = vpop.xlane.xlu0 %545
    %v547 = vsel %vm253, %v542, -inf
    %548 = vmax.xlane.f32.xlu0 %v547
    %v549 = vpop.xlane.xlu0 %548
    %v550 = vsub.f32 %v539, %v546
    %v551 = vsub.f32 %v542, %v549
    %v552 = vmul.f32 %v550, 1.442695
    %v553 = vpow.pop %v552
    %v554 = vmul.f32 %v551, 1.442695
    %v555 = vpow.pop %v554
    %v556 = vsel %vm253, %v553, 0.0
    %557 = vadd.xlane.f32.xlu0 %v556
    %v558 = vpop.xlane.xlu0 %557
    %v559 = vsel %vm253, %v555, 0.0
    %560 = vadd.xlane.f32.xlu0 %v559
    %v561 = vpop.xlane.xlu0 %560
    %v562 = vrcp.pop %v558
    %v563 = vrcp.pop %v561
    %v564 = vmul.f32 %v553, %v562
    %v565 = vmul.f32 %v555, %v563
    %566 = vrot.lane.b32.xlu0 %v211, 40
    %v567 = vpop.permute.xlu0 %566
    %568 = vrot.lane.b32.xlu0 %v212, 40
    %v569 = vpop.permute.xlu0 %568
    %v573 = vsel %vm253, %v564, 0
    %v576 = vsel %vm253, %v565, 0
    %578 = vmatpush.msra.mxu0 0.0
    %579 = vmatpush.msra.mxu0 0.0
    %580 = vmatpush.msra.mxu0 0.0
    %581 = vmatpush.msra.mxu0 0.0
    %582 = vmatpush.msra.mxu0 0.0
    %583 = vmatpush.msra.mxu0 0.0
    %584 = vmatpush.msra.mxu0 0.0
    %585 = vmatpush.msra.mxu0 0.0
    %586 = vmatpush.msra.mxu0 0.0
    %587 = vmatpush.msra.mxu0 0.0
    %588 = vmatpush.msra.mxu0 0.0
    %589 = vmatpush.msra.mxu0 0.0
    %590 = vmatpush.msra.mxu0 0.0
    %591 = vmatpush.msra.mxu0 0.0
    %592 = vmatpush.msra.mxu0 %v569
    %593 = vmatpush.msra.mxu0 %v567
    %594 = vmatmul.f32.gmra.mxu0 %v573
    %v595 = vpop.f32.mrf.mxu0
    %v596 = vadd.f32 0.0, %v595
    %597 = vmatmul.f32.gmra.mxu0 %v576
    %v598 = vpop.f32.mrf.mxu0
    %v599 = vadd.f32 0.0, %v598
    %600 = vdwg.mxu0
    %603 = vrot.lane.b32.xlu0 %v404, 8
    %v604 = vpop.permute.xlu0 %603
    %605 = vrot.lane.b32.xlu0 %v407, 8
    %v606 = vpop.permute.xlu0 %605
    %611 = vrot.lane.b32.xlu0 %v500, 16
    %v612 = vpop.permute.xlu0 %611
    %613 = vrot.lane.b32.xlu0 %v503, 16
    %v614 = vpop.permute.xlu0 %613
    %619 = vrot.lane.b32.xlu0 %v596, 24
    %v620 = vpop.permute.xlu0 %619
    %621 = vrot.lane.b32.xlu0 %v599, 24
    %v622 = vpop.permute.xlu0 %621
    %v625 = vsel %vm219, %v308, %v604
    %v626 = vsel %vm219, %v311, %v606
    %v627 = vsel %vm253, %v625, %v612
    %v628 = vsel %vm253, %v626, %v614
    %vm629 = vcmask 195584
    %v630 = vsel %vm629, %v627, %v620
    %v631 = vsel %vm629, %v628, %v622
    %v632 = vpack.c.bf16 %v631, %v630
    %v633 = vperm.slane %v145, 3
    %v638 = vunpack.c.l.b16 %v147
    %v639 = vunpack.c.l.b16 %v148
    %v640 = vunpack.c.l.b16 %v149
    %v641 = vunpack.c.l.b16 %v150
    %v642 = vpack.c.b16 %v639, %v638
    %v643 = vpack.c.b16 %v641, %v640
    %v647 = vsel %vm176, %v632, 0
    %649 = vmatpush.bf16.msra.mxu0 0
    %650 = vmatpush.bf16.msra.mxu0 0
    %651 = vmatpush.bf16.msra.mxu0 0
    %652 = vmatpush.bf16.msra.mxu0 0
    %653 = vmatpush.bf16.msra.mxu0 0
    %654 = vmatpush.bf16.msra.mxu0 0
    %655 = vmatpush.bf16.msra.mxu0 %v643
    %656 = vmatpush.bf16.msra.mxu0 %v642
    %657 = vmatmul.bf16.gmra.mxu0 %v647
    %v658 = vpop.f32.mrf.mxu0
    %v659 = vadd.f32 %v633, %v658
    %v660 = vpop.f32.mrf.mxu0
    %v661 = vadd.f32 %v633, %v660
    %662 = vdwg.mxu0
    %v663 = vadd.f32 %v134, %v659
    %v664 = vadd.f32 %v135, %v661
    %v665 = vsel %vm176, %v663, 0.0
    %666 = vadd.xlane.f32.xlu0 %v665
    %v667 = vpop.xlane.xlu0 %666
    %v668 = vsel %vm176, %v664, 0.0
    %669 = vadd.xlane.f32.xlu0 %v668
    %v670 = vpop.xlane.xlu0 %669
    %v671 = vrcp.pop 32.0
    %v672 = vmul.f32 32.0, %v671
    %v673 = vsub.f32 1.0, %v672
    %v674 = vmul.f32 %v671, %v673
    %v675 = vadd.f32 %v671, %v674
    %vm676 = vweird.f32 %v671
    %v677 = vsel %vm676, %v671, %v675
    %v678 = vmul.f32 %v667, %v677
    %v679 = vmul.f32 %v670, %v677
    %v680 = vsub.f32 %v663, %v678
    %v681 = vsub.f32 %v664, %v679
    %v682 = vmul.f32 %v680, %v680
    %v683 = vmul.f32 %v681, %v681
    %v684 = vsel %vm176, %v682, 0.0
    %685 = vadd.xlane.f32.xlu0 %v684
    %v686 = vpop.xlane.xlu0 %685
    %v687 = vsel %vm176, %v683, 0.0
    %688 = vadd.xlane.f32.xlu0 %v687
    %v689 = vpop.xlane.xlu0 %688
    %v690 = vmul.f32 %v686, %v677
    %v691 = vmul.f32 %v689, %v677
    %v692 = vadd.f32 %v690, 1e-05
    %v693 = vadd.f32 %v691, 1e-05
    %v694 = vrsqrt.pop %v692
    %v695 = vmul.f32 %v694, %v692
    %v696 = vmul.f32 %v695, %v694
    %v697 = vmul.f32 0.5, %v696
    %v698 = vsub.f32 1.5, %v697
    %v699 = vmul.f32 %v694, %v698
    %vm700 = vweird.f32 %v692
    %vm701 = vweird.f32 %v694
    %vm702 = vmor %vm700, %vm701
    %v703 = vsel %vm702, %v694, %v699
    %v704 = vrsqrt.pop %v693
    %v705 = vmul.f32 %v704, %v693
    %v706 = vmul.f32 %v705, %v704
    %v707 = vmul.f32 0.5, %v706
    %v708 = vsub.f32 1.5, %v707
    %v709 = vmul.f32 %v704, %v708
    %vm710 = vweird.f32 %v693
    %vm711 = vweird.f32 %v704
    %vm712 = vmor %vm710, %vm711
    %v713 = vsel %vm712, %v704, %v709
    %v714 = vmul.f32 %v680, %v703
    %v715 = vmul.f32 %v681, %v713
    %v716 = vperm.slane %v146, 1
    %v717 = vmul.f32 %v714, %v716
    %v718 = vmul.f32 %v715, %v716
    %v719 = vperm.slane %v146, 4
    %v720 = vadd.f32 %v717, %v719
    %v721 = vadd.f32 %v718, %v719
    %v722 = vpack.c.bf16 %v721, %v720
    %v723 = vperm.slane %v145, 4
    %v728 = vunpack.c.l.b16 %v151
    %v729 = vunpack.c.l.b16 %v152
    %v730 = vunpack.c.l.b16 %v153
    %v731 = vunpack.c.l.b16 %v154
    %v732 = vpack.c.b16 %v729, %v728
    %v733 = vpack.c.b16 %v731, %v730
    %v737 = vsel %vm176, %v722, 0
    %739 = vmatpush.bf16.msra.mxu0 0
    %740 = vmatpush.bf16.msra.mxu0 0
    %741 = vmatpush.bf16.msra.mxu0 0
    %742 = vmatpush.bf16.msra.mxu0 0
    %743 = vmatpush.bf16.msra.mxu0 0
    %744 = vmatpush.bf16.msra.mxu0 0
    %745 = vmatpush.bf16.msra.mxu0 %v733
    %746 = vmatpush.bf16.msra.mxu0 %v732
    %747 = vmatmul.bf16.gmra.mxu0 %v737
    %v748 = vpop.f32.mrf.mxu0
    %v749 = vadd.f32 %v723, %v748
    %v750 = vpop.f32.mrf.mxu0
    %v751 = vadd.f32 %v723, %v750
    %752 = vdwg.mxu0
    %v753 = vmul.f32 %v749, 0.35355338
    %v754 = vmul.f32 %v751, 0.35355338
    %v755 = vld [vmem:[#allocation10] sm:$0xf]
    %v756 = vld [vmem:[#allocation10 + $0x4] sm:$0xf]
    %v757 = vld [vmem:[#allocation10 + $0x8] sm:$0xf]
    %v758 = vld [vmem:[#allocation10 + $0xc] sm:$0xf]
    %v763 = vunpack.c.l.b16 %v755
    %v764 = vunpack.c.l.b16 %v756
    %v765 = vunpack.c.l.b16 %v757
    %v766 = vunpack.c.l.b16 %v758
    %v767 = vpack.c.b16 %v764, %v763
    %v768 = vpack.c.b16 %v766, %v765
    %v772 = vsel %vm176, %v139, 0
    %v775 = vsel %vm176, %v140, 0
    %777 = vmatpush.bf16.msra.mxu0 0
    %778 = vmatpush.bf16.msra.mxu0 0
    %779 = vmatpush.bf16.msra.mxu0 0
    %780 = vmatpush.bf16.msra.mxu0 0
    %781 = vmatpush.bf16.msra.mxu0 0
    %782 = vmatpush.bf16.msra.mxu0 0
    %783 = vmatpush.bf16.msra.mxu0 %v768
    %784 = vmatpush.bf16.msra.mxu0 %v767
    %785 = vmatmul.bf16.gmra.mxu0 %v772
    %v786 = vpop.f32.mrf.mxu0
    %v787 = vadd.f32 0.0, %v786
    %v788 = vpop.f32.mrf.mxu0
    %v789 = vadd.f32 0.0, %v788
    %790 = vmatmul.bf16.gmra.mxu0 %v775
    %v791 = vpop.f32.mrf.mxu0
    %v792 = vadd.f32 0.0, %v791
    %v793 = vpop.f32.mrf.mxu0
    %794 = vdwg.mxu0
    %v795 = vperm.slane %v145, 5
    %v796 = vadd.f32 %v787, %v795
    %v797 = vadd.f32 %v789, %v795
    %v798 = vadd.f32 %v792, %v795
    %v799 = vperm.slane %v145, 6
    %801 = vrot.lane.b32.xlu0 %v799, 32
    %v802 = vpop.permute.xlu0 %801
    %v804 = vadd.f32 %v787, %v802
    %v805 = vadd.f32 %v789, %v802
    %v806 = vadd.f32 %v792, %v802
    %v808 = vsel %vm219, %v753, 0
    %v811 = vsel %vm219, %v754, 0
    %v814 = vsel %vm219, %v796, 0
    %v817 = vsel %vm219, %v797, 0
    %v820 = vsel %vm219, %v798, 0
    %822 = vmatpush.xpose.msra.mxu0 0.0
    %823 = vmatpush.xpose.msra.mxu0 0.0
    %824 = vmatpush.xpose.msra.mxu0 0.0
    %825 = vmatpush.xpose.msra.mxu0 0.0
    %826 = vmatpush.xpose.msra.mxu0 0.0
    %827 = vmatpush.xpose.msra.mxu0 0.0
    %828 = vmatpush.xpose.msra.mxu0 0.0
    %829 = vmatpush.xpose.msra.mxu0 0.0
    %830 = vmatpush.xpose.msra.mxu0 0.0
    %831 = vmatpush.xpose.msra.mxu0 0.0
    %832 = vmatpush.xpose.msra.mxu0 0.0
    %833 = vmatpush.xpose.msra.mxu0 0.0
    %834 = vmatpush.xpose.msra.mxu0 0.0
    %835 = vmatpush.xpose.msra.mxu0 %v820
    %836 = vmatpush.xpose.msra.mxu0 %v817
    %837 = vmatpush.xpose.msra.mxu0 %v814
    %838 = vmatmul.f32.gmra.mxu0 %v808
    %v839 = vpop.f32.mrf.mxu0
    %v840 = vadd.f32 %v143, %v839
    %841 = vmatmul.f32.gmra.mxu0 %v811
    %v842 = vpop.f32.mrf.mxu0
    %v843 = vadd.f32 %v144, %v842
    %844 = vdwg.mxu0
    %vm845 = vcmask 162816
    %v846 = vsel %vm845, %v840, -inf
    %847 = vmax.xlane.f32.xlu0 %v846
    %v848 = vpop.xlane.xlu0 %847
    %v849 = vsel %vm845, %v843, -inf
    %850 = vmax.xlane.f32.xlu0 %v849
    %v851 = vpop.xlane.xlu0 %850
    %v852 = vsub.f32 %v840, %v848
    %v853 = vsub.f32 %v843, %v851
    %v854 = vmul.f32 %v852, 1.442695
    %v855 = vpow.pop %v854
    %v856 = vmul.f32 %v853, 1.442695
    %v857 = vpow.pop %v856
    %v858 = vsel %vm845, %v855, 0.0
    %859 = vadd.xlane.f32.xlu0 %v858
    %v860 = vpop.xlane.xlu0 %859
    %v861 = vsel %vm845, %v857, 0.0
    %862 = vadd.xlane.f32.xlu0 %v861
    %v863 = vpop.xlane.xlu0 %862
    %v864 = vrcp.pop %v860
    %v865 = vrcp.pop %v863
    %v866 = vmul.f32 %v855, %v864
    %v867 = vmul.f32 %v857, %v865
    %871 = vrot.lane.b32.xlu0 %v804, 96
    %v872 = vpop.permute.xlu0 %871
    %873 = vrot.lane.b32.xlu0 %v805, 96
    %v874 = vpop.permute.xlu0 %873
    %875 = vrot.lane.b32.xlu0 %v806, 96
    %v876 = vpop.permute.xlu0 %875
    %v880 = vsel %vm845, %v866, 0
    %v883 = vsel %vm845, %v867, 0
    %vm885 = vcmask 1043456
    %v886 = vsel %vm885, %v876, 0
    %888 = vmatpush.msra.mxu0 0.0
    %889 = vmatpush.msra.mxu0 0.0
    %890 = vmatpush.msra.mxu0 0.0
    %891 = vmatpush.msra.mxu0 0.0
    %892 = vmatpush.msra.mxu0 0.0
    %893 = vmatpush.msra.mxu0 0.0
    %894 = vmatpush.msra.mxu0 0.0
    %895 = vmatpush.msra.mxu0 0.0
    %896 = vmatpush.msra.mxu0 0.0
    %897 = vmatpush.msra.mxu0 0.0
    %898 = vmatpush.msra.mxu0 0.0
    %899 = vmatpush.msra.mxu0 0.0
    %900 = vmatpush.msra.mxu0 0.0
    %901 = vmatpush.msra.mxu0 %v886
    %902 = vmatpush.msra.mxu0 %v874
    %903 = vmatpush.msra.mxu0 %v872
    %904 = vmatmul.f32.gmra.mxu0 %v880
    %v905 = vpop.f32.mrf.mxu0
    %v906 = vadd.f32 0.0, %v905
    %907 = vmatmul.f32.gmra.mxu0 %v883
    %v908 = vpop.f32.mrf.mxu0
    %v909 = vadd.f32 0.0, %v908
    %910 = vdwg.mxu0
    %911 = vrot.lane.b32.xlu0 %v753, 120
    %v912 = vpop.permute.xlu0 %911
    %913 = vrot.lane.b32.xlu0 %v754, 120
    %v914 = vpop.permute.xlu0 %913
    %915 = vrot.lane.b32.xlu0 %v796, 120
    %v916 = vpop.permute.xlu0 %915
    %917 = vrot.lane.b32.xlu0 %v797, 120
    %v918 = vpop.permute.xlu0 %917
    %919 = vrot.lane.b32.xlu0 %v798, 120
    %v920 = vpop.permute.xlu0 %919
    %v921 = vsel %vm219, %v912, 0
    %v923 = vsel %vm219, %v914, 0
    %v925 = vsel %vm219, %v916, 0
    %v927 = vsel %vm219, %v918, 0
    %v929 = vsel %vm219, %v920, 0
    %931 = vmatpush.xpose.msra.mxu0 0.0
    %932 = vmatpush.xpose.msra.mxu0 0.0
    %933 = vmatpush.xpose.msra.mxu0 0.0
    %934 = vmatpush.xpose.msra.mxu0 0.0
    %935 = vmatpush.xpose.msra.mxu0 0.0
    %936 = vmatpush.xpose.msra.mxu0 0.0
    %937 = vmatpush.xpose.msra.mxu0 0.0
    %938 = vmatpush.xpose.msra.mxu0 0.0
    %939 = vmatpush.xpose.msra.mxu0 0.0
    %940 = vmatpush.xpose.msra.mxu0 0.0
    %941 = vmatpush.xpose.msra.mxu0 0.0
    %942 = vmatpush.xpose.msra.mxu0 0.0
    %943 = vmatpush.xpose.msra.mxu0 0.0
    %944 = vmatpush.xpose.msra.mxu0 %v929
    %945 = vmatpush.xpose.msra.mxu0 %v927
    %946 = vmatpush.xpose.msra.mxu0 %v925
    %947 = vmatmul.f32.gmra.mxu0 %v921
    %v948 = vpop.f32.mrf.mxu0
    %v949 = vadd.f32 %v143, %v948
    %950 = vmatmul.f32.gmra.mxu0 %v923
    %v951 = vpop.f32.mrf.mxu0
    %v952 = vadd.f32 %v144, %v951
    %953 = vdwg.mxu0
    %v954 = vsel %vm845, %v949, -inf
    %955 = vmax.xlane.f32.xlu0 %v954
    %v956 = vpop.xlane.xlu0 %955
    %v957 = vsel %vm845, %v952, -inf
    %958 = vmax.xlane.f32.xlu0 %v957
    %v959 = vpop.xlane.xlu0 %958
    %v960 = vsub.f32 %v949, %v956
    %v961 = vsub.f32 %v952, %v959
    %v962 = vmul.f32 %v960, 1.442695
    %v963 = vpow.pop %v962
    %v964 = vmul.f32 %v961, 1.442695
    %v965 = vpow.pop %v964
    %v966 = vsel %vm845, %v963, 0.0
    %967 = vadd.xlane.f32.xlu0 %v966
    %v968 = vpop.xlane.xlu0 %967
    %v969 = vsel %vm845, %v965, 0.0
    %970 = vadd.xlane.f32.xlu0 %v969
    %v971 = vpop.xlane.xlu0 %970
    %v972 = vrcp.pop %v968
    %v973 = vrcp.pop %v971
    %v974 = vmul.f32 %v963, %v972
    %v975 = vmul.f32 %v965, %v973
    %976 = vrot.lane.b32.xlu0 %v804, 88
    %v977 = vpop.permute.xlu0 %976
    %978 = vrot.lane.b32.xlu0 %v805, 88
    %v979 = vpop.permute.xlu0 %978
    %980 = vrot.lane.b32.xlu0 %v806, 88
    %v981 = vpop.permute.xlu0 %980
    %v985 = vsel %vm845, %v974, 0
    %v988 = vsel %vm845, %v975, 0
    %v990 = vsel %vm885, %v981, 0
    %992 = vmatpush.msra.mxu0 0.0
    %993 = vmatpush.msra.mxu0 0.0
    %994 = vmatpush.msra.mxu0 0.0
    %995 = vmatpush.msra.mxu0 0.0
    %996 = vmatpush.msra.mxu0 0.0
    %997 = vmatpush.msra.mxu0 0.0
    %998 = vmatpush.msra.mxu0 0.0
    %999 = vmatpush.msra.mxu0 0.0
    %1000 = vmatpush.msra.mxu0 0.0
    %1001 = vmatpush.msra.mxu0 0.0
    %1002 = vmatpush.msra.mxu0 0.0
    %1003 = vmatpush.msra.mxu0 0.0
    %1004 = vmatpush.msra.mxu0 0.0
    %1005 = vmatpush.msra.mxu0 %v990
    %1006 = vmatpush.msra.mxu0 %v979
    %1007 = vmatpush.msra.mxu0 %v977
    %1008 = vmatmul.f32.gmra.mxu0 %v985
    %v1009 = vpop.f32.mrf.mxu0
    %v1010 = vadd.f32 0.0, %v1009
    %1011 = vmatmul.f32.gmra.mxu0 %v988
    %v1012 = vpop.f32.mrf.mxu0
    %v1013 = vadd.f32 0.0, %v1012
    %1014 = vdwg.mxu0
    %1015 = vrot.lane.b32.xlu0 %v753, 112
    %v1016 = vpop.permute.xlu0 %1015
    %1017 = vrot.lane.b32.xlu0 %v754, 112
    %v1018 = vpop.permute.xlu0 %1017
    %1019 = vrot.lane.b32.xlu0 %v796, 112
    %v1020 = vpop.permute.xlu0 %1019
    %1021 = vrot.lane.b32.xlu0 %v797, 112
    %v1022 = vpop.permute.xlu0 %1021
    %1023 = vrot.lane.b32.xlu0 %v798, 112
    %v1024 = vpop.permute.xlu0 %1023
    %v1025 = vsel %vm219, %v1016, 0
    %v1027 = vsel %vm219, %v1018, 0
    %v1029 = vsel %vm219, %v1020, 0
    %v1031 = vsel %vm219, %v1022, 0
    %v1033 = vsel %vm219, %v1024, 0
    %1035 = vmatpush.xpose.msra.mxu0 0.0
    %1036 = vmatpush.xpose.msra.mxu0 0.0
    %1037 = vmatpush.xpose.msra.mxu0 0.0
    %1038 = vmatpush.xpose.msra.mxu0 0.0
    %1039 = vmatpush.xpose.msra.mxu0 0.0
    %1040 = vmatpush.xpose.msra.mxu0 0.0
    %1041 = vmatpush.xpose.msra.mxu0 0.0
    %1042 = vmatpush.xpose.msra.mxu0 0.0
    %1043 = vmatpush.xpose.msra.mxu0 0.0
    %1044 = vmatpush.xpose.msra.mxu0 0.0
    %1045 = vmatpush.xpose.msra.mxu0 0.0
    %1046 = vmatpush.xpose.msra.mxu0 0.0
    %1047 = vmatpush.xpose.msra.mxu0 0.0
    %1048 = vmatpush.xpose.msra.mxu0 %v1033
    %1049 = vmatpush.xpose.msra.mxu0 %v1031
    %1050 = vmatpush.xpose.msra.mxu0 %v1029
    %1051 = vmatmul.f32.gmra.mxu0 %v1025
    %v1052 = vpop.f32.mrf.mxu0
    %v1053 = vadd.f32 %v143, %v1052
    %1054 = vmatmul.f32.gmra.mxu0 %v1027
    %v1055 = vpop.f32.mrf.mxu0
    %v1056 = vadd.f32 %v144, %v1055
    %1057 = vdwg.mxu0
    %v1058 = vsel %vm845, %v1053, -inf
    %1059 = vmax.xlane.f32.xlu0 %v1058
    %v1060 = vpop.xlane.xlu0 %1059
    %v1061 = vsel %vm845, %v1056, -inf
    %1062 = vmax.xlane.f32.xlu0 %v1061
    %v1063 = vpop.xlane.xlu0 %1062
    %v1064 = vsub.f32 %v1053, %v1060
    %v1065 = vsub.f32 %v1056, %v1063
    %v1066 = vmul.f32 %v1064, 1.442695
    %v1067 = vpow.pop %v1066
    %v1068 = vmul.f32 %v1065, 1.442695
    %v1069 = vpow.pop %v1068
    %v1070 = vsel %vm845, %v1067, 0.0
    %1071 = vadd.xlane.f32.xlu0 %v1070
    %v1072 = vpop.xlane.xlu0 %1071
    %v1073 = vsel %vm845, %v1069, 0.0
    %1074 = vadd.xlane.f32.xlu0 %v1073
    %v1075 = vpop.xlane.xlu0 %1074
    %v1076 = vrcp.pop %v1072
    %v1077 = vrcp.pop %v1075
    %v1078 = vmul.f32 %v1067, %v1076
    %v1079 = vmul.f32 %v1069, %v1077
    %1080 = vrot.lane.b32.xlu0 %v804, 80
    %v1081 = vpop.permute.xlu0 %1080
    %1082 = vrot.lane.b32.xlu0 %v805, 80
    %v1083 = vpop.permute.xlu0 %1082
    %1084 = vrot.lane.b32.xlu0 %v806, 80
    %v1085 = vpop.permute.xlu0 %1084
    %v1089 = vsel %vm845, %v1078, 0
    %v1092 = vsel %vm845, %v1079, 0
    %v1094 = vsel %vm885, %v1085, 0
    %1096 = vmatpush.msra.mxu0 0.0
    %1097 = vmatpush.msra.mxu0 0.0
    %1098 = vmatpush.msra.mxu0 0.0
    %1099 = vmatpush.msra.mxu0 0.0
    %1100 = vmatpush.msra.mxu0 0.0
    %1101 = vmatpush.msra.mxu0 0.0
    %1102 = vmatpush.msra.mxu0 0.0
    %1103 = vmatpush.msra.mxu0 0.0
    %1104 = vmatpush.msra.mxu0 0.0
    %1105 = vmatpush.msra.mxu0 0.0
    %1106 = vmatpush.msra.mxu0 0.0
    %1107 = vmatpush.msra.mxu0 0.0
    %1108 = vmatpush.msra.mxu0 0.0
    %1109 = vmatpush.msra.mxu0 %v1094
    %1110 = vmatpush.msra.mxu0 %v1083
    %1111 = vmatpush.msra.mxu0 %v1081
    %1112 = vmatmul.f32.gmra.mxu0 %v1089
    %v1113 = vpop.f32.mrf.mxu0
    %v1114 = vadd.f32 0.0, %v1113
    %1115 = vmatmul.f32.gmra.mxu0 %v1092
    %v1116 = vpop.f32.mrf.mxu0
    %v1117 = vadd.f32 0.0, %v1116
    %1118 = vdwg.mxu0
    %1119 = vrot.lane.b32.xlu0 %v753, 104
    %v1120 = vpop.permute.xlu0 %1119
    %1121 = vrot.lane.b32.xlu0 %v754, 104
    %v1122 = vpop.permute.xlu0 %1121
    %1123 = vrot.lane.b32.xlu0 %v796, 104
    %v1124 = vpop.permute.xlu0 %1123
    %1125 = vrot.lane.b32.xlu0 %v797, 104
    %v1126 = vpop.permute.xlu0 %1125
    %1127 = vrot.lane.b32.xlu0 %v798, 104
    %v1128 = vpop.permute.xlu0 %1127
    %v1129 = vsel %vm219, %v1120, 0
    %v1131 = vsel %vm219, %v1122, 0
    %v1133 = vsel %vm219, %v1124, 0
    %v1135 = vsel %vm219, %v1126, 0
    %v1137 = vsel %vm219, %v1128, 0
    %1139 = vmatpush.xpose.msra.mxu0 0.0
    %1140 = vmatpush.xpose.msra.mxu0 0.0
    %1141 = vmatpush.xpose.msra.mxu0 0.0
    %1142 = vmatpush.xpose.msra.mxu0 0.0
    %1143 = vmatpush.xpose.msra.mxu0 0.0
    %1144 = vmatpush.xpose.msra.mxu0 0.0
    %1145 = vmatpush.xpose.msra.mxu0 0.0
    %1146 = vmatpush.xpose.msra.mxu0 0.0
    %1147 = vmatpush.xpose.msra.mxu0 0.0
    %1148 = vmatpush.xpose.msra.mxu0 0.0
    %1149 = vmatpush.xpose.msra.mxu0 0.0
    %1150 = vmatpush.xpose.msra.mxu0 0.0
    %1151 = vmatpush.xpose.msra.mxu0 0.0
    %1152 = vmatpush.xpose.msra.mxu0 %v1137
    %1153 = vmatpush.xpose.msra.mxu0 %v1135
    %1154 = vmatpush.xpose.msra.mxu0 %v1133
    %1155 = vmatmul.f32.gmra.mxu0 %v1129
    %v1156 = vpop.f32.mrf.mxu0
    %v1157 = vadd.f32 %v143, %v1156
    %1158 = vmatmul.f32.gmra.mxu0 %v1131
    %v1159 = vpop.f32.mrf.mxu0
    %v1160 = vadd.f32 %v144, %v1159
    %1161 = vdwg.mxu0
    %v1162 = vsel %vm845, %v1157, -inf
    %1163 = vmax.xlane.f32.xlu0 %v1162
    %v1164 = vpop.xlane.xlu0 %1163
    %v1165 = vsel %vm845, %v1160, -inf
    %1166 = vmax.xlane.f32.xlu0 %v1165
    %v1167 = vpop.xlane.xlu0 %1166
    %v1168 = vsub.f32 %v1157, %v1164
    %v1169 = vsub.f32 %v1160, %v1167
    %v1170 = vmul.f32 %v1168, 1.442695
    %v1171 = vpow.pop %v1170
    %v1172 = vmul.f32 %v1169, 1.442695
    %v1173 = vpow.pop %v1172
    %v1174 = vsel %vm845, %v1171, 0.0
    %1175 = vadd.xlane.f32.xlu0 %v1174
    %v1176 = vpop.xlane.xlu0 %1175
    %v1177 = vsel %vm845, %v1173, 0.0
    %1178 = vadd.xlane.f32.xlu0 %v1177
    %v1179 = vpop.xlane.xlu0 %1178
    %v1180 = vrcp.pop %v1176
    %v1181 = vrcp.pop %v1179
    %v1182 = vmul.f32 %v1171, %v1180
    %v1183 = vmul.f32 %v1173, %v1181
    %1184 = vrot.lane.b32.xlu0 %v804, 72
    %v1185 = vpop.permute.xlu0 %1184
    %1186 = vrot.lane.b32.xlu0 %v805, 72
    %v1187 = vpop.permute.xlu0 %1186
    %1188 = vrot.lane.b32.xlu0 %v806, 72
    %v1189 = vpop.permute.xlu0 %1188
    %v1193 = vsel %vm845, %v1182, 0
    %v1196 = vsel %vm845, %v1183, 0
    %v1198 = vsel %vm885, %v1189, 0
    %1200 = vmatpush.msra.mxu0 0.0
    %1201 = vmatpush.msra.mxu0 0.0
    %1202 = vmatpush.msra.mxu0 0.0
    %1203 = vmatpush.msra.mxu0 0.0
    %1204 = vmatpush.msra.mxu0 0.0
    %1205 = vmatpush.msra.mxu0 0.0
    %1206 = vmatpush.msra.mxu0 0.0
    %1207 = vmatpush.msra.mxu0 0.0
    %1208 = vmatpush.msra.mxu0 0.0
    %1209 = vmatpush.msra.mxu0 0.0
    %1210 = vmatpush.msra.mxu0 0.0
    %1211 = vmatpush.msra.mxu0 0.0
    %1212 = vmatpush.msra.mxu0 0.0
    %1213 = vmatpush.msra.mxu0 %v1198
    %1214 = vmatpush.msra.mxu0 %v1187
    %1215 = vmatpush.msra.mxu0 %v1185
    %1216 = vmatmul.f32.gmra.mxu0 %v1193
    %v1217 = vpop.f32.mrf.mxu0
    %v1218 = vadd.f32 0.0, %v1217
    %1219 = vmatmul.f32.gmra.mxu0 %v1196
    %v1220 = vpop.f32.mrf.mxu0
    %v1221 = vadd.f32 0.0, %v1220
    %1222 = vdwg.mxu0
    %1225 = vrot.lane.b32.xlu0 %v1010, 8
    %v1226 = vpop.permute.xlu0 %1225
    %1227 = vrot.lane.b32.xlu0 %v1013, 8
    %v1228 = vpop.permute.xlu0 %1227
    %1233 = vrot.lane.b32.xlu0 %v1114, 16
    %v1234 = vpop.permute.xlu0 %1233
    %1235 = vrot.lane.b32.xlu0 %v1117, 16
    %v1236 = vpop.permute.xlu0 %1235
    %1241 = vrot.lane.b32.xlu0 %v1218, 24
    %v1242 = vpop.permute.xlu0 %1241
    %1243 = vrot.lane.b32.xlu0 %v1221, 24
    %v1244 = vpop.permute.xlu0 %1243
    %v1247 = vsel %vm219, %v906, %v1226
    %v1248 = vsel %vm219, %v909, %v1228
    %v1249 = vsel %vm253, %v1247, %v1234
    %v1250 = vsel %vm253, %v1248, %v1236
    %v1251 = vsel %vm629, %v1249, %v1242
    %v1252 = vsel %vm629, %v1250, %v1244
    %v1253 = vpack.c.bf16 %v1252, %v1251
    %v1254 = vperm.slane %v145, 7
    %v1259 = vunpack.c.l.b16 %v155
    %v1260 = vunpack.c.l.b16 %v156
    %v1261 = vunpack.c.l.b16 %v157
    %v1262 = vunpack.c.l.b16 %v158
    %v1263 = vpack.c.b16 %v1260, %v1259
    %v1264 = vpack.c.b16 %v1262, %v1261
    %v1268 = vsel %vm176, %v1253, 0
    %1270 = vmatpush.bf16.msra.mxu0 0
    %1271 = vmatpush.bf16.msra.mxu0 0
    %1272 = vmatpush.bf16.msra.mxu0 0
    %1273 = vmatpush.bf16.msra.mxu0 0
    %1274 = vmatpush.bf16.msra.mxu0 0
    %1275 = vmatpush.bf16.msra.mxu0 0
    %1276 = vmatpush.bf16.msra.mxu0 %v1264
    %1277 = vmatpush.bf16.msra.mxu0 %v1263
    %1278 = vmatmul.bf16.gmra.mxu0 %v1268
    %v1279 = vpop.f32.mrf.mxu0
    %v1280 = vadd.f32 %v1254, %v1279
    %v1281 = vpop.f32.mrf.mxu0
    %v1282 = vadd.f32 %v1254, %v1281
    %1283 = vdwg.mxu0
    %v1284 = vadd.f32 %v720, %v1280
    %v1285 = vadd.f32 %v721, %v1282
    %v1286 = vsel %vm176, %v1284, 0.0
    %1287 = vadd.xlane.f32.xlu0 %v1286
    %v1288 = vpop.xlane.xlu0 %1287
    %v1289 = vsel %vm176, %v1285, 0.0
    %1290 = vadd.xlane.f32.xlu0 %v1289
    %v1291 = vpop.xlane.xlu0 %1290
    %v1292 = vmul.f32 %v1288, %v677
    %v1293 = vmul.f32 %v1291, %v677
    %v1294 = vsub.f32 %v1284, %v1292
    %v1295 = vsub.f32 %v1285, %v1293
    %v1296 = vmul.f32 %v1294, %v1294
    %v1297 = vmul.f32 %v1295, %v1295
    %v1298 = vsel %vm176, %v1296, 0.0
    %1299 = vadd.xlane.f32.xlu0 %v1298
    %v1300 = vpop.xlane.xlu0 %1299
    %v1301 = vsel %vm176, %v1297, 0.0
    %1302 = vadd.xlane.f32.xlu0 %v1301
    %v1303 = vpop.xlane.xlu0 %1302
    %v1304 = vmul.f32 %v1300, %v677
    %v1305 = vmul.f32 %v1303, %v677
    %v1306 = vadd.f32 %v1304, 1e-05
    %v1307 = vadd.f32 %v1305, 1e-05
    %v1308 = vrsqrt.pop %v1306
    %v1309 = vmul.f32 %v1308, %v1306
    %v1310 = vmul.f32 %v1309, %v1308
    %v1311 = vmul.f32 0.5, %v1310
    %v1312 = vsub.f32 1.5, %v1311
    %v1313 = vmul.f32 %v1308, %v1312
    %vm1314 = vweird.f32 %v1306
    %vm1315 = vweird.f32 %v1308
    %vm1316 = vmor %vm1314, %vm1315
    %v1317 = vsel %vm1316, %v1308, %v1313
    %v1318 = vrsqrt.pop %v1307
    %v1319 = vmul.f32 %v1318, %v1307
    %v1320 = vmul.f32 %v1319, %v1318
    %v1321 = vmul.f32 0.5, %v1320
    %v1322 = vsub.f32 1.5, %v1321
    %v1323 = vmul.f32 %v1318, %v1322
    %vm1324 = vweird.f32 %v1307
    %vm1325 = vweird.f32 %v1318
    %vm1326 = vmor %vm1324, %vm1325
    %v1327 = vsel %vm1326, %v1318, %v1323
    %v1328 = vmul.f32 %v1294, %v1317
    %v1329 = vmul.f32 %v1295, %v1327
    %v1330 = vperm.slane %v146, 2
    %v1331 = vmul.f32 %v1328, %v1330
    %v1332 = vmul.f32 %v1329, %v1330
    %v1333 = vperm.slane %v146, 5
    %v1334 = vadd.f32 %v1331, %v1333
    %v1335 = vadd.f32 %v1332, %v1333
    %v1336 = vpack.c.bf16 %v1335, %v1334
    %v1337 = vld [vmem:[#allocation11] sm:$0xf]
    %v1338 = vld [vmem:[#allocation11 + $0x4] sm:$0xf]
    %v1339 = vld [vmem:[#allocation11 + $0x8] sm:$0xf]
    %v1340 = vld [vmem:[#allocation11 + $0xc] sm:$0xf]
    %v1341 = vld [vmem:[%s10] sm:$0x1]
    %v1343 = vperm.slane %v1341, 0
    %v1349 = vunpack.c.l.b16 %v1337
    %v1350 = vunpack.c.l.b16 %v1338
    %v1351 = vunpack.c.l.b16 %v1339
    %v1352 = vunpack.c.l.b16 %v1340
    %v1353 = vpack.c.b16 %v1350, %v1349
    %v1354 = vpack.c.b16 %v1352, %v1351
    %v1358 = vsel %vm176, %v1336, 0
    %1360 = vmatpush.bf16.msra.mxu0 0
    %1361 = vmatpush.bf16.msra.mxu0 0
    %1362 = vmatpush.bf16.msra.mxu0 0
    %1363 = vmatpush.bf16.msra.mxu0 0
    %1364 = vmatpush.bf16.msra.mxu0 0
    %1365 = vmatpush.bf16.msra.mxu0 0
    %1366 = vmatpush.bf16.msra.mxu0 %v1354
    %1367 = vmatpush.bf16.msra.mxu0 %v1353
    %1368 = vmatmul.bf16.gmra.mxu0 %v1358
    %v1369 = vpop.f32.mrf.mxu0
    %v1370 = vadd.f32 %v1343, %v1369
    %v1371 = vpop.f32.mrf.mxu0
    %v1372 = vadd.f32 %v1343, %v1371
    %1373 = vdwg.mxu0
    %v1374 = vmax.f32 %v1370, 0.0
    %v1375 = vmax.f32 %v1372, 0.0
    %v1376 = vpack.c.bf16 %v1375, %v1374
    %v1377 = vld [vmem:[%s8] sm:$0xf]
    %v1378 = vld [vmem:[%s8 + $0x4] sm:$0xf]
    %v1379 = vld [vmem:[%s8 + $0x8] sm:$0xf]
    %v1380 = vld [vmem:[%s8 + $0xc] sm:$0xf]
    %v1381 = vld [vmem:[%s8 + $0x10] sm:$0xf]
    %v1382 = vld [vmem:[%s8 + $0x14] sm:$0xf]
    %v1383 = vld [vmem:[%s8 + $0x18] sm:$0xf]
    %v1384 = vld [vmem:[%s8 + $0x1c] sm:$0xf]
    %v1385 = vperm.slane %v146, 0
    %v1394 = vunpack.c.l.b16 %v1377
    %v1395 = vunpack.c.l.b16 %v1378
    %v1396 = vunpack.c.l.b16 %v1379
    %v1397 = vunpack.c.l.b16 %v1380
    %v1398 = vunpack.c.l.b16 %v1381
    %v1399 = vunpack.c.l.b16 %v1382
    %v1400 = vunpack.c.l.b16 %v1383
    %v1401 = vunpack.c.l.b16 %v1384
    %v1402 = vpack.c.b16 %v1395, %v1394
    %v1403 = vpack.c.b16 %v1397, %v1396
    %v1404 = vpack.c.b16 %v1399, %v1398
    %v1405 = vpack.c.b16 %v1401, %v1400
    %vm1410 = vcmask 523264
    %v1412 = vsel %vm1410, %v1376, 0
    %1414 = vmatpush.bf16.msra.mxu0 0
    %1415 = vmatpush.bf16.msra.mxu0 0
    %1416 = vmatpush.bf16.msra.mxu0 0
    %1417 = vmatpush.bf16.msra.mxu0 0
    %1418 = vmatpush.bf16.msra.mxu0 %v1405
    %1419 = vmatpush.bf16.msra.mxu0 %v1404
    %1420 = vmatpush.bf16.msra.mxu0 %v1403
    %1421 = vmatpush.bf16.msra.mxu0 %v1402
    %1422 = vmatmul.bf16.gmra.mxu0 %v1412
    %v1423 = vpop.f32.mrf.mxu0
    %v1424 = vadd.f32 %v1385, %v1423
    %v1425 = vpop.f32.mrf.mxu0
    %v1426 = vadd.f32 %v1385, %v1425
    %1427 = vdwg.mxu0
    %v1428 = vadd.f32 %v1334, %v1424
    %v1429 = vadd.f32 %v1335, %v1426
    %v1430 = vsel %vm176, %v1428, 0.0
    %1431 = vadd.xlane.f32.xlu0 %v1430
    %v1432 = vpop.xlane.xlu0 %1431
    %v1433 = vsel %vm176, %v1429, 0.0
    %1434 = vadd.xlane.f32.xlu0 %v1433
    %v1435 = vpop.xlane.xlu0 %1434
    %v1436 = vmul.f32 %v1432, %v677
    %v1437 = vmul.f32 %v1435, %v677
    %v1438 = vsub.f32 %v1428, %v1436
    %v1439 = vsub.f32 %v1429, %v1437
    %v1440 = vmul.f32 %v1438, %v1438
    %v1441 = vmul.f32 %v1439, %v1439
    %v1442 = vsel %vm176, %v1440, 0.0
    %1443 = vadd.xlane.f32.xlu0 %v1442
    %v1444 = vpop.xlane.xlu0 %1443
    %v1445 = vsel %vm176, %v1441, 0.0
    %1446 = vadd.xlane.f32.xlu0 %v1445
    %v1447 = vpop.xlane.xlu0 %1446
    %v1448 = vmul.f32 %v1444, %v677
    %v1449 = vmul.f32 %v1447, %v677
    %v1450 = vadd.f32 %v1448, 1e-05
    %v1451 = vadd.f32 %v1449, 1e-05
    %v1452 = vrsqrt.pop %v1450
    %v1453 = vmul.f32 %v1452, %v1450
    %v1454 = vmul.f32 %v1453, %v1452
    %v1455 = vmul.f32 0.5, %v1454
    %v1456 = vsub.f32 1.5, %v1455
    %v1457 = vmul.f32 %v1452, %v1456
    %vm1458 = vweird.f32 %v1450
    %vm1459 = vweird.f32 %v1452
    %vm1460 = vmor %vm1458, %vm1459
    %v1461 = vsel %vm1460, %v1452, %v1457
    %v1462 = vrsqrt.pop %v1451
    %v1463 = vmul.f32 %v1462, %v1451
    %v1464 = vmul.f32 %v1463, %v1462
    %v1465 = vmul.f32 0.5, %v1464
    %v1466 = vsub.f32 1.5, %v1465
    %v1467 = vmul.f32 %v1462, %v1466
    %vm1468 = vweird.f32 %v1451
    %vm1469 = vweird.f32 %v1462
    %vm1470 = vmor %vm1468, %vm1469
    %v1471 = vsel %vm1470, %v1462, %v1467
    %v1472 = vmul.f32 %v1438, %v1461
    %v1473 = vmul.f32 %v1439, %v1471
    %v1474 = vperm.slane %v146, 3
    %v1475 = vmul.f32 %v1472, %v1474
    %v1476 = vmul.f32 %v1473, %v1474
    %v1477 = vperm.slane %v146, 6
    %v1478 = vadd.f32 %v1475, %v1477
    %v1479 = vadd.f32 %v1476, %v1477
    %s1480 = scalar_lea.vmem %s9, 16
    %v1481 = vld [vmem:[%s1480] sm:$0xff]
    %v1482 = vld [vmem:[%s1480 + $0x8] sm:$0x7f]
    %s1483 = scalar_lea.vmem %s6, 48
    %v1484 = vld [vmem:[%s1483] sm:$0xf]
    %v1485 = vld [vmem:[%s1483 + $0x4] sm:$0xf]
    %v1486 = vld [vmem:[%s1483 + $0x8] sm:$0xf]
    %v1487 = vld [vmem:[%s1483 + $0xc] sm:$0xf]
    %v1488 = vld [vmem:[%s1483 + $0x10] sm:$0xf]
    %v1489 = vld [vmem:[%s1483 + $0x14] sm:$0xf]
    %v1490 = vld [vmem:[%s1483 + $0x18] sm:$0xf]
    %v1491 = vld [vmem:[%s1483 + $0x1c] sm:$0xf]
    %v1492 = vld [vmem:[%s1483 + $0x20] sm:$0xf]
    %v1493 = vld [vmem:[%s1483 + $0x24] sm:$0xf]
    %v1494 = vld [vmem:[%s1483 + $0x28] sm:$0xf]
    %v1495 = vld [vmem:[%s1483 + $0x2c] sm:$0xf]
    %v1496 = vpack.c.bf16 %v1479, %v1478
    %s1497 = scalar_lea.vmem %s4, 16
    %v1498 = vld [vmem:[%s1497] sm:$0xf]
    %v1499 = vld [vmem:[%s1497 + $0x4] sm:$0xf]
    %v1500 = vld [vmem:[%s1497 + $0x8] sm:$0xf]
    %v1501 = vld [vmem:[%s1497 + $0xc] sm:$0xf]
    %v1506 = vunpack.c.l.b16 %v1498
    %v1507 = vunpack.c.l.b16 %v1499
    %v1508 = vunpack.c.l.b16 %v1500
    %v1509 = vunpack.c.l.b16 %v1501
    %v1510 = vpack.c.b16 %v1507, %v1506
    %v1511 = vpack.c.b16 %v1509, %v1508
    %v1515 = vsel %vm176, %v1496, 0
    %1517 = vmatpush.bf16.msra.mxu0 0
    %1518 = vmatpush.bf16.msra.mxu0 0
    %1519 = vmatpush.bf16.msra.mxu0 0
    %1520 = vmatpush.bf16.msra.mxu0 0
    %1521 = vmatpush.bf16.msra.mxu0 0
    %1522 = vmatpush.bf16.msra.mxu0 0
    %1523 = vmatpush.bf16.msra.mxu0 %v1511
    %1524 = vmatpush.bf16.msra.mxu0 %v1510
    %1525 = vmatmul.bf16.gmra.mxu0 %v1515
    %v1526 = vpop.f32.mrf.mxu0
    %v1527 = vadd.f32 0.0, %v1526
    %v1528 = vpop.f32.mrf.mxu0
    %v1529 = vadd.f32 0.0, %v1528
    %1530 = vdwg.mxu0
    %v1531 = vperm.slane %v1481, 0
    %v1532 = vadd.f32 %v1527, %v1531
    %v1533 = vadd.f32 %v1529, %v1531
    %v1534 = vmul.f32 %v1532, 0.35355338
    %v1535 = vmul.f32 %v1533, 0.35355338
    %v1536 = vperm.slane %v1481, 1
    %1538 = vrot.lane.b32.xlu0 %v1536, 32
    %v1539 = vpop.permute.xlu0 %1538
    %v1541 = vadd.f32 %v1527, %v1539
    %v1542 = vadd.f32 %v1529, %v1539
    %v1543 = vperm.slane %v1481, 2
    %1545 = vrot.lane.b32.xlu0 %v1543, 64
    %v1546 = vpop.permute.xlu0 %1545
    %v1548 = vadd.f32 %v1527, %v1546
    %v1549 = vadd.f32 %v1529, %v1546
    %1552 = vrot.lane.b32.xlu0 %v1541, 96
    %v1553 = vpop.permute.xlu0 %1552
    %1554 = vrot.lane.b32.xlu0 %v1542, 96
    %v1555 = vpop.permute.xlu0 %1554
    %v1557 = vsel %vm219, %v1534, 0
    %v1560 = vsel %vm219, %v1535, 0
    %v1562 = vsel %vm219, %v1553, 0
    %v1564 = vsel %vm219, %v1555, 0
    %1566 = vmatpush.xpose.msra.mxu0 0.0
    %1567 = vmatpush.xpose.msra.mxu0 0.0
    %1568 = vmatpush.xpose.msra.mxu0 0.0
    %1569 = vmatpush.xpose.msra.mxu0 0.0
    %1570 = vmatpush.xpose.msra.mxu0 0.0
    %1571 = vmatpush.xpose.msra.mxu0 0.0
    %1572 = vmatpush.xpose.msra.mxu0 0.0
    %1573 = vmatpush.xpose.msra.mxu0 0.0
    %1574 = vmatpush.xpose.msra.mxu0 0.0
    %1575 = vmatpush.xpose.msra.mxu0 0.0
    %1576 = vmatpush.xpose.msra.mxu0 0.0
    %1577 = vmatpush.xpose.msra.mxu0 0.0
    %1578 = vmatpush.xpose.msra.mxu0 0.0
    %1579 = vmatpush.xpose.msra.mxu0 0.0
    %1580 = vmatpush.xpose.msra.mxu0 %v1564
    %1581 = vmatpush.xpose.msra.mxu0 %v1562
    %1582 = vmatmul.f32.gmra.mxu0 %v1557
    %v1583 = vpop.f32.mrf.mxu0
    %v1584 = vadd.f32 %v141, %v1583
    %1585 = vmatmul.f32.gmra.mxu0 %v1560
    %v1586 = vpop.f32.mrf.mxu0
    %v1587 = vadd.f32 %v142, %v1586
    %1588 = vdwg.mxu0
    %v1589 = vsel %vm253, %v1584, -inf
    %1590 = vmax.xlane.f32.xlu0 %v1589
    %v1591 = vpop.xlane.xlu0 %1590
    %v1592 = vsel %vm253, %v1587, -inf
    %1593 = vmax.xlane.f32.xlu0 %v1592
    %v1594 = vpop.xlane.xlu0 %1593
    %v1595 = vsub.f32 %v1584, %v1591
    %v1596 = vsub.f32 %v1587, %v1594
    %v1597 = vmul.f32 %v1595, 1.442695
    %v1598 = vpow.pop %v1597
    %v1599 = vmul.f32 %v1596, 1.442695
    %v1600 = vpow.pop %v1599
    %v1601 = vsel %vm253, %v1598, 0.0
    %1602 = vadd.xlane.f32.xlu0 %v1601
    %v1603 = vpop.xlane.xlu0 %1602
    %v1604 = vsel %vm253, %v1600, 0.0
    %1605 = vadd.xlane.f32.xlu0 %v1604
    %v1606 = vpop.xlane.xlu0 %1605
    %v1607 = vrcp.pop %v1603
    %v1608 = vrcp.pop %v1606
    %v1609 = vmul.f32 %v1598, %v1607
    %v1610 = vmul.f32 %v1600, %v1608
    %1613 = vrot.lane.b32.xlu0 %v1548, 64
    %v1614 = vpop.permute.xlu0 %1613
    %1615 = vrot.lane.b32.xlu0 %v1549, 64
    %v1616 = vpop.permute.xlu0 %1615
    %v1620 = vsel %vm253, %v1609, 0
    %v1623 = vsel %vm253, %v1610, 0
    %1625 = vmatpush.msra.mxu0 0.0
    %1626 = vmatpush.msra.mxu0 0.0
    %1627 = vmatpush.msra.mxu0 0.0
    %1628 = vmatpush.msra.mxu0 0.0
    %1629 = vmatpush.msra.mxu0 0.0
    %1630 = vmatpush.msra.mxu0 0.0
    %1631 = vmatpush.msra.mxu0 0.0
    %1632 = vmatpush.msra.mxu0 0.0
    %1633 = vmatpush.msra.mxu0 0.0
    %1634 = vmatpush.msra.mxu0 0.0
    %1635 = vmatpush.msra.mxu0 0.0
    %1636 = vmatpush.msra.mxu0 0.0
    %1637 = vmatpush.msra.mxu0 0.0
    %1638 = vmatpush.msra.mxu0 0.0
    %1639 = vmatpush.msra.mxu0 %v1616
    %1640 = vmatpush.msra.mxu0 %v1614
    %1641 = vmatmul.f32.gmra.mxu0 %v1620
    %v1642 = vpop.f32.mrf.mxu0
    %v1643 = vadd.f32 0.0, %v1642
    %1644 = vmatmul.f32.gmra.mxu0 %v1623
    %v1645 = vpop.f32.mrf.mxu0
    %v1646 = vadd.f32 0.0, %v1645
    %1647 = vdwg.mxu0
    %1648 = vrot.lane.b32.xlu0 %v1534, 120
    %v1649 = vpop.permute.xlu0 %1648
    %1650 = vrot.lane.b32.xlu0 %v1535, 120
    %v1651 = vpop.permute.xlu0 %1650
    %1652 = vrot.lane.b32.xlu0 %v1541, 88
    %v1653 = vpop.permute.xlu0 %1652
    %1654 = vrot.lane.b32.xlu0 %v1542, 88
    %v1655 = vpop.permute.xlu0 %1654
    %v1656 = vsel %vm219, %v1649, 0
    %v1658 = vsel %vm219, %v1651, 0
    %v1660 = vsel %vm219, %v1653, 0
    %v1662 = vsel %vm219, %v1655, 0
    %1664 = vmatpush.xpose.msra.mxu0 0.0
    %1665 = vmatpush.xpose.msra.mxu0 0.0
    %1666 = vmatpush.xpose.msra.mxu0 0.0
    %1667 = vmatpush.xpose.msra.mxu0 0.0
    %1668 = vmatpush.xpose.msra.mxu0 0.0
    %1669 = vmatpush.xpose.msra.mxu0 0.0
    %1670 = vmatpush.xpose.msra.mxu0 0.0
    %1671 = vmatpush.xpose.msra.mxu0 0.0
    %1672 = vmatpush.xpose.msra.mxu0 0.0
    %1673 = vmatpush.xpose.msra.mxu0 0.0
    %1674 = vmatpush.xpose.msra.mxu0 0.0
    %1675 = vmatpush.xpose.msra.mxu0 0.0
    %1676 = vmatpush.xpose.msra.mxu0 0.0
    %1677 = vmatpush.xpose.msra.mxu0 0.0
    %1678 = vmatpush.xpose.msra.mxu0 %v1662
    %1679 = vmatpush.xpose.msra.mxu0 %v1660
    %1680 = vmatmul.f32.gmra.mxu0 %v1656
    %v1681 = vpop.f32.mrf.mxu0
    %v1682 = vadd.f32 %v141, %v1681
    %1683 = vmatmul.f32.gmra.mxu0 %v1658
    %v1684 = vpop.f32.mrf.mxu0
    %v1685 = vadd.f32 %v142, %v1684
    %1686 = vdwg.mxu0
    %v1687 = vsel %vm253, %v1682, -inf
    %1688 = vmax.xlane.f32.xlu0 %v1687
    %v1689 = vpop.xlane.xlu0 %1688
    %v1690 = vsel %vm253, %v1685, -inf
    %1691 = vmax.xlane.f32.xlu0 %v1690
    %v1692 = vpop.xlane.xlu0 %1691
    %v1693 = vsub.f32 %v1682, %v1689
    %v1694 = vsub.f32 %v1685, %v1692
    %v1695 = vmul.f32 %v1693, 1.442695
    %v1696 = vpow.pop %v1695
    %v1697 = vmul.f32 %v1694, 1.442695
    %v1698 = vpow.pop %v1697
    %v1699 = vsel %vm253, %v1696, 0.0
    %1700 = vadd.xlane.f32.xlu0 %v1699
    %v1701 = vpop.xlane.xlu0 %1700
    %v1702 = vsel %vm253, %v1698, 0.0
    %1703 = vadd.xlane.f32.xlu0 %v1702
    %v1704 = vpop.xlane.xlu0 %1703
    %v1705 = vrcp.pop %v1701
    %v1706 = vrcp.pop %v1704
    %v1707 = vmul.f32 %v1696, %v1705
    %v1708 = vmul.f32 %v1698, %v1706
    %1709 = vrot.lane.b32.xlu0 %v1548, 56
    %v1710 = vpop.permute.xlu0 %1709
    %1711 = vrot.lane.b32.xlu0 %v1549, 56
    %v1712 = vpop.permute.xlu0 %1711
    %v1716 = vsel %vm253, %v1707, 0
    %v1719 = vsel %vm253, %v1708, 0
    %1721 = vmatpush.msra.mxu0 0.0
    %1722 = vmatpush.msra.mxu0 0.0
    %1723 = vmatpush.msra.mxu0 0.0
    %1724 = vmatpush.msra.mxu0 0.0
    %1725 = vmatpush.msra.mxu0 0.0
    %1726 = vmatpush.msra.mxu0 0.0
    %1727 = vmatpush.msra.mxu0 0.0
    %1728 = vmatpush.msra.mxu0 0.0
    %1729 = vmatpush.msra.mxu0 0.0
    %1730 = vmatpush.msra.mxu0 0.0
    %1731 = vmatpush.msra.mxu0 0.0
    %1732 = vmatpush.msra.mxu0 0.0
    %1733 = vmatpush.msra.mxu0 0.0
    %1734 = vmatpush.msra.mxu0 0.0
    %1735 = vmatpush.msra.mxu0 %v1712
    %1736 = vmatpush.msra.mxu0 %v1710
    %1737 = vmatmul.f32.gmra.mxu0 %v1716
    %v1738 = vpop.f32.mrf.mxu0
    %v1739 = vadd.f32 0.0, %v1738
    %1740 = vmatmul.f32.gmra.mxu0 %v1719
    %v1741 = vpop.f32.mrf.mxu0
    %v1742 = vadd.f32 0.0, %v1741
    %1743 = vdwg.mxu0
    %1744 = vrot.lane.b32.xlu0 %v1534, 112
    %v1745 = vpop.permute.xlu0 %1744
    %1746 = vrot.lane.b32.xlu0 %v1535, 112
    %v1747 = vpop.permute.xlu0 %1746
    %1748 = vrot.lane.b32.xlu0 %v1541, 80
    %v1749 = vpop.permute.xlu0 %1748
    %1750 = vrot.lane.b32.xlu0 %v1542, 80
    %v1751 = vpop.permute.xlu0 %1750
    %v1752 = vsel %vm219, %v1745, 0
    %v1754 = vsel %vm219, %v1747, 0
    %v1756 = vsel %vm219, %v1749, 0
    %v1758 = vsel %vm219, %v1751, 0
    %1760 = vmatpush.xpose.msra.mxu0 0.0
    %1761 = vmatpush.xpose.msra.mxu0 0.0
    %1762 = vmatpush.xpose.msra.mxu0 0.0
    %1763 = vmatpush.xpose.msra.mxu0 0.0
    %1764 = vmatpush.xpose.msra.mxu0 0.0
    %1765 = vmatpush.xpose.msra.mxu0 0.0
    %1766 = vmatpush.xpose.msra.mxu0 0.0
    %1767 = vmatpush.xpose.msra.mxu0 0.0
    %1768 = vmatpush.xpose.msra.mxu0 0.0
    %1769 = vmatpush.xpose.msra.mxu0 0.0
    %1770 = vmatpush.xpose.msra.mxu0 0.0
    %1771 = vmatpush.xpose.msra.mxu0 0.0
    %1772 = vmatpush.xpose.msra.mxu0 0.0
    %1773 = vmatpush.xpose.msra.mxu0 0.0
    %1774 = vmatpush.xpose.msra.mxu0 %v1758
    %1775 = vmatpush.xpose.msra.mxu0 %v1756
    %1776 = vmatmul.f32.gmra.mxu0 %v1752
    %v1777 = vpop.f32.mrf.mxu0
    %v1778 = vadd.f32 %v141, %v1777
    %1779 = vmatmul.f32.gmra.mxu0 %v1754
    %v1780 = vpop.f32.mrf.mxu0
    %v1781 = vadd.f32 %v142, %v1780
    %1782 = vdwg.mxu0
    %v1783 = vsel %vm253, %v1778, -inf
    %1784 = vmax.xlane.f32.xlu0 %v1783
    %v1785 = vpop.xlane.xlu0 %1784
    %v1786 = vsel %vm253, %v1781, -inf
    %1787 = vmax.xlane.f32.xlu0 %v1786
    %v1788 = vpop.xlane.xlu0 %1787
    %v1789 = vsub.f32 %v1778, %v1785
    %v1790 = vsub.f32 %v1781, %v1788
    %v1791 = vmul.f32 %v1789, 1.442695
    %v1792 = vpow.pop %v1791
    %v1793 = vmul.f32 %v1790, 1.442695
    %v1794 = vpow.pop %v1793
    %v1795 = vsel %vm253, %v1792, 0.0
    %1796 = vadd.xlane.f32.xlu0 %v1795
    %v1797 = vpop.xlane.xlu0 %1796
    %v1798 = vsel %vm253, %v1794, 0.0
    %1799 = vadd.xlane.f32.xlu0 %v1798
    %v1800 = vpop.xlane.xlu0 %1799
    %v1801 = vrcp.pop %v1797
    %v1802 = vrcp.pop %v1800
    %v1803 = vmul.f32 %v1792, %v1801
    %v1804 = vmul.f32 %v1794, %v1802
    %1805 = vrot.lane.b32.xlu0 %v1548, 48
    %v1806 = vpop.permute.xlu0 %1805
    %1807 = vrot.lane.b32.xlu0 %v1549, 48
    %v1808 = vpop.permute.xlu0 %1807
    %v1812 = vsel %vm253, %v1803, 0
    %v1815 = vsel %vm253, %v1804, 0
    %1817 = vmatpush.msra.mxu0 0.0
    %1818 = vmatpush.msra.mxu0 0.0
    %1819 = vmatpush.msra.mxu0 0.0
    %1820 = vmatpush.msra.mxu0 0.0
    %1821 = vmatpush.msra.mxu0 0.0
    %1822 = vmatpush.msra.mxu0 0.0
    %1823 = vmatpush.msra.mxu0 0.0
    %1824 = vmatpush.msra.mxu0 0.0
    %1825 = vmatpush.msra.mxu0 0.0
    %1826 = vmatpush.msra.mxu0 0.0
    %1827 = vmatpush.msra.mxu0 0.0
    %1828 = vmatpush.msra.mxu0 0.0
    %1829 = vmatpush.msra.mxu0 0.0
    %1830 = vmatpush.msra.mxu0 0.0
    %1831 = vmatpush.msra.mxu0 %v1808
    %1832 = vmatpush.msra.mxu0 %v1806
    %1833 = vmatmul.f32.gmra.mxu0 %v1812
    %v1834 = vpop.f32.mrf.mxu0
    %v1835 = vadd.f32 0.0, %v1834
    %1836 = vmatmul.f32.gmra.mxu0 %v1815
    %v1837 = vpop.f32.mrf.mxu0
    %v1838 = vadd.f32 0.0, %v1837
    %1839 = vdwg.mxu0
    %1840 = vrot.lane.b32.xlu0 %v1534, 104
    %v1841 = vpop.permute.xlu0 %1840
    %1842 = vrot.lane.b32.xlu0 %v1535, 104
    %v1843 = vpop.permute.xlu0 %1842
    %1844 = vrot.lane.b32.xlu0 %v1541, 72
    %v1845 = vpop.permute.xlu0 %1844
    %1846 = vrot.lane.b32.xlu0 %v1542, 72
    %v1847 = vpop.permute.xlu0 %1846
    %v1848 = vsel %vm219, %v1841, 0
    %v1850 = vsel %vm219, %v1843, 0
    %v1852 = vsel %vm219, %v1845, 0
    %v1854 = vsel %vm219, %v1847, 0
    %1856 = vmatpush.xpose.msra.mxu0 0.0
    %1857 = vmatpush.xpose.msra.mxu0 0.0
    %1858 = vmatpush.xpose.msra.mxu0 0.0
    %1859 = vmatpush.xpose.msra.mxu0 0.0
    %1860 = vmatpush.xpose.msra.mxu0 0.0
    %1861 = vmatpush.xpose.msra.mxu0 0.0
    %1862 = vmatpush.xpose.msra.mxu0 0.0
    %1863 = vmatpush.xpose.msra.mxu0 0.0
    %1864 = vmatpush.xpose.msra.mxu0 0.0
    %1865 = vmatpush.xpose.msra.mxu0 0.0
    %1866 = vmatpush.xpose.msra.mxu0 0.0
    %1867 = vmatpush.xpose.msra.mxu0 0.0
    %1868 = vmatpush.xpose.msra.mxu0 0.0
    %1869 = vmatpush.xpose.msra.mxu0 0.0
    %1870 = vmatpush.xpose.msra.mxu0 %v1854
    %1871 = vmatpush.xpose.msra.mxu0 %v1852
    %1872 = vmatmul.f32.gmra.mxu0 %v1848
    %v1873 = vpop.f32.mrf.mxu0
    %v1874 = vadd.f32 %v141, %v1873
    %1875 = vmatmul.f32.gmra.mxu0 %v1850
    %v1876 = vpop.f32.mrf.mxu0
    %v1877 = vadd.f32 %v142, %v1876
    %1878 = vdwg.mxu0
    %v1879 = vsel %vm253, %v1874, -inf
    %1880 = vmax.xlane.f32.xlu0 %v1879
    %v1881 = vpop.xlane.xlu0 %1880
    %v1882 = vsel %vm253, %v1877, -inf
    %1883 = vmax.xlane.f32.xlu0 %v1882
    %v1884 = vpop.xlane.xlu0 %1883
    %v1885 = vsub.f32 %v1874, %v1881
    %v1886 = vsub.f32 %v1877, %v1884
    %v1887 = vmul.f32 %v1885, 1.442695
    %v1888 = vpow.pop %v1887
    %v1889 = vmul.f32 %v1886, 1.442695
    %v1890 = vpow.pop %v1889
    %v1891 = vsel %vm253, %v1888, 0.0
    %1892 = vadd.xlane.f32.xlu0 %v1891
    %v1893 = vpop.xlane.xlu0 %1892
    %v1894 = vsel %vm253, %v1890, 0.0
    %1895 = vadd.xlane.f32.xlu0 %v1894
    %v1896 = vpop.xlane.xlu0 %1895
    %v1897 = vrcp.pop %v1893
    %v1898 = vrcp.pop %v1896
    %v1899 = vmul.f32 %v1888, %v1897
    %v1900 = vmul.f32 %v1890, %v1898
    %1901 = vrot.lane.b32.xlu0 %v1548, 40
    %v1902 = vpop.permute.xlu0 %1901
    %1903 = vrot.lane.b32.xlu0 %v1549, 40
    %v1904 = vpop.permute.xlu0 %1903
    %v1908 = vsel %vm253, %v1899, 0
    %v1911 = vsel %vm253, %v1900, 0
    %1913 = vmatpush.msra.mxu0 0.0
    %1914 = vmatpush.msra.mxu0 0.0
    %1915 = vmatpush.msra.mxu0 0.0
    %1916 = vmatpush.msra.mxu0 0.0
    %1917 = vmatpush.msra.mxu0 0.0
    %1918 = vmatpush.msra.mxu0 0.0
    %1919 = vmatpush.msra.mxu0 0.0
    %1920 = vmatpush.msra.mxu0 0.0
    %1921 = vmatpush.msra.mxu0 0.0
    %1922 = vmatpush.msra.mxu0 0.0
    %1923 = vmatpush.msra.mxu0 0.0
    %1924 = vmatpush.msra.mxu0 0.0
    %1925 = vmatpush.msra.mxu0 0.0
    %1926 = vmatpush.msra.mxu0 0.0
    %1927 = vmatpush.msra.mxu0 %v1904
    %1928 = vmatpush.msra.mxu0 %v1902
    %1929 = vmatmul.f32.gmra.mxu0 %v1908
    %v1930 = vpop.f32.mrf.mxu0
    %v1931 = vadd.f32 0.0, %v1930
    %1932 = vmatmul.f32.gmra.mxu0 %v1911
    %v1933 = vpop.f32.mrf.mxu0
    %v1934 = vadd.f32 0.0, %v1933
    %1935 = vdwg.mxu0
    %1938 = vrot.lane.b32.xlu0 %v1739, 8
    %v1939 = vpop.permute.xlu0 %1938
    %1940 = vrot.lane.b32.xlu0 %v1742, 8
    %v1941 = vpop.permute.xlu0 %1940
    %1946 = vrot.lane.b32.xlu0 %v1835, 16
    %v1947 = vpop.permute.xlu0 %1946
    %1948 = vrot.lane.b32.xlu0 %v1838, 16
    %v1949 = vpop.permute.xlu0 %1948
    %1954 = vrot.lane.b32.xlu0 %v1931, 24
    %v1955 = vpop.permute.xlu0 %1954
    %1956 = vrot.lane.b32.xlu0 %v1934, 24
    %v1957 = vpop.permute.xlu0 %1956
    %v1960 = vsel %vm219, %v1643, %v1939
    %v1961 = vsel %vm219, %v1646, %v1941
    %v1962 = vsel %vm253, %v1960, %v1947
    %v1963 = vsel %vm253, %v1961, %v1949
    %v1964 = vsel %vm629, %v1962, %v1955
    %v1965 = vsel %vm629, %v1963, %v1957
    %v1966 = vpack.c.bf16 %v1965, %v1964
    %v1967 = vperm.slane %v1481, 3
    %v1972 = vunpack.c.l.b16 %v1484
    %v1973 = vunpack.c.l.b16 %v1485
    %v1974 = vunpack.c.l.b16 %v1486
    %v1975 = vunpack.c.l.b16 %v1487
    %v1976 = vpack.c.b16 %v1973, %v1972
    %v1977 = vpack.c.b16 %v1975, %v1974
    %v1981 = vsel %vm176, %v1966, 0
    %1983 = vmatpush.bf16.msra.mxu0 0
    %1984 = vmatpush.bf16.msra.mxu0 0
    %1985 = vmatpush.bf16.msra.mxu0 0
    %1986 = vmatpush.bf16.msra.mxu0 0
    %1987 = vmatpush.bf16.msra.mxu0 0
    %1988 = vmatpush.bf16.msra.mxu0 0
    %1989 = vmatpush.bf16.msra.mxu0 %v1977
    %1990 = vmatpush.bf16.msra.mxu0 %v1976
    %1991 = vmatmul.bf16.gmra.mxu0 %v1981
    %v1992 = vpop.f32.mrf.mxu0
    %v1993 = vadd.f32 %v1967, %v1992
    %v1994 = vpop.f32.mrf.mxu0
    %v1995 = vadd.f32 %v1967, %v1994
    %1996 = vdwg.mxu0
    %v1997 = vadd.f32 %v1478, %v1993
    %v1998 = vadd.f32 %v1479, %v1995
    %v1999 = vsel %vm176, %v1997, 0.0
    %2000 = vadd.xlane.f32.xlu0 %v1999
    %v2001 = vpop.xlane.xlu0 %2000
    %v2002 = vsel %vm176, %v1998, 0.0
    %2003 = vadd.xlane.f32.xlu0 %v2002
    %v2004 = vpop.xlane.xlu0 %2003
    %v2005 = vmul.f32 %v2001, %v677
    %v2006 = vmul.f32 %v2004, %v677
    %v2007 = vsub.f32 %v1997, %v2005
    %v2008 = vsub.f32 %v1998, %v2006
    %v2009 = vmul.f32 %v2007, %v2007
    %v2010 = vmul.f32 %v2008, %v2008
    %v2011 = vsel %vm176, %v2009, 0.0
    %2012 = vadd.xlane.f32.xlu0 %v2011
    %v2013 = vpop.xlane.xlu0 %2012
    %v2014 = vsel %vm176, %v2010, 0.0
    %2015 = vadd.xlane.f32.xlu0 %v2014
    %v2016 = vpop.xlane.xlu0 %2015
    %v2017 = vmul.f32 %v2013, %v677
    %v2018 = vmul.f32 %v2016, %v677
    %v2019 = vadd.f32 %v2017, 1e-05
    %v2020 = vadd.f32 %v2018, 1e-05
    %v2021 = vrsqrt.pop %v2019
    %v2022 = vmul.f32 %v2021, %v2019
    %v2023 = vmul.f32 %v2022, %v2021
    %v2024 = vmul.f32 0.5, %v2023
    %v2025 = vsub.f32 1.5, %v2024
    %v2026 = vmul.f32 %v2021, %v2025
    %vm2027 = vweird.f32 %v2019
    %vm2028 = vweird.f32 %v2021
    %vm2029 = vmor %vm2027, %vm2028
    %v2030 = vsel %vm2029, %v2021, %v2026
    %v2031 = vrsqrt.pop %v2020
    %v2032 = vmul.f32 %v2031, %v2020
    %v2033 = vmul.f32 %v2032, %v2031
    %v2034 = vmul.f32 0.5, %v2033
    %v2035 = vsub.f32 1.5, %v2034
    %v2036 = vmul.f32 %v2031, %v2035
    %vm2037 = vweird.f32 %v2020
    %vm2038 = vweird.f32 %v2031
    %vm2039 = vmor %vm2037, %vm2038
    %v2040 = vsel %vm2039, %v2031, %v2036
    %v2041 = vmul.f32 %v2007, %v2030
    %v2042 = vmul.f32 %v2008, %v2040
    %v2043 = vperm.slane %v1482, 1
    %v2044 = vmul.f32 %v2041, %v2043
    %v2045 = vmul.f32 %v2042, %v2043
    %v2046 = vperm.slane %v1482, 4
    %v2047 = vadd.f32 %v2044, %v2046
    %v2048 = vadd.f32 %v2045, %v2046
    %v2049 = vpack.c.bf16 %v2048, %v2047
    %v2050 = vperm.slane %v1481, 4
    %v2055 = vunpack.c.l.b16 %v1488
    %v2056 = vunpack.c.l.b16 %v1489
    %v2057 = vunpack.c.l.b16 %v1490
    %v2058 = vunpack.c.l.b16 %v1491
    %v2059 = vpack.c.b16 %v2056, %v2055
    %v2060 = vpack.c.b16 %v2058, %v2057
    %v2064 = vsel %vm176, %v2049, 0
    %2066 = vmatpush.bf16.msra.mxu0 0
    %2067 = vmatpush.bf16.msra.mxu0 0
    %2068 = vmatpush.bf16.msra.mxu0 0
    %2069 = vmatpush.bf16.msra.mxu0 0
    %2070 = vmatpush.bf16.msra.mxu0 0
    %2071 = vmatpush.bf16.msra.mxu0 0
    %2072 = vmatpush.bf16.msra.mxu0 %v2060
    %2073 = vmatpush.bf16.msra.mxu0 %v2059
    %2074 = vmatmul.bf16.gmra.mxu0 %v2064
    %v2075 = vpop.f32.mrf.mxu0
    %v2076 = vadd.f32 %v2050, %v2075
    %v2077 = vpop.f32.mrf.mxu0
    %v2078 = vadd.f32 %v2050, %v2077
    %2079 = vdwg.mxu0
    %v2080 = vmul.f32 %v2076, 0.35355338
    %v2081 = vmul.f32 %v2078, 0.35355338
    %s2082 = scalar_lea.vmem [#allocation10], 16
    %v2083 = vld [vmem:[%s2082] sm:$0xf]
    %v2084 = vld [vmem:[%s2082 + $0x4] sm:$0xf]
    %v2085 = vld [vmem:[%s2082 + $0x8] sm:$0xf]
    %v2086 = vld [vmem:[%s2082 + $0xc] sm:$0xf]
    %v2091 = vunpack.c.l.b16 %v2083
    %v2092 = vunpack.c.l.b16 %v2084
    %v2093 = vunpack.c.l.b16 %v2085
    %v2094 = vunpack.c.l.b16 %v2086
    %v2095 = vpack.c.b16 %v2092, %v2091
    %v2096 = vpack.c.b16 %v2094, %v2093
    %2099 = vmatpush.bf16.msra.mxu0 0
    %2100 = vmatpush.bf16.msra.mxu0 0
    %2101 = vmatpush.bf16.msra.mxu0 0
    %2102 = vmatpush.bf16.msra.mxu0 0
    %2103 = vmatpush.bf16.msra.mxu0 0
    %2104 = vmatpush.bf16.msra.mxu0 0
    %2105 = vmatpush.bf16.msra.mxu0 %v2096
    %2106 = vmatpush.bf16.msra.mxu0 %v2095
    %2107 = vmatmul.bf16.gmra.mxu0 %v772
    %v2108 = vpop.f32.mrf.mxu0
    %v2109 = vadd.f32 0.0, %v2108
    %v2110 = vpop.f32.mrf.mxu0
    %v2111 = vadd.f32 0.0, %v2110
    %2112 = vmatmul.bf16.gmra.mxu0 %v775
    %v2113 = vpop.f32.mrf.mxu0
    %v2114 = vadd.f32 0.0, %v2113
    %v2115 = vpop.f32.mrf.mxu0
    %2116 = vdwg.mxu0
    %v2117 = vperm.slane %v1481, 5
    %v2118 = vadd.f32 %v2109, %v2117
    %v2119 = vadd.f32 %v2111, %v2117
    %v2120 = vadd.f32 %v2114, %v2117
    %v2121 = vperm.slane %v1481, 6
    %2123 = vrot.lane.b32.xlu0 %v2121, 32
    %v2124 = vpop.permute.xlu0 %2123
    %v2126 = vadd.f32 %v2109, %v2124
    %v2127 = vadd.f32 %v2111, %v2124
    %v2128 = vadd.f32 %v2114, %v2124
    %v2130 = vsel %vm219, %v2080, 0
    %v2133 = vsel %vm219, %v2081, 0
    %v2136 = vsel %vm219, %v2118, 0
    %v2139 = vsel %vm219, %v2119, 0
    %v2142 = vsel %vm219, %v2120, 0
    %2144 = vmatpush.xpose.msra.mxu0 0.0
    %2145 = vmatpush.xpose.msra.mxu0 0.0
    %2146 = vmatpush.xpose.msra.mxu0 0.0
    %2147 = vmatpush.xpose.msra.mxu0 0.0
    %2148 = vmatpush.xpose.msra.mxu0 0.0
    %2149 = vmatpush.xpose.msra.mxu0 0.0
    %2150 = vmatpush.xpose.msra.mxu0 0.0
    %2151 = vmatpush.xpose.msra.mxu0 0.0
    %2152 = vmatpush.xpose.msra.mxu0 0.0
    %2153 = vmatpush.xpose.msra.mxu0 0.0
    %2154 = vmatpush.xpose.msra.mxu0 0.0
    %2155 = vmatpush.xpose.msra.mxu0 0.0
    %2156 = vmatpush.xpose.msra.mxu0 0.0
    %2157 = vmatpush.xpose.msra.mxu0 %v2142
    %2158 = vmatpush.xpose.msra.mxu0 %v2139
    %2159 = vmatpush.xpose.msra.mxu0 %v2136
    %2160 = vmatmul.f32.gmra.mxu0 %v2130
    %v2161 = vpop.f32.mrf.mxu0
    %v2162 = vadd.f32 %v143, %v2161
    %2163 = vmatmul.f32.gmra.mxu0 %v2133
    %v2164 = vpop.f32.mrf.mxu0
    %v2165 = vadd.f32 %v144, %v2164
    %2166 = vdwg.mxu0
    %v2167 = vsel %vm845, %v2162, -inf
    %2168 = vmax.xlane.f32.xlu0 %v2167
    %v2169 = vpop.xlane.xlu0 %2168
    %v2170 = vsel %vm845, %v2165, -inf
    %2171 = vmax.xlane.f32.xlu0 %v2170
    %v2172 = vpop.xlane.xlu0 %2171
    %v2173 = vsub.f32 %v2162, %v2169
    %v2174 = vsub.f32 %v2165, %v2172
    %v2175 = vmul.f32 %v2173, 1.442695
    %v2176 = vpow.pop %v2175
    %v2177 = vmul.f32 %v2174, 1.442695
    %v2178 = vpow.pop %v2177
    %v2179 = vsel %vm845, %v2176, 0.0
    %2180 = vadd.xlane.f32.xlu0 %v2179
    %v2181 = vpop.xlane.xlu0 %2180
    %v2182 = vsel %vm845, %v2178, 0.0
    %2183 = vadd.xlane.f32.xlu0 %v2182
    %v2184 = vpop.xlane.xlu0 %2183
    %v2185 = vrcp.pop %v2181
    %v2186 = vrcp.pop %v2184
    %v2187 = vmul.f32 %v2176, %v2185
    %v2188 = vmul.f32 %v2178, %v2186
    %2192 = vrot.lane.b32.xlu0 %v2126, 96
    %v2193 = vpop.permute.xlu0 %2192
    %2194 = vrot.lane.b32.xlu0 %v2127, 96
    %v2195 = vpop.permute.xlu0 %2194
    %2196 = vrot.lane.b32.xlu0 %v2128, 96
    %v2197 = vpop.permute.xlu0 %2196
    %v2201 = vsel %vm845, %v2187, 0
    %v2204 = vsel %vm845, %v2188, 0
    %v2206 = vsel %vm885, %v2197, 0
    %2208 = vmatpush.msra.mxu0 0.0
    %2209 = vmatpush.msra.mxu0 0.0
    %2210 = vmatpush.msra.mxu0 0.0
    %2211 = vmatpush.msra.mxu0 0.0
    %2212 = vmatpush.msra.mxu0 0.0
    %2213 = vmatpush.msra.mxu0 0.0
    %2214 = vmatpush.msra.mxu0 0.0
    %2215 = vmatpush.msra.mxu0 0.0
    %2216 = vmatpush.msra.mxu0 0.0
    %2217 = vmatpush.msra.mxu0 0.0
    %2218 = vmatpush.msra.mxu0 0.0
    %2219 = vmatpush.msra.mxu0 0.0
    %2220 = vmatpush.msra.mxu0 0.0
    %2221 = vmatpush.msra.mxu0 %v2206
    %2222 = vmatpush.msra.mxu0 %v2195
    %2223 = vmatpush.msra.mxu0 %v2193
    %2224 = vmatmul.f32.gmra.mxu0 %v2201
    %v2225 = vpop.f32.mrf.mxu0
    %v2226 = vadd.f32 0.0, %v2225
    %2227 = vmatmul.f32.gmra.mxu0 %v2204
    %v2228 = vpop.f32.mrf.mxu0
    %v2229 = vadd.f32 0.0, %v2228
    %2230 = vdwg.mxu0
    %2231 = vrot.lane.b32.xlu0 %v2080, 120
    %v2232 = vpop.permute.xlu0 %2231
    %2233 = vrot.lane.b32.xlu0 %v2081, 120
    %v2234 = vpop.permute.xlu0 %2233
    %2235 = vrot.lane.b32.xlu0 %v2118, 120
    %v2236 = vpop.permute.xlu0 %2235
    %2237 = vrot.lane.b32.xlu0 %v2119, 120
    %v2238 = vpop.permute.xlu0 %2237
    %2239 = vrot.lane.b32.xlu0 %v2120, 120
    %v2240 = vpop.permute.xlu0 %2239
    %v2241 = vsel %vm219, %v2232, 0
    %v2243 = vsel %vm219, %v2234, 0
    %v2245 = vsel %vm219, %v2236, 0
    %v2247 = vsel %vm219, %v2238, 0
    %v2249 = vsel %vm219, %v2240, 0
    %2251 = vmatpush.xpose.msra.mxu0 0.0
    %2252 = vmatpush.xpose.msra.mxu0 0.0
    %2253 = vmatpush.xpose.msra.mxu0 0.0
    %2254 = vmatpush.xpose.msra.mxu0 0.0
    %2255 = vmatpush.xpose.msra.mxu0 0.0
    %2256 = vmatpush.xpose.msra.mxu0 0.0
    %2257 = vmatpush.xpose.msra.mxu0 0.0
    %2258 = vmatpush.xpose.msra.mxu0 0.0
    %2259 = vmatpush.xpose.msra.mxu0 0.0
    %2260 = vmatpush.xpose.msra.mxu0 0.0
    %2261 = vmatpush.xpose.msra.mxu0 0.0
    %2262 = vmatpush.xpose.msra.mxu0 0.0
    %2263 = vmatpush.xpose.msra.mxu0 0.0
    %2264 = vmatpush.xpose.msra.mxu0 %v2249
    %2265 = vmatpush.xpose.msra.mxu0 %v2247
    %2266 = vmatpush.xpose.msra.mxu0 %v2245
    %2267 = vmatmul.f32.gmra.mxu0 %v2241
    %v2268 = vpop.f32.mrf.mxu0
    %v2269 = vadd.f32 %v143, %v2268
    %2270 = vmatmul.f32.gmra.mxu0 %v2243
    %v2271 = vpop.f32.mrf.mxu0
    %v2272 = vadd.f32 %v144, %v2271
    %2273 = vdwg.mxu0
    %v2274 = vsel %vm845, %v2269, -inf
    %2275 = vmax.xlane.f32.xlu0 %v2274
    %v2276 = vpop.xlane.xlu0 %2275
    %v2277 = vsel %vm845, %v2272, -inf
    %2278 = vmax.xlane.f32.xlu0 %v2277
    %v2279 = vpop.xlane.xlu0 %2278
    %v2280 = vsub.f32 %v2269, %v2276
    %v2281 = vsub.f32 %v2272, %v2279
    %v2282 = vmul.f32 %v2280, 1.442695
    %v2283 = vpow.pop %v2282
    %v2284 = vmul.f32 %v2281, 1.442695
    %v2285 = vpow.pop %v2284
    %v2286 = vsel %vm845, %v2283, 0.0
    %2287 = vadd.xlane.f32.xlu0 %v2286
    %v2288 = vpop.xlane.xlu0 %2287
    %v2289 = vsel %vm845, %v2285, 0.0
    %2290 = vadd.xlane.f32.xlu0 %v2289
    %v2291 = vpop.xlane.xlu0 %2290
    %v2292 = vrcp.pop %v2288
    %v2293 = vrcp.pop %v2291
    %v2294 = vmul.f32 %v2283, %v2292
    %v2295 = vmul.f32 %v2285, %v2293
    %2296 = vrot.lane.b32.xlu0 %v2126, 88
    %v2297 = vpop.permute.xlu0 %2296
    %2298 = vrot.lane.b32.xlu0 %v2127, 88
    %v2299 = vpop.permute.xlu0 %2298
    %2300 = vrot.lane.b32.xlu0 %v2128, 88
    %v2301 = vpop.permute.xlu0 %2300
    %v2305 = vsel %vm845, %v2294, 0
    %v2308 = vsel %vm845, %v2295, 0
    %v2310 = vsel %vm885, %v2301, 0
    %2312 = vmatpush.msra.mxu0 0.0
    %2313 = vmatpush.msra.mxu0 0.0
    %2314 = vmatpush.msra.mxu0 0.0
    %2315 = vmatpush.msra.mxu0 0.0
    %2316 = vmatpush.msra.mxu0 0.0
    %2317 = vmatpush.msra.mxu0 0.0
    %2318 = vmatpush.msra.mxu0 0.0
    %2319 = vmatpush.msra.mxu0 0.0
    %2320 = vmatpush.msra.mxu0 0.0
    %2321 = vmatpush.msra.mxu0 0.0
    %2322 = vmatpush.msra.mxu0 0.0
    %2323 = vmatpush.msra.mxu0 0.0
    %2324 = vmatpush.msra.mxu0 0.0
    %2325 = vmatpush.msra.mxu0 %v2310
    %2326 = vmatpush.msra.mxu0 %v2299
    %2327 = vmatpush.msra.mxu0 %v2297
    %2328 = vmatmul.f32.gmra.mxu0 %v2305
    %v2329 = vpop.f32.mrf.mxu0
    %v2330 = vadd.f32 0.0, %v2329
    %2331 = vmatmul.f32.gmra.mxu0 %v2308
    %v2332 = vpop.f32.mrf.mxu0
    %v2333 = vadd.f32 0.0, %v2332
    %2334 = vdwg.mxu0
    %2335 = vrot.lane.b32.xlu0 %v2080, 112
    %v2336 = vpop.permute.xlu0 %2335
    %2337 = vrot.lane.b32.xlu0 %v2081, 112
    %v2338 = vpop.permute.xlu0 %2337
    %2339 = vrot.lane.b32.xlu0 %v2118, 112
    %v2340 = vpop.permute.xlu0 %2339
    %2341 = vrot.lane.b32.xlu0 %v2119, 112
    %v2342 = vpop.permute.xlu0 %2341
    %2343 = vrot.lane.b32.xlu0 %v2120, 112
    %v2344 = vpop.permute.xlu0 %2343
    %v2345 = vsel %vm219, %v2336, 0
    %v2347 = vsel %vm219, %v2338, 0
    %v2349 = vsel %vm219, %v2340, 0
    %v2351 = vsel %vm219, %v2342, 0
    %v2353 = vsel %vm219, %v2344, 0
    %2355 = vmatpush.xpose.msra.mxu0 0.0
    %2356 = vmatpush.xpose.msra.mxu0 0.0
    %2357 = vmatpush.xpose.msra.mxu0 0.0
    %2358 = vmatpush.xpose.msra.mxu0 0.0
    %2359 = vmatpush.xpose.msra.mxu0 0.0
    %2360 = vmatpush.xpose.msra.mxu0 0.0
    %2361 = vmatpush.xpose.msra.mxu0 0.0
    %2362 = vmatpush.xpose.msra.mxu0 0.0
    %2363 = vmatpush.xpose.msra.mxu0 0.0
    %2364 = vmatpush.xpose.msra.mxu0 0.0
    %2365 = vmatpush.xpose.msra.mxu0 0.0
    %2366 = vmatpush.xpose.msra.mxu0 0.0
    %2367 = vmatpush.xpose.msra.mxu0 0.0
    %2368 = vmatpush.xpose.msra.mxu0 %v2353
    %2369 = vmatpush.xpose.msra.mxu0 %v2351
    %2370 = vmatpush.xpose.msra.mxu0 %v2349
    %2371 = vmatmul.f32.gmra.mxu0 %v2345
    %v2372 = vpop.f32.mrf.mxu0
    %v2373 = vadd.f32 %v143, %v2372
    %2374 = vmatmul.f32.gmra.mxu0 %v2347
    %v2375 = vpop.f32.mrf.mxu0
    %v2376 = vadd.f32 %v144, %v2375
    %2377 = vdwg.mxu0
    %v2378 = vsel %vm845, %v2373, -inf
    %2379 = vmax.xlane.f32.xlu0 %v2378
    %v2380 = vpop.xlane.xlu0 %2379
    %v2381 = vsel %vm845, %v2376, -inf
    %2382 = vmax.xlane.f32.xlu0 %v2381
    %v2383 = vpop.xlane.xlu0 %2382
    %v2384 = vsub.f32 %v2373, %v2380
    %v2385 = vsub.f32 %v2376, %v2383
    %v2386 = vmul.f32 %v2384, 1.442695
    %v2387 = vpow.pop %v2386
    %v2388 = vmul.f32 %v2385, 1.442695
    %v2389 = vpow.pop %v2388
    %v2390 = vsel %vm845, %v2387, 0.0
    %2391 = vadd.xlane.f32.xlu0 %v2390
    %v2392 = vpop.xlane.xlu0 %2391
    %v2393 = vsel %vm845, %v2389, 0.0
    %2394 = vadd.xlane.f32.xlu0 %v2393
    %v2395 = vpop.xlane.xlu0 %2394
    %v2396 = vrcp.pop %v2392
    %v2397 = vrcp.pop %v2395
    %v2398 = vmul.f32 %v2387, %v2396
    %v2399 = vmul.f32 %v2389, %v2397
    %2400 = vrot.lane.b32.xlu0 %v2126, 80
    %v2401 = vpop.permute.xlu0 %2400
    %2402 = vrot.lane.b32.xlu0 %v2127, 80
    %v2403 = vpop.permute.xlu0 %2402
    %2404 = vrot.lane.b32.xlu0 %v2128, 80
    %v2405 = vpop.permute.xlu0 %2404
    %v2409 = vsel %vm845, %v2398, 0
    %v2412 = vsel %vm845, %v2399, 0
    %v2414 = vsel %vm885, %v2405, 0
    %2416 = vmatpush.msra.mxu0 0.0
    %2417 = vmatpush.msra.mxu0 0.0
    %2418 = vmatpush.msra.mxu0 0.0
    %2419 = vmatpush.msra.mxu0 0.0
    %2420 = vmatpush.msra.mxu0 0.0
    %2421 = vmatpush.msra.mxu0 0.0
    %2422 = vmatpush.msra.mxu0 0.0
    %2423 = vmatpush.msra.mxu0 0.0
    %2424 = vmatpush.msra.mxu0 0.0
    %2425 = vmatpush.msra.mxu0 0.0
    %2426 = vmatpush.msra.mxu0 0.0
    %2427 = vmatpush.msra.mxu0 0.0
    %2428 = vmatpush.msra.mxu0 0.0
    %2429 = vmatpush.msra.mxu0 %v2414
    %2430 = vmatpush.msra.mxu0 %v2403
    %2431 = vmatpush.msra.mxu0 %v2401
    %2432 = vmatmul.f32.gmra.mxu0 %v2409
    %v2433 = vpop.f32.mrf.mxu0
    %v2434 = vadd.f32 0.0, %v2433
    %2435 = vmatmul.f32.gmra.mxu0 %v2412
    %v2436 = vpop.f32.mrf.mxu0
    %v2437 = vadd.f32 0.0, %v2436
    %2438 = vdwg.mxu0
    %2439 = vrot.lane.b32.xlu0 %v2080, 104
    %v2440 = vpop.permute.xlu0 %2439
    %2441 = vrot.lane.b32.xlu0 %v2081, 104
    %v2442 = vpop.permute.xlu0 %2441
    %2443 = vrot.lane.b32.xlu0 %v2118, 104
    %v2444 = vpop.permute.xlu0 %2443
    %2445 = vrot.lane.b32.xlu0 %v2119, 104
    %v2446 = vpop.permute.xlu0 %2445
    %2447 = vrot.lane.b32.xlu0 %v2120, 104
    %v2448 = vpop.permute.xlu0 %2447
    %v2449 = vsel %vm219, %v2440, 0
    %v2451 = vsel %vm219, %v2442, 0
    %v2453 = vsel %vm219, %v2444, 0
    %v2455 = vsel %vm219, %v2446, 0
    %v2457 = vsel %vm219, %v2448, 0
    %2459 = vmatpush.xpose.msra.mxu0 0.0
    %2460 = vmatpush.xpose.msra.mxu0 0.0
    %2461 = vmatpush.xpose.msra.mxu0 0.0
    %2462 = vmatpush.xpose.msra.mxu0 0.0
    %2463 = vmatpush.xpose.msra.mxu0 0.0
    %2464 = vmatpush.xpose.msra.mxu0 0.0
    %2465 = vmatpush.xpose.msra.mxu0 0.0
    %2466 = vmatpush.xpose.msra.mxu0 0.0
    %2467 = vmatpush.xpose.msra.mxu0 0.0
    %2468 = vmatpush.xpose.msra.mxu0 0.0
    %2469 = vmatpush.xpose.msra.mxu0 0.0
    %2470 = vmatpush.xpose.msra.mxu0 0.0
    %2471 = vmatpush.xpose.msra.mxu0 0.0
    %2472 = vmatpush.xpose.msra.mxu0 %v2457
    %2473 = vmatpush.xpose.msra.mxu0 %v2455
    %2474 = vmatpush.xpose.msra.mxu0 %v2453
    %2475 = vmatmul.f32.gmra.mxu0 %v2449
    %v2476 = vpop.f32.mrf.mxu0
    %v2477 = vadd.f32 %v143, %v2476
    %2478 = vmatmul.f32.gmra.mxu0 %v2451
    %v2479 = vpop.f32.mrf.mxu0
    %v2480 = vadd.f32 %v144, %v2479
    %2481 = vdwg.mxu0
    %v2482 = vsel %vm845, %v2477, -inf
    %2483 = vmax.xlane.f32.xlu0 %v2482
    %v2484 = vpop.xlane.xlu0 %2483
    %v2485 = vsel %vm845, %v2480, -inf
    %2486 = vmax.xlane.f32.xlu0 %v2485
    %v2487 = vpop.xlane.xlu0 %2486
    %v2488 = vsub.f32 %v2477, %v2484
    %v2489 = vsub.f32 %v2480, %v2487
    %v2490 = vmul.f32 %v2488, 1.442695
    %v2491 = vpow.pop %v2490
    %v2492 = vmul.f32 %v2489, 1.442695
    %v2493 = vpow.pop %v2492
    %v2494 = vsel %vm845, %v2491, 0.0
    %2495 = vadd.xlane.f32.xlu0 %v2494
    %v2496 = vpop.xlane.xlu0 %2495
    %v2497 = vsel %vm845, %v2493, 0.0
    %2498 = vadd.xlane.f32.xlu0 %v2497
    %v2499 = vpop.xlane.xlu0 %2498
    %v2500 = vrcp.pop %v2496
    %v2501 = vrcp.pop %v2499
    %v2502 = vmul.f32 %v2491, %v2500
    %v2503 = vmul.f32 %v2493, %v2501
    %2504 = vrot.lane.b32.xlu0 %v2126, 72
    %v2505 = vpop.permute.xlu0 %2504
    %2506 = vrot.lane.b32.xlu0 %v2127, 72
    %v2507 = vpop.permute.xlu0 %2506
    %2508 = vrot.lane.b32.xlu0 %v2128, 72
    %v2509 = vpop.permute.xlu0 %2508
    %v2513 = vsel %vm845, %v2502, 0
    %v2516 = vsel %vm845, %v2503, 0
    %v2518 = vsel %vm885, %v2509, 0
    %2520 = vmatpush.msra.mxu0 0.0
    %2521 = vmatpush.msra.mxu0 0.0
    %2522 = vmatpush.msra.mxu0 0.0
    %2523 = vmatpush.msra.mxu0 0.0
    %2524 = vmatpush.msra.mxu0 0.0
    %2525 = vmatpush.msra.mxu0 0.0
    %2526 = vmatpush.msra.mxu0 0.0
    %2527 = vmatpush.msra.mxu0 0.0
    %2528 = vmatpush.msra.mxu0 0.0
    %2529 = vmatpush.msra.mxu0 0.0
    %2530 = vmatpush.msra.mxu0 0.0
    %2531 = vmatpush.msra.mxu0 0.0
    %2532 = vmatpush.msra.mxu0 0.0
    %2533 = vmatpush.msra.mxu0 %v2518
    %2534 = vmatpush.msra.mxu0 %v2507
    %2535 = vmatpush.msra.mxu0 %v2505
    %2536 = vmatmul.f32.gmra.mxu0 %v2513
    %v2537 = vpop.f32.mrf.mxu0
    %v2538 = vadd.f32 0.0, %v2537
    %2539 = vmatmul.f32.gmra.mxu0 %v2516
    %v2540 = vpop.f32.mrf.mxu0
    %v2541 = vadd.f32 0.0, %v2540
    %2542 = vdwg.mxu0
    %2545 = vrot.lane.b32.xlu0 %v2330, 8
    %v2546 = vpop.permute.xlu0 %2545
    %2547 = vrot.lane.b32.xlu0 %v2333, 8
    %v2548 = vpop.permute.xlu0 %2547
    %2553 = vrot.lane.b32.xlu0 %v2434, 16
    %v2554 = vpop.permute.xlu0 %2553
    %2555 = vrot.lane.b32.xlu0 %v2437, 16
    %v2556 = vpop.permute.xlu0 %2555
    %2561 = vrot.lane.b32.xlu0 %v2538, 24
    %v2562 = vpop.permute.xlu0 %2561
    %2563 = vrot.lane.b32.xlu0 %v2541, 24
    %v2564 = vpop.permute.xlu0 %2563
    %v2567 = vsel %vm219, %v2226, %v2546
    %v2568 = vsel %vm219, %v2229, %v2548
    %v2569 = vsel %vm253, %v2567, %v2554
    %v2570 = vsel %vm253, %v2568, %v2556
    %v2571 = vsel %vm629, %v2569, %v2562
    %v2572 = vsel %vm629, %v2570, %v2564
    %v2573 = vpack.c.bf16 %v2572, %v2571
    %v2574 = vperm.slane %v1481, 7
    %v2579 = vunpack.c.l.b16 %v1492
    %v2580 = vunpack.c.l.b16 %v1493
    %v2581 = vunpack.c.l.b16 %v1494
    %v2582 = vunpack.c.l.b16 %v1495
    %v2583 = vpack.c.b16 %v2580, %v2579
    %v2584 = vpack.c.b16 %v2582, %v2581
    %v2588 = vsel %vm176, %v2573, 0
    %2590 = vmatpush.bf16.msra.mxu0 0
    %2591 = vmatpush.bf16.msra.mxu0 0
    %2592 = vmatpush.bf16.msra.mxu0 0
    %2593 = vmatpush.bf16.msra.mxu0 0
    %2594 = vmatpush.bf16.msra.mxu0 0
    %2595 = vmatpush.bf16.msra.mxu0 0
    %2596 = vmatpush.bf16.msra.mxu0 %v2584
    %2597 = vmatpush.bf16.msra.mxu0 %v2583
    %2598 = vmatmul.bf16.gmra.mxu0 %v2588
    %v2599 = vpop.f32.mrf.mxu0
    %v2600 = vadd.f32 %v2574, %v2599
    %v2601 = vpop.f32.mrf.mxu0
    %v2602 = vadd.f32 %v2574, %v2601
    %2603 = vdwg.mxu0
    %v2604 = vadd.f32 %v2047, %v2600
    %v2605 = vadd.f32 %v2048, %v2602
    %v2606 = vsel %vm176, %v2604, 0.0
    %2607 = vadd.xlane.f32.xlu0 %v2606
    %v2608 = vpop.xlane.xlu0 %2607
    %v2609 = vsel %vm176, %v2605, 0.0
    %2610 = vadd.xlane.f32.xlu0 %v2609
    %v2611 = vpop.xlane.xlu0 %2610
    %v2612 = vmul.f32 %v2608, %v677
    %v2613 = vmul.f32 %v2611, %v677
    %v2614 = vsub.f32 %v2604, %v2612
    %v2615 = vsub.f32 %v2605, %v2613
    %v2616 = vmul.f32 %v2614, %v2614
    %v2617 = vmul.f32 %v2615, %v2615
    %v2618 = vsel %vm176, %v2616, 0.0
    %2619 = vadd.xlane.f32.xlu0 %v2618
    %v2620 = vpop.xlane.xlu0 %2619
    %v2621 = vsel %vm176, %v2617, 0.0
    %2622 = vadd.xlane.f32.xlu0 %v2621
    %v2623 = vpop.xlane.xlu0 %2622
    %v2624 = vmul.f32 %v2620, %v677
    %v2625 = vmul.f32 %v2623, %v677
    %v2626 = vadd.f32 %v2624, 1e-05
    %v2627 = vadd.f32 %v2625, 1e-05
    %v2628 = vrsqrt.pop %v2626
    %v2629 = vmul.f32 %v2628, %v2626
    %v2630 = vmul.f32 %v2629, %v2628
    %v2631 = vmul.f32 0.5, %v2630
    %v2632 = vsub.f32 1.5, %v2631
    %v2633 = vmul.f32 %v2628, %v2632
    %vm2634 = vweird.f32 %v2626
    %vm2635 = vweird.f32 %v2628
    %vm2636 = vmor %vm2634, %vm2635
    %v2637 = vsel %vm2636, %v2628, %v2633
    %v2638 = vrsqrt.pop %v2627
    %v2639 = vmul.f32 %v2638, %v2627
    %v2640 = vmul.f32 %v2639, %v2638
    %v2641 = vmul.f32 0.5, %v2640
    %v2642 = vsub.f32 1.5, %v2641
    %v2643 = vmul.f32 %v2638, %v2642
    %vm2644 = vweird.f32 %v2627
    %vm2645 = vweird.f32 %v2638
    %vm2646 = vmor %vm2644, %vm2645
    %v2647 = vsel %vm2646, %v2638, %v2643
    %v2648 = vmul.f32 %v2614, %v2637
    %v2649 = vmul.f32 %v2615, %v2647
    %v2650 = vperm.slane %v1482, 2
    %v2651 = vmul.f32 %v2648, %v2650
    %v2652 = vmul.f32 %v2649, %v2650
    %v2653 = vperm.slane %v1482, 5
    %v2654 = vadd.f32 %v2651, %v2653
    %v2655 = vadd.f32 %v2652, %v2653
    %v2656 = vpack.c.bf16 %v2655, %v2654
    %s2657 = scalar_lea.vmem [#allocation11], 16
    %v2658 = vld [vmem:[%s2657] sm:$0xf]
    %v2659 = vld [vmem:[%s2657 + $0x4] sm:$0xf]
    %v2660 = vld [vmem:[%s2657 + $0x8] sm:$0xf]
    %v2661 = vld [vmem:[%s2657 + $0xc] sm:$0xf]
    %s2662 = scalar_lea.vmem %s10, 1
    %v2663 = vld [vmem:[%s2662] sm:$0x1]
    %v2665 = vperm.slane %v2663, 0
    %v2671 = vunpack.c.l.b16 %v2658
    %v2672 = vunpack.c.l.b16 %v2659
    %v2673 = vunpack.c.l.b16 %v2660
    %v2674 = vunpack.c.l.b16 %v2661
    %v2675 = vpack.c.b16 %v2672, %v2671
    %v2676 = vpack.c.b16 %v2674, %v2673
    %v2680 = vsel %vm176, %v2656, 0
    %2682 = vmatpush.bf16.msra.mxu0 0
    %2683 = vmatpush.bf16.msra.mxu0 0
    %2684 = vmatpush.bf16.msra.mxu0 0
    %2685 = vmatpush.bf16.msra.mxu0 0
    %2686 = vmatpush.bf16.msra.mxu0 0
    %2687 = vmatpush.bf16.msra.mxu0 0
    %2688 = vmatpush.bf16.msra.mxu0 %v2676
    %2689 = vmatpush.bf16.msra.mxu0 %v2675
    %2690 = vmatmul.bf16.gmra.mxu0 %v2680
    %v2691 = vpop.f32.mrf.mxu0
    %v2692 = vadd.f32 %v2665, %v2691
    %v2693 = vpop.f32.mrf.mxu0
    %v2694 = vadd.f32 %v2665, %v2693
    %2695 = vdwg.mxu0
    %v2696 = vmax.f32 %v2692, 0.0
    %v2697 = vmax.f32 %v2694, 0.0
    %v2698 = vpack.c.bf16 %v2697, %v2696
    %s2699 = scalar_lea.vmem %s8, 32
    %v2700 = vld [vmem:[%s2699] sm:$0xf]
    %v2701 = vld [vmem:[%s2699 + $0x4] sm:$0xf]
    %v2702 = vld [vmem:[%s2699 + $0x8] sm:$0xf]
    %v2703 = vld [vmem:[%s2699 + $0xc] sm:$0xf]
    %v2704 = vld [vmem:[%s2699 + $0x10] sm:$0xf]
    %v2705 = vld [vmem:[%s2699 + $0x14] sm:$0xf]
    %v2706 = vld [vmem:[%s2699 + $0x18] sm:$0xf]
    %v2707 = vld [vmem:[%s2699 + $0x1c] sm:$0xf]
    %v2708 = vperm.slane %v1482, 0
    %v2717 = vunpack.c.l.b16 %v2700
    %v2718 = vunpack.c.l.b16 %v2701
    %v2719 = vunpack.c.l.b16 %v2702
    %v2720 = vunpack.c.l.b16 %v2703
    %v2721 = vunpack.c.l.b16 %v2704
    %v2722 = vunpack.c.l.b16 %v2705
    %v2723 = vunpack.c.l.b16 %v2706
    %v2724 = vunpack.c.l.b16 %v2707
    %v2725 = vpack.c.b16 %v2718, %v2717
    %v2726 = vpack.c.b16 %v2720, %v2719
    %v2727 = vpack.c.b16 %v2722, %v2721
    %v2728 = vpack.c.b16 %v2724, %v2723
    %v2734 = vsel %vm1410, %v2698, 0
    %2736 = vmatpush.bf16.msra.mxu0 0
    %2737 = vmatpush.bf16.msra.mxu0 0
    %2738 = vmatpush.bf16.msra.mxu0 0
    %2739 = vmatpush.bf16.msra.mxu0 0
    %2740 = vmatpush.bf16.msra.mxu0 %v2728
    %2741 = vmatpush.bf16.msra.mxu0 %v2727
    %2742 = vmatpush.bf16.msra.mxu0 %v2726
    %2743 = vmatpush.bf16.msra.mxu0 %v2725
    %2744 = vmatmul.bf16.gmra.mxu0 %v2734
    %v2745 = vpop.f32.mrf.mxu0
    %v2746 = vadd.f32 %v2708, %v2745
    %v2747 = vpop.f32.mrf.mxu0
    %v2748 = vadd.f32 %v2708, %v2747
    %2749 = vdwg.mxu0
    %v2750 = vadd.f32 %v2654, %v2746
    %v2751 = vadd.f32 %v2655, %v2748
    %v2752 = vsel %vm176, %v2750, 0.0
    %2753 = vadd.xlane.f32.xlu0 %v2752
    %v2754 = vpop.xlane.xlu0 %2753
    %v2755 = vsel %vm176, %v2751, 0.0
    %2756 = vadd.xlane.f32.xlu0 %v2755
    %v2757 = vpop.xlane.xlu0 %2756
    %v2758 = vmul.f32 %v2754, %v677
    %v2759 = vmul.f32 %v2757, %v677
    %v2760 = vsub.f32 %v2750, %v2758
    %v2761 = vsub.f32 %v2751, %v2759
    %v2762 = vmul.f32 %v2760, %v2760
    %v2763 = vmul.f32 %v2761, %v2761
    %v2764 = vsel %vm176, %v2762, 0.0
    %2765 = vadd.xlane.f32.xlu0 %v2764
    %v2766 = vpop.xlane.xlu0 %2765
    %v2767 = vsel %vm176, %v2763, 0.0
    %2768 = vadd.xlane.f32.xlu0 %v2767
    %v2769 = vpop.xlane.xlu0 %2768
    %v2770 = vmul.f32 %v2766, %v677
    %v2771 = vmul.f32 %v2769, %v677
    %v2772 = vadd.f32 %v2770, 1e-05
    %v2773 = vadd.f32 %v2771, 1e-05
    %v2774 = vrsqrt.pop %v2772
    %v2775 = vmul.f32 %v2774, %v2772
    %v2776 = vmul.f32 %v2775, %v2774
    %v2777 = vmul.f32 0.5, %v2776
    %v2778 = vsub.f32 1.5, %v2777
    %v2779 = vmul.f32 %v2774, %v2778
    %vm2780 = vweird.f32 %v2772
    %vm2781 = vweird.f32 %v2774
    %vm2782 = vmor %vm2780, %vm2781
    %v2783 = vsel %vm2782, %v2774, %v2779
    %v2784 = vrsqrt.pop %v2773
    %v2785 = vmul.f32 %v2784, %v2773
    %v2786 = vmul.f32 %v2785, %v2784
    %v2787 = vmul.f32 0.5, %v2786
    %v2788 = vsub.f32 1.5, %v2787
    %v2789 = vmul.f32 %v2784, %v2788
    %vm2790 = vweird.f32 %v2773
    %vm2791 = vweird.f32 %v2784
    %vm2792 = vmor %vm2790, %vm2791
    %v2793 = vsel %vm2792, %v2784, %v2789
    %v2794 = vmul.f32 %v2760, %v2783
    %v2795 = vmul.f32 %v2761, %v2793
    %v2796 = vperm.slane %v1482, 3
    %v2797 = vmul.f32 %v2794, %v2796
    %v2798 = vmul.f32 %v2795, %v2796
    %v2799 = vperm.slane %v1482, 6
    %v2800 = vadd.f32 %v2797, %v2799
    %v2801 = vadd.f32 %v2798, %v2799
    %2802 = vst.msk [vmem:[#allocation13] sm:$0xff] %vm176, %v2800
    %2803 = vst.msk [vmem:[#allocation13 + $0x8] sm:$0xff] %vm176, %v2801
    // Predicated region
    $region70: #{tpu_custom_call.1} parent=1 // pred_check
      _
    $region71: #{tpu_custom_call.1} parent=1 // pred_check_branch
      %2805 = sbr.rel (0) target = $region73
    $region72: #{tpu_custom_call.1} parent=1 // pred_region
      %2807 = vsyncadd [#allocation4], 0
      %s2808 = sshll.u32 [#allocation13], 4
      %s2809 = int_to_ptr.vmem [resolvable:$true] %s2808
      %s2810 = sshll.u32 %s11, 4
      %s2811 = int_to_ptr.hbm [resolvable:$true] %s2810
      %2816 = dma.vmem_to_hbm [thread:$0]  %s2809, 256, %s2811, [#allocation4], 128, 128, 8
    $region73: #{tpu_custom_call.1} parent=1 // pred_fallthru
      _
    // Predicated region
    $region74: #{tpu_custom_call.1} parent=1 // pred_check
      _
    $region75: #{tpu_custom_call.1} parent=1 // pred_check_branch
      %2818 = sbr.rel (0) target = $region77
    $region76: #{tpu_custom_call.1} parent=1 // pred_region
      %2820 = dma.done [#allocation4], 256
    $region77: #{tpu_custom_call.1} parent=1 // pred_fallthru
      _
    %2821 = vsyncpa [#allocation3], 1
    %2822 = vsyncpa [#allocation6], 1
    %2823 = vsyncpa [#allocation9], 1
    %2824 = vsyncpa [#allocation12], 1
    %2825 = vsyncpa [#allocation4], 1

</llo_original>
